<compile_context>
chip_gen: v7x
topology: tpu7x:2x2x1
jax: 0.10.0
libtpu: 0.0.40
codegen_flags: <defaults>
</compile_context>

<pallas_src>
import functools

import jax
import jax.numpy as jnp
from jax.experimental import pallas as pl
from jax.experimental.pallas import tpu as pltpu


def _pfrnn_agent_kernel(
    x_ref, h0_ref, p0_ref, eps_ref, gum_ref,
    w1_ref, b1_ref, wx_ref, bx_ref, wobs_ref, bobs_ref,
    whzr_ref, whn_ref, woh_ref, w2_ref, b2_ref,
    q_ref, h1_ref, p1_ref,
    *, P, alpha):
    f32 = jnp.float32
    bf16 = jnp.bfloat16
    i32 = jnp.int32

    TB = x_ref.shape[0]              # batch rows in this block
    H = h0_ref.shape[2]
    N = P * TB                       # particle-expanded rows (particle-major: row = p*TB + b)

    # ---- fc1 + ReLU (computed once per unique batch row) ----------------------
    x = jnp.dot(x_ref[...].astype(bf16), w1_ref[...],
                preferred_element_type=f32) + b1_ref[...]
    x = jnp.maximum(x, 0.0)                                     # (TB, H) f32

    # ---- fused, lane-aligned x-side gate pre-activations [xz | xr | xn(2H)] ---
    gx = jnp.dot(x.astype(bf16), wx_ref[...],
                 preferred_element_type=f32) + bx_ref[...]      # (TB, 4H)
    # observation head, x-side contribution (1-wide -> lane reduction, not MXU)
    xobs = jnp.sum(x * wobs_ref[...], axis=1, keepdims=True) + bobs_ref[...]   # (TB, 1)

    # ---- PFGRU gates: h-side matmuls on (N, H); x-side via leading-axis bcast --
    h0 = h0_ref[...]                                            # (P, TB, H) f32
    zr_h = jnp.dot(h0.reshape(N, H).astype(bf16), whzr_ref[...],
                   preferred_element_type=f32).reshape(P, TB, 2 * H)
    zr = jax.nn.sigmoid(zr_h + gx[:, :2 * H][None])             # (P, TB, 2H)
    z = zr[..., :H]
    r = zr[..., H:]

    n_h = jnp.dot((r * h0).reshape(N, H).astype(bf16), whn_ref[...],
                  preferred_element_type=f32).reshape(P, TB, 2 * H)
    n_pre = n_h + gx[:, 2 * H:][None]                           # (P, TB, 2H)
    mu = n_pre[..., :H]
    var = n_pre[..., H:]
    # TODO(synk): PFGRUCell source not provided; std = sqrt(softplus(var)) keeps the
    # reparameterization well-defined (a raw sqrt/exp of a linear output can NaN).
    std = jnp.sqrt(jax.nn.softplus(var))
    n = mu + eps_ref[...] * std
    h1 = (1.0 - z) * n + z * h0                                 # (P, TB, H) pre-resample

    # ---- observation log-likelihood + log_softmax over the particle axis ------
    logpdf = jnp.sum(h1 * woh_ref[...], axis=-1, keepdims=True) + xobs[None]   # (P,TB,1)
    p1 = logpdf + p0_ref[...]
    m1 = jnp.max(p1, axis=0, keepdims=True)
    p1_ls = p1 - (m1 + jnp.log(jnp.sum(jnp.exp(p1 - m1), axis=0, keepdims=True)))
    w_exp = jnp.exp(p1_ls)                                      # (P, TB, 1), sums to 1 on axis 0

    # ---- soft resampling (Gumbel-max categorical, with replacement) -----------
    # Re-orient normalized weights so the candidate-particle axis sits on lanes:
    # (P, TB, 1) -> (TB, P) with P masked selects (tiny VPU work, no MXU).
    lane_cand = jax.lax.broadcasted_iota(i32, (TB, P), 1)
    wexp_t = jnp.zeros((TB, P), f32)
    for p in range(P):
        wexp_t = jnp.where(lane_cand == p, w_exp[p], wexp_t)    # (TB, P)
    resamp_t = alpha * wexp_t + (1.0 - alpha) / P               # sums to 1 over lanes
    scores = jnp.log(resamp_t)[None] + gum_ref[...]             # (P_slot, TB, P_cand)
    mx = jnp.max(scores, axis=-1, keepdims=True)
    cand = jax.lax.broadcasted_iota(i32, (P, TB, P), 2)
    # exact argmax over candidates (smallest index wins ties)
    idx = jnp.min(jnp.where(scores >= mx, cand.astype(f32), float(P)),
                  axis=-1, keepdims=True).astype(i32)           # (P, TB, 1) in [0, P)

    # ---- ancestor gather + gathered weights: P masked f32 FMAs (exact) --------
    h_gath = jnp.zeros((P, TB, H), f32)
    p_gath = jnp.zeros((P, TB, 1), f32)
    for p in range(P):
        m = (idx == p).astype(f32)                              # (P, TB, 1)
        h_gath = h_gath + m * h1[p][None]
        p_gath = p_gath + m * w_exp[p][None]

    # importance-corrected new log-weights, renormalized over particles:
    #   w_new ∝ w_gathered / (alpha*w_gathered + (1-alpha)/P)
    prob = jnp.log(p_gath) - jnp.log(alpha * p_gath + (1.0 - alpha) / P)
    m2 = jnp.max(prob, axis=0, keepdims=True)
    prob_new = prob - (m2 + jnp.log(jnp.sum(jnp.exp(prob - m2), axis=0, keepdims=True)))

    h1_ref[...] = h_gath                                        # (P, TB, H)
    p1_ref[...] = prob_new                                      # (P, TB, 1)

    # ---- weighted particle mean + fc2 ------------------------------------------
    y = jnp.sum(jnp.exp(prob_new) * h_gath, axis=0)             # (TB, H)
    q_ref[...] = jnp.dot(y.astype(bf16), w2_ref[...],
                         preferred_element_type=f32) + b2_ref[...]


def _pick_batch_tile(B, P):
    """Batch tile so N = tb*P fills the MXU (<= 256 rows), preferring >= 2 grid
    blocks (v7x megacore) when that keeps N >= 128.  Falls back to the full batch
    when B is not 8-row aligned."""
    if B % 8 != 0:
        return B
    divs = [t for t in range(8, B + 1, 8) if B % t == 0]
    fits = [t for t in divs if t * P <= 256] or divs[:1]
    tb = max(fits)
    if B // tb < 2:
        smaller = [t for t in divs if t < tb and t * P >= 128]
        if smaller:
            tb = max(smaller)
    return tb


def pfrnn_agent_forward(inputs, hidden_state, params, eps, gumbel, *,
                        num_particles, resamp_alpha):
    h0, p0 = hidden_state
    B, IN = inputs.shape
    P = num_particles
    H = params["w1"].shape[1]
    A = params["w2"].shape[1]
    bf16 = jnp.bfloat16

    # torch particle-major layout (row = p*B + b) -> contiguous (P, B, .) views.
    # These are pure reshapes (no transposes, no extra HBM traffic).
    h0_pb = h0.reshape(P, B, H)
    p0_pb = p0.reshape(P, B, 1)
    eps_pb = eps.reshape(P, B, H)
    gum_pb = gumbel.reshape(P, B, P)

    # fused weights (bf16 MXU operands; biases + 1-wide obs head stay f32)
    # convention: z/r/n take cat((x, h)) -> x-part = rows [:H]; obs takes cat((h1, x)).
    wx = jnp.concatenate([params["wz"][:H], params["wr"][:H], params["wn"][:H]],
                         axis=1).astype(bf16)                    # (H, 4H) lane-aligned
    bx = jnp.concatenate([params["bz"], params["br"], params["bn"]], axis=1)   # (1, 4H)
    whzr = jnp.concatenate([params["wz"][H:], params["wr"][H:]],
                           axis=1).astype(bf16)                  # (H, 2H)
    whn = params["wn"][H:].astype(bf16)                          # (H, 2H)
    woh = params["wo"][:, :H]                                    # (1, H) f32 (h1 part)
    wobs = params["wo"][:, H:]                                   # (1, H) f32 (x part)
    bobs = params["bo"]                                          # (1, 1) f32
    w1 = params["w1"].astype(bf16)
    w2 = params["w2"].astype(bf16)

    tb = _pick_batch_tile(B, P)
    grid = (B // tb,)

    flops = int(2 * B * IN * H + 2 * B * H * (4 * H) + 2 * B * H
                + 2 * (B * P) * H * (2 * H) * 2
                + 2 * (B * P) * H * (P + 6)
                + 2 * B * H * A)
    nbytes = int(4 * (inputs.size + 2 * h0.size + 2 * p0.size + eps.size
                      + gumbel.size + B * A)
                 + 2 * (w1.size + wx.size + whzr.size + whn.size + w2.size)
                 + 4 * (bx.size + woh.size + wobs.size + H + A + 1))
    cost = pl.CostEstimate(flops=flops, transcendentals=int(5 * B * P * H),
                           bytes_accessed=nbytes)

    kernel = functools.partial(_pfrnn_agent_kernel, P=P, alpha=float(resamp_alpha))

    row2 = lambda i: (i, 0)
    row3 = lambda i: (0, i, 0)
    full = lambda i: (0, 0)
    in_specs = [
        pl.BlockSpec((tb, IN), row2),            # inputs
        pl.BlockSpec((P, tb, H), row3),          # h0     (particle-major, no transpose)
        pl.BlockSpec((P, tb, 1), row3),          # p0
        pl.BlockSpec((P, tb, H), row3),          # eps
        pl.BlockSpec((P, tb, P), row3),          # gumbel
        pl.BlockSpec((IN, H), full),             # w1
        pl.BlockSpec((1, H), full),              # b1
        pl.BlockSpec((H, 4 * H), full),          # wx
        pl.BlockSpec((1, 4 * H), full),          # bx
        pl.BlockSpec((1, H), full),              # wobs (x part of obs head)
        pl.BlockSpec((1, 1), full),              # bobs
        pl.BlockSpec((H, 2 * H), full),          # whzr
        pl.BlockSpec((H, 2 * H), full),          # whn
        pl.BlockSpec((1, H), full),              # woh (h1 part of obs head)
        pl.BlockSpec((H, A), full),              # w2
        pl.BlockSpec((1, A), full),              # b2
    ]
    out_specs = (
        pl.BlockSpec((tb, A), row2),             # q
        pl.BlockSpec((P, tb, H), row3),          # h1 (aliased with h0)
        pl.BlockSpec((P, tb, 1), row3),          # p1
    )

    q, h1, p1 = pl.pallas_call(
        kernel,
        out_shape=(
            jax.ShapeDtypeStruct((B, A), jnp.float32),
            jax.ShapeDtypeStruct((P, B, H), jnp.float32),
            jax.ShapeDtypeStruct((P, B, 1), jnp.float32),
        ),
        grid=grid,
        in_specs=in_specs,
        out_specs=out_specs,
        input_output_aliases={1: 1},             # h0 buffer reused for h1
        compiler_params=pltpu.CompilerParams(dimension_semantics=("parallel",)),
        cost_estimate=cost,
    )(inputs, h0_pb, p0_pb, eps_pb, gum_pb,
      w1, params["b1"], wx, bx, wobs, bobs, whzr, whn, woh, w2, params["b2"])

    # outputs are already in the torch layout: h1 (P, B, H), p1 (P, B, 1)
    return q, (h1, p1)


def init_params(key, input_shape, hidden_dim, n_actions):
    """Deterministic PyTorch-Linear-style init (U(-1/sqrt(fan_in), 1/sqrt(fan_in)))."""
    def lin(k, fan_in, fan_out, transpose_out=False):
        bound = 1.0 / (fan_in ** 0.5)
        kw, kb = jax.random.split(k)
        if transpose_out:   # store as (out, in) = (1, 2H) for the 1-wide obs head
            w = jax.random.uniform(kw, (fan_out, fan_in), jnp.float32, -bound, bound)
        else:               # store as (in, out) so y = x @ W + b
            w = jax.random.uniform(kw, (fan_in, fan_out), jnp.float32, -bound, bound)
        b = jax.random.uniform(kb, (1, fan_out), jnp.float32, -bound, bound)
        return w, b

    ks = jax.random.split(key, 6)
    w1, b1 = lin(ks[0], input_shape, hidden_dim)
    wz, bz = lin(ks[1], 2 * hidden_dim, hidden_dim)
    wr, br = lin(ks[2], 2 * hidden_dim, hidden_dim)
    wn, bn = lin(ks[3], 2 * hidden_dim, 2 * hidden_dim)
    wo, bo = lin(ks[4], 2 * hidden_dim, 1, transpose_out=True)   # (1, 2H)
    w2, b2 = lin(ks[5], hidden_dim, n_actions)
    return dict(w1=w1, b1=b1, wz=wz, bz=bz, wr=wr, br=br,
                wn=wn, bn=bn, wo=wo, bo=bo, w2=w2, b2=b2)


if __name__ == "__main__":
    key = jax.random.PRNGKey(0)

    # small shapes consistent with the module; B=32 gives 2 parallel grid blocks of
    # tb=16 batch rows (N = tb*P = 128 particle rows per block -> full MXU M fill).
    batch_size, n_agents = 8, 4
    B = batch_size * n_agents          # flattened batch = 32
    INPUT_SHAPE = 32                   # obs/input features
    HIDDEN = 64                        # args.rnn_hidden_dim (H=128 would be fully lane-dense)
    N_ACTIONS = 8                      # args.n_actions
    P = 8                              # args.num_particles
    RESAMP_ALPHA = 0.5                 # args.resamp_alpha

    k_in, k_h0, k_eps, k_gum, k_par = jax.random.split(key, 5)

    inputs = jax.random.normal(k_in, (B, INPUT_SHAPE), jnp.float32)

    # init_hidden(batch_size, n_agents): particle-major torch layout (row = p*B + b)
    h0 = jax.random.uniform(k_h0, (B * P, HIDDEN), jnp.float32)
    p0 = jnp.full((B * P, 1), jnp.log(1.0 / P), jnp.float32)

    # stochastic draws (reparameterization noise, Gumbel noise for resampling)
    eps = jax.random.normal(k_eps, (B * P, HIDDEN), jnp.float32)
    u = jax.random.uniform(k_gum, (B * P, P), jnp.float32, minval=1e-6, maxval=1.0 - 1e-6)
    gumbel = -jnp.log(-jnp.log(u))

    params = init_params(k_par, INPUT_SHAPE, HIDDEN, N_ACTIONS)

    fwd = jax.jit(functools.partial(pfrnn_agent_forward,
                                    num_particles=P, resamp_alpha=RESAMP_ALPHA))
    q, (h1, p1) = fwd(inputs, (h0, p0), params, eps, gumbel)
    jax.block_until_ready((q, h1, p1))

    assert q.shape == (B, N_ACTIONS)
    assert h1.shape == (P, B, HIDDEN)
    assert p1.shape == (P, B, 1)
    assert bool(jnp.all(jnp.isfinite(q)))
    assert bool(jnp.all(jnp.isfinite(h1)))
    # particle log-weights renormalize to 1 over the particle axis
    assert bool(jnp.allclose(jnp.sum(jnp.exp(p1), axis=0), 1.0, atol=1e-4))
    print("KERNEL_OK")
</pallas_src>

<mosaic_0001>
module attributes {stable_mosaic.version = 11 : i64} {
  func.func @_pfrnn_agent_kernel(%arg0: i32, %arg1: memref<16x32xf32, #tpu.memory_space<vmem>>, %arg2: memref<8x16x64xf32, #tpu.memory_space<vmem>>, %arg3: memref<8x16x1xf32, #tpu.memory_space<vmem>>, %arg4: memref<8x16x64xf32, #tpu.memory_space<vmem>>, %arg5: memref<8x16x8xf32, #tpu.memory_space<vmem>>, %arg6: memref<32x64xbf16, #tpu.memory_space<vmem>>, %arg7: memref<1x64xf32, #tpu.memory_space<vmem>>, %arg8: memref<64x256xbf16, #tpu.memory_space<vmem>>, %arg9: memref<1x256xf32, #tpu.memory_space<vmem>>, %arg10: memref<1x64xf32, #tpu.memory_space<vmem>>, %arg11: memref<1x1xf32, #tpu.memory_space<vmem>>, %arg12: memref<64x128xbf16, #tpu.memory_space<vmem>>, %arg13: memref<64x128xbf16, #tpu.memory_space<vmem>>, %arg14: memref<1x64xf32, #tpu.memory_space<vmem>>, %arg15: memref<64x8xbf16, #tpu.memory_space<vmem>>, %arg16: memref<1x8xf32, #tpu.memory_space<vmem>>, %arg17: memref<16x8xf32, #tpu.memory_space<vmem>>, %arg18: memref<8x16x64xf32, #tpu.memory_space<vmem>>, %arg19: memref<8x16x1xf32, #tpu.memory_space<vmem>>) attributes {dimension_semantics = [#tpu.dimension_semantics<parallel>], iteration_bounds = array<i64: 2>, scalar_prefetch = 0 : i64, scratch_operands = 0 : i64, tpu.core_type = #tpu.core_type<tc>, window_params = [{transform_indices = @transform_0, window_bounds = array<i64: 16, 32>}, {transform_indices = @transform_1, window_bounds = array<i64: 8, 16, 64>}, {transform_indices = @transform_2, window_bounds = array<i64: 8, 16, 1>}, {transform_indices = @transform_3, window_bounds = array<i64: 8, 16, 64>}, {transform_indices = @transform_4, window_bounds = array<i64: 8, 16, 8>}, {pipeline_mode = #tpu.pipeline_mode<synchronous>, transform_indices = @transform_5, window_bounds = array<i64: 32, 64>}, {pipeline_mode = #tpu.pipeline_mode<synchronous>, transform_indices = @transform_6, window_bounds = array<i64: 1, 64>}, {pipeline_mode = #tpu.pipeline_mode<synchronous>, transform_indices = @transform_7, window_bounds = array<i64: 64, 256>}, {pipeline_mode = #tpu.pipeline_mode<synchronous>, transform_indices = @transform_8, window_bounds = array<i64: 1, 256>}, {pipeline_mode = #tpu.pipeline_mode<synchronous>, transform_indices = @transform_9, window_bounds = array<i64: 1, 64>}, {pipeline_mode = #tpu.pipeline_mode<synchronous>, transform_indices = @transform_10, window_bounds = array<i64: 1, 1>}, {pipeline_mode = #tpu.pipeline_mode<synchronous>, transform_indices = @transform_11, window_bounds = array<i64: 64, 128>}, {pipeline_mode = #tpu.pipeline_mode<synchronous>, transform_indices = @transform_12, window_bounds = array<i64: 64, 128>}, {pipeline_mode = #tpu.pipeline_mode<synchronous>, transform_indices = @transform_13, window_bounds = array<i64: 1, 64>}, {pipeline_mode = #tpu.pipeline_mode<synchronous>, transform_indices = @transform_14, window_bounds = array<i64: 64, 8>}, {pipeline_mode = #tpu.pipeline_mode<synchronous>, transform_indices = @transform_15, window_bounds = array<i64: 1, 8>}, {transform_indices = @transform_16, window_bounds = array<i64: 16, 8>}, {transform_indices = @transform_17, window_bounds = array<i64: 8, 16, 64>}, {transform_indices = @transform_18, window_bounds = array<i64: 8, 16, 1>}]} {
    %c0 = arith.constant 0 : index
    %c0_0 = arith.constant 0 : index
    %0 = vector.load %arg1[%c0, %c0_0] : memref<16x32xf32, #tpu.memory_space<vmem>>, vector<16x32xf32>
    %1 = arith.truncf %0 : vector<16x32xf32> to vector<16x32xbf16>
    %c0_1 = arith.constant 0 : index
    %c0_2 = arith.constant 0 : index
    %2 = vector.load %arg6[%c0_1, %c0_2] : memref<32x64xbf16, #tpu.memory_space<vmem>>, vector<32x64xbf16>
    %cst = arith.constant dense<0.000000e+00> : vector<16x64xf32>
    %3 = tpu.matmul %1, %2, %cst {dimension_numbers = #tpu.dot_dimension_numbers<[1], [0], [0], [1], [0, 0, 1, 1], [], []>} : vector<16x32xbf16>, vector<32x64xbf16>, vector<16x64xf32> -> vector<16x64xf32>
    %c0_3 = arith.constant 0 : index
    %c0_4 = arith.constant 0 : index
    %4 = vector.load %arg7[%c0_3, %c0_4] : memref<1x64xf32, #tpu.memory_space<vmem>>, vector<1x64xf32>
    %5 = vector.broadcast %4 : vector<1x64xf32> to vector<16x64xf32>
    %6 = arith.addf %3, %5 : vector<16x64xf32>
    %cst_5 = arith.constant 0.000000e+00 : f32
    %7 = vector.broadcast %cst_5 : f32 to vector<16x64xf32>
    %8 = arith.maximumf %6, %7 : vector<16x64xf32>
    %9 = arith.truncf %8 : vector<16x64xf32> to vector<16x64xbf16>
    %c0_6 = arith.constant 0 : index
    %c0_7 = arith.constant 0 : index
    %10 = vector.load %arg8[%c0_6, %c0_7] : memref<64x256xbf16, #tpu.memory_space<vmem>>, vector<64x256xbf16>
    %cst_8 = arith.constant dense<0.000000e+00> : vector<16x256xf32>
    %11 = tpu.matmul %9, %10, %cst_8 {dimension_numbers = #tpu.dot_dimension_numbers<[1], [0], [0], [1], [0, 0, 1, 1], [], []>} : vector<16x64xbf16>, vector<64x256xbf16>, vector<16x256xf32> -> vector<16x256xf32>
    %c0_9 = arith.constant 0 : index
    %c0_10 = arith.constant 0 : index
    %12 = vector.load %arg9[%c0_9, %c0_10] : memref<1x256xf32, #tpu.memory_space<vmem>>, vector<1x256xf32>
    %13 = vector.broadcast %12 : vector<1x256xf32> to vector<16x256xf32>
    %14 = arith.addf %11, %13 : vector<16x256xf32>
    %c0_11 = arith.constant 0 : index
    %c0_12 = arith.constant 0 : index
    %15 = vector.load %arg10[%c0_11, %c0_12] : memref<1x64xf32, #tpu.memory_space<vmem>>, vector<1x64xf32>
    %16 = vector.broadcast %15 : vector<1x64xf32> to vector<16x64xf32>
    %17 = arith.mulf %8, %16 : vector<16x64xf32>
    %cst_13 = arith.constant dense<0.000000e+00> : vector<16xf32>
    %18 = vector.multi_reduction <add>, %17, %cst_13 [1] : vector<16x64xf32> to vector<16xf32>
    %19 = vector.shape_cast %18 : vector<16xf32> to vector<16x1xf32>
    %c0_14 = arith.constant 0 : index
    %c0_15 = arith.constant 0 : index
    %20 = vector.load %arg11[%c0_14, %c0_15] : memref<1x1xf32, #tpu.memory_space<vmem>>, vector<1x1xf32>
    %21 = vector.broadcast %20 : vector<1x1xf32> to vector<16x1xf32>
    %22 = arith.addf %19, %21 : vector<16x1xf32>
    %c0_16 = arith.constant 0 : index
    %c0_17 = arith.constant 0 : index
    %c0_18 = arith.constant 0 : index
    %23 = vector.load %arg2[%c0_16, %c0_17, %c0_18] : memref<8x16x64xf32, #tpu.memory_space<vmem>>, vector<8x16x64xf32>
    %24 = vector.shape_cast %23 : vector<8x16x64xf32> to vector<128x64xf32>
    %25 = arith.truncf %24 : vector<128x64xf32> to vector<128x64xbf16>
    %c0_19 = arith.constant 0 : index
    %c0_20 = arith.constant 0 : index
    %26 = vector.load %arg12[%c0_19, %c0_20] : memref<64x128xbf16, #tpu.memory_space<vmem>>, vector<64x128xbf16>
    %cst_21 = arith.constant dense<0.000000e+00> : vector<128x128xf32>
    %27 = tpu.matmul %25, %26, %cst_21 {dimension_numbers = #tpu.dot_dimension_numbers<[1], [0], [0], [1], [0, 0, 1, 1], [], []>} : vector<128x64xbf16>, vector<64x128xbf16>, vector<128x128xf32> -> vector<128x128xf32>
    %28 = vector.shape_cast %27 : vector<128x128xf32> to vector<8x16x128xf32>
    %29 = vector.extract_strided_slice %14 {offsets = [0, 0], sizes = [16, 128], strides = [1, 1]} : vector<16x256xf32> to vector<16x128xf32>
    %30 = vector.shape_cast %29 : vector<16x128xf32> to vector<1x16x128xf32>
    %31 = vector.broadcast %30 : vector<1x16x128xf32> to vector<8x16x128xf32>
    %32 = arith.addf %28, %31 : vector<8x16x128xf32>
    %33 = arith.negf %32 : vector<8x16x128xf32>
    %34 = math.exp %33 : vector<8x16x128xf32>
    %cst_22 = arith.constant 1.000000e+00 : f32
    %35 = vector.broadcast %cst_22 : f32 to vector<8x16x128xf32>
    %36 = arith.addf %35, %34 : vector<8x16x128xf32>
    %37 = arith.divf %35, %36 : vector<8x16x128xf32>
    %38 = vector.extract_strided_slice %37 {offsets = [0, 0, 0], sizes = [8, 16, 64], strides = [1, 1, 1]} : vector<8x16x128xf32> to vector<8x16x64xf32>
    %39 = vector.extract_strided_slice %37 {offsets = [0, 0, 64], sizes = [8, 16, 64], strides = [1, 1, 1]} : vector<8x16x128xf32> to vector<8x16x64xf32>
    %40 = arith.mulf %39, %23 : vector<8x16x64xf32>
    %41 = vector.shape_cast %40 : vector<8x16x64xf32> to vector<128x64xf32>
    %42 = arith.truncf %41 : vector<128x64xf32> to vector<128x64xbf16>
    %c0_23 = arith.constant 0 : index
    %c0_24 = arith.constant 0 : index
    %43 = vector.load %arg13[%c0_23, %c0_24] : memref<64x128xbf16, #tpu.memory_space<vmem>>, vector<64x128xbf16>
    %cst_25 = arith.constant dense<0.000000e+00> : vector<128x128xf32>
    %44 = tpu.matmul %42, %43, %cst_25 {dimension_numbers = #tpu.dot_dimension_numbers<[1], [0], [0], [1], [0, 0, 1, 1], [], []>} : vector<128x64xbf16>, vector<64x128xbf16>, vector<128x128xf32> -> vector<128x128xf32>
    %45 = vector.shape_cast %44 : vector<128x128xf32> to vector<8x16x128xf32>
    %46 = vector.extract_strided_slice %14 {offsets = [0, 128], sizes = [16, 128], strides = [1, 1]} : vector<16x256xf32> to vector<16x128xf32>
    %47 = vector.shape_cast %46 : vector<16x128xf32> to vector<1x16x128xf32>
    %48 = vector.broadcast %47 : vector<1x16x128xf32> to vector<8x16x128xf32>
    %49 = arith.addf %45, %48 : vector<8x16x128xf32>
    %50 = vector.extract_strided_slice %49 {offsets = [0, 0, 0], sizes = [8, 16, 64], strides = [1, 1, 1]} : vector<8x16x128xf32> to vector<8x16x64xf32>
    %51 = vector.extract_strided_slice %49 {offsets = [0, 0, 64], sizes = [8, 16, 64], strides = [1, 1, 1]} : vector<8x16x128xf32> to vector<8x16x64xf32>
    %cst_26 = arith.constant 0.000000e+00 : f32
    %52 = vector.broadcast %cst_26 : f32 to vector<8x16x64xf32>
    %53 = arith.maximumf %51, %52 : vector<8x16x64xf32>
    %54 = vector.broadcast %cst_26 : f32 to vector<8x16x64xf32>
    %55 = arith.subf %51, %54 : vector<8x16x64xf32>
    %56 = arith.cmpf one, %55, %55 : vector<8x16x64xf32>
    %57 = vector.broadcast %cst_26 : f32 to vector<8x16x64xf32>
    %58 = arith.addf %51, %57 : vector<8x16x64xf32>
    %59 = math.absf %55 : vector<8x16x64xf32>
    %cst_27 = arith.constant 0.000000e+00 : f32
    %60 = vector.broadcast %cst_27 : f32 to vector<8x16x64xf32>
    %61 = arith.subf %60, %59 : vector<8x16x64xf32>
    %62 = math.exp %61 : vector<8x16x64xf32>
    %63 = math.log1p %62 : vector<8x16x64xf32>
    %64 = arith.addf %53, %63 : vector<8x16x64xf32>
    %65 = arith.select %56, %58, %64 : vector<8x16x64xi1>, vector<8x16x64xf32>
    %66 = math.sqrt %65 : vector<8x16x64xf32>
    %c0_28 = arith.constant 0 : index
    %c0_29 = arith.constant 0 : index
    %c0_30 = arith.constant 0 : index
    %67 = vector.load %arg4[%c0_28, %c0_29, %c0_30] : memref<8x16x64xf32, #tpu.memory_space<vmem>>, vector<8x16x64xf32>
    %68 = arith.mulf %67, %66 : vector<8x16x64xf32>
    %69 = arith.addf %50, %68 : vector<8x16x64xf32>
    %cst_31 = arith.constant 1.000000e+00 : f32
    %70 = vector.broadcast %cst_31 : f32 to vector<8x16x64xf32>
    %71 = arith.subf %70, %38 : vector<8x16x64xf32>
    %72 = arith.mulf %71, %69 : vector<8x16x64xf32>
    %73 = arith.mulf %38, %23 : vector<8x16x64xf32>
    %74 = arith.addf %72, %73 : vector<8x16x64xf32>
    %c0_32 = arith.constant 0 : index
    %c0_33 = arith.constant 0 : index
    %75 = vector.load %arg14[%c0_32, %c0_33] : memref<1x64xf32, #tpu.memory_space<vmem>>, vector<1x64xf32>
    %76 = vector.shape_cast %75 : vector<1x64xf32> to vector<1x1x64xf32>
    %77 = vector.broadcast %76 : vector<1x1x64xf32> to vector<8x16x64xf32>
    %78 = arith.mulf %74, %77 : vector<8x16x64xf32>
    %cst_34 = arith.constant dense<0.000000e+00> : vector<8x16xf32>
    %79 = vector.multi_reduction <add>, %78, %cst_34 [2] : vector<8x16x64xf32> to vector<8x16xf32>
    %80 = vector.shape_cast %79 : vector<8x16xf32> to vector<8x16x1xf32>
    %81 = vector.shape_cast %22 : vector<16x1xf32> to vector<1x16x1xf32>
    %82 = vector.broadcast %81 : vector<1x16x1xf32> to vector<8x16x1xf32>
    %83 = arith.addf %80, %82 : vector<8x16x1xf32>
    %c0_35 = arith.constant 0 : index
    %c0_36 = arith.constant 0 : index
    %c0_37 = arith.constant 0 : index
    %84 = vector.load %arg3[%c0_35, %c0_36, %c0_37] : memref<8x16x1xf32, #tpu.memory_space<vmem>>, vector<8x16x1xf32>
    %85 = arith.addf %83, %84 : vector<8x16x1xf32>
    %cst_38 = arith.constant dense<0xFF800000> : vector<16x1xf32>
    %86 = vector.multi_reduction <maximumf>, %85, %cst_38 [0] : vector<8x16x1xf32> to vector<16x1xf32>
    %87 = vector.shape_cast %86 : vector<16x1xf32> to vector<1x16x1xf32>
    %88 = vector.broadcast %87 : vector<1x16x1xf32> to vector<8x16x1xf32>
    %89 = arith.subf %85, %88 : vector<8x16x1xf32>
    %90 = math.exp %89 : vector<8x16x1xf32>
    %cst_39 = arith.constant dense<0.000000e+00> : vector<16x1xf32>
    %91 = vector.multi_reduction <add>, %90, %cst_39 [0] : vector<8x16x1xf32> to vector<16x1xf32>
    %92 = vector.shape_cast %91 : vector<16x1xf32> to vector<1x16x1xf32>
    %93 = math.log %92 : vector<1x16x1xf32>
    %94 = arith.addf %87, %93 : vector<1x16x1xf32>
    %95 = vector.broadcast %94 : vector<1x16x1xf32> to vector<8x16x1xf32>
    %96 = arith.subf %85, %95 : vector<8x16x1xf32>
    %97 = math.exp %96 : vector<8x16x1xf32>
    %98 = tpu.iota {dimensions = array<i32: 1>} : vector<16x8xi32>
    %cst_40 = arith.constant 0.000000e+00 : f32
    %99 = vector.broadcast %cst_40 : f32 to vector<16x8xf32>
    %c0_i32 = arith.constant 0 : i32
    %100 = vector.broadcast %c0_i32 : i32 to vector<16x8xi32>
    %101 = arith.cmpi eq, %98, %100 : vector<16x8xi32>
    %102 = vector.extract_strided_slice %97 {offsets = [0, 0, 0], sizes = [1, 16, 1], strides = [1, 1, 1]} : vector<8x16x1xf32> to vector<1x16x1xf32>
    %103 = vector.shape_cast %102 : vector<1x16x1xf32> to vector<16x1xf32>
    %104 = vector.shape_cast %103 : vector<16x1xf32> to vector<16x1xf32>
    %105 = vector.broadcast %104 : vector<16x1xf32> to vector<16x8xf32>
    %106 = arith.select %101, %105, %99 : vector<16x8xi1>, vector<16x8xf32>
    %c1_i32 = arith.constant 1 : i32
    %107 = vector.broadcast %c1_i32 : i32 to vector<16x8xi32>
    %108 = arith.cmpi eq, %98, %107 : vector<16x8xi32>
    %109 = vector.extract_strided_slice %97 {offsets = [1, 0, 0], sizes = [1, 16, 1], strides = [1, 1, 1]} : vector<8x16x1xf32> to vector<1x16x1xf32>
    %110 = vector.shape_cast %109 : vector<1x16x1xf32> to vector<16x1xf32>
    %111 = vector.shape_cast %110 : vector<16x1xf32> to vector<16x1xf32>
    %112 = vector.broadcast %111 : vector<16x1xf32> to vector<16x8xf32>
    %113 = arith.select %108, %112, %106 : vector<16x8xi1>, vector<16x8xf32>
    %c2_i32 = arith.constant 2 : i32
    %114 = vector.broadcast %c2_i32 : i32 to vector<16x8xi32>
    %115 = arith.cmpi eq, %98, %114 : vector<16x8xi32>
    %116 = vector.extract_strided_slice %97 {offsets = [2, 0, 0], sizes = [1, 16, 1], strides = [1, 1, 1]} : vector<8x16x1xf32> to vector<1x16x1xf32>
    %117 = vector.shape_cast %116 : vector<1x16x1xf32> to vector<16x1xf32>
    %118 = vector.shape_cast %117 : vector<16x1xf32> to vector<16x1xf32>
    %119 = vector.broadcast %118 : vector<16x1xf32> to vector<16x8xf32>
    %120 = arith.select %115, %119, %113 : vector<16x8xi1>, vector<16x8xf32>
    %c3_i32 = arith.constant 3 : i32
    %121 = vector.broadcast %c3_i32 : i32 to vector<16x8xi32>
    %122 = arith.cmpi eq, %98, %121 : vector<16x8xi32>
    %123 = vector.extract_strided_slice %97 {offsets = [3, 0, 0], sizes = [1, 16, 1], strides = [1, 1, 1]} : vector<8x16x1xf32> to vector<1x16x1xf32>
    %124 = vector.shape_cast %123 : vector<1x16x1xf32> to vector<16x1xf32>
    %125 = vector.shape_cast %124 : vector<16x1xf32> to vector<16x1xf32>
    %126 = vector.broadcast %125 : vector<16x1xf32> to vector<16x8xf32>
    %127 = arith.select %122, %126, %120 : vector<16x8xi1>, vector<16x8xf32>
    %c4_i32 = arith.constant 4 : i32
    %128 = vector.broadcast %c4_i32 : i32 to vector<16x8xi32>
    %129 = arith.cmpi eq, %98, %128 : vector<16x8xi32>
    %130 = vector.extract_strided_slice %97 {offsets = [4, 0, 0], sizes = [1, 16, 1], strides = [1, 1, 1]} : vector<8x16x1xf32> to vector<1x16x1xf32>
    %131 = vector.shape_cast %130 : vector<1x16x1xf32> to vector<16x1xf32>
    %132 = vector.shape_cast %131 : vector<16x1xf32> to vector<16x1xf32>
    %133 = vector.broadcast %132 : vector<16x1xf32> to vector<16x8xf32>
    %134 = arith.select %129, %133, %127 : vector<16x8xi1>, vector<16x8xf32>
    %c5_i32 = arith.constant 5 : i32
    %135 = vector.broadcast %c5_i32 : i32 to vector<16x8xi32>
    %136 = arith.cmpi eq, %98, %135 : vector<16x8xi32>
    %137 = vector.extract_strided_slice %97 {offsets = [5, 0, 0], sizes = [1, 16, 1], strides = [1, 1, 1]} : vector<8x16x1xf32> to vector<1x16x1xf32>
    %138 = vector.shape_cast %137 : vector<1x16x1xf32> to vector<16x1xf32>
    %139 = vector.shape_cast %138 : vector<16x1xf32> to vector<16x1xf32>
    %140 = vector.broadcast %139 : vector<16x1xf32> to vector<16x8xf32>
    %141 = arith.select %136, %140, %134 : vector<16x8xi1>, vector<16x8xf32>
    %c6_i32 = arith.constant 6 : i32
    %142 = vector.broadcast %c6_i32 : i32 to vector<16x8xi32>
    %143 = arith.cmpi eq, %98, %142 : vector<16x8xi32>
    %144 = vector.extract_strided_slice %97 {offsets = [6, 0, 0], sizes = [1, 16, 1], strides = [1, 1, 1]} : vector<8x16x1xf32> to vector<1x16x1xf32>
    %145 = vector.shape_cast %144 : vector<1x16x1xf32> to vector<16x1xf32>
    %146 = vector.shape_cast %145 : vector<16x1xf32> to vector<16x1xf32>
    %147 = vector.broadcast %146 : vector<16x1xf32> to vector<16x8xf32>
    %148 = arith.select %143, %147, %141 : vector<16x8xi1>, vector<16x8xf32>
    %c7_i32 = arith.constant 7 : i32
    %149 = vector.broadcast %c7_i32 : i32 to vector<16x8xi32>
    %150 = arith.cmpi eq, %98, %149 : vector<16x8xi32>
    %151 = vector.extract_strided_slice %97 {offsets = [7, 0, 0], sizes = [1, 16, 1], strides = [1, 1, 1]} : vector<8x16x1xf32> to vector<1x16x1xf32>
    %152 = vector.shape_cast %151 : vector<1x16x1xf32> to vector<16x1xf32>
    %153 = vector.shape_cast %152 : vector<16x1xf32> to vector<16x1xf32>
    %154 = vector.broadcast %153 : vector<16x1xf32> to vector<16x8xf32>
    %155 = arith.select %150, %154, %148 : vector<16x8xi1>, vector<16x8xf32>
    %cst_41 = arith.constant 5.000000e-01 : f32
    %156 = vector.broadcast %cst_41 : f32 to vector<16x8xf32>
    %157 = arith.mulf %156, %155 : vector<16x8xf32>
    %cst_42 = arith.constant 6.250000e-02 : f32
    %158 = vector.broadcast %cst_42 : f32 to vector<16x8xf32>
    %159 = arith.addf %157, %158 : vector<16x8xf32>
    %160 = math.log %159 : vector<16x8xf32>
    %161 = vector.shape_cast %160 : vector<16x8xf32> to vector<1x16x8xf32>
    %c0_43 = arith.constant 0 : index
    %c0_44 = arith.constant 0 : index
    %c0_45 = arith.constant 0 : index
    %162 = vector.load %arg5[%c0_43, %c0_44, %c0_45] : memref<8x16x8xf32, #tpu.memory_space<vmem>>, vector<8x16x8xf32>
    %163 = vector.broadcast %161 : vector<1x16x8xf32> to vector<8x16x8xf32>
    %164 = arith.addf %163, %162 : vector<8x16x8xf32>
    %cst_46 = arith.constant dense<0xFF800000> : vector<8x16xf32>
    %165 = vector.multi_reduction <maximumf>, %164, %cst_46 [2] : vector<8x16x8xf32> to vector<8x16xf32>
    %166 = vector.shape_cast %165 : vector<8x16xf32> to vector<8x16x1xf32>
    %167 = tpu.iota {dimensions = array<i32: 2>} : vector<8x16x8xi32>
    %168 = vector.broadcast %166 : vector<8x16x1xf32> to vector<8x16x8xf32>
    %169 = arith.cmpf oge, %164, %168 : vector<8x16x8xf32>
    %170 = arith.sitofp %167 : vector<8x16x8xi32> to vector<8x16x8xf32>
    %cst_47 = arith.constant 8.000000e+00 : f32
    %171 = vector.broadcast %cst_47 : f32 to vector<8x16x8xf32>
    %172 = arith.select %169, %170, %171 : vector<8x16x8xi1>, vector<8x16x8xf32>
    %cst_48 = arith.constant dense<0x7F800000> : vector<8x16xf32>
    %173 = vector.multi_reduction <minimumf>, %172, %cst_48 [2] : vector<8x16x8xf32> to vector<8x16xf32>
    %174 = vector.shape_cast %173 : vector<8x16xf32> to vector<8x16x1xf32>
    %175 = arith.fptosi %174 : vector<8x16x1xf32> to vector<8x16x1xi32>
    %cst_49 = arith.constant 0.000000e+00 : f32
    %176 = vector.broadcast %cst_49 : f32 to vector<8x16x64xf32>
    %cst_50 = arith.constant 0.000000e+00 : f32
    %177 = vector.broadcast %cst_50 : f32 to vector<8x16x1xf32>
    %c0_i32_51 = arith.constant 0 : i32
    %178 = vector.broadcast %c0_i32_51 : i32 to vector<8x16x1xi32>
    %179 = arith.cmpi eq, %175, %178 : vector<8x16x1xi32>
    %180 = arith.extui %179 : vector<8x16x1xi1> to vector<8x16x1xi32>
    %181 = arith.sitofp %180 : vector<8x16x1xi32> to vector<8x16x1xf32>
    %182 = vector.extract_strided_slice %74 {offsets = [0, 0, 0], sizes = [1, 16, 64], strides = [1, 1, 1]} : vector<8x16x64xf32> to vector<1x16x64xf32>
    %183 = vector.shape_cast %182 : vector<1x16x64xf32> to vector<16x64xf32>
    %184 = vector.shape_cast %183 : vector<16x64xf32> to vector<1x16x64xf32>
    %185 = vector.broadcast %181 : vector<8x16x1xf32> to vector<8x16x64xf32>
    %186 = vector.broadcast %184 : vector<1x16x64xf32> to vector<8x16x64xf32>
    %187 = arith.mulf %185, %186 : vector<8x16x64xf32>
    %188 = arith.addf %176, %187 : vector<8x16x64xf32>
    %189 = vector.extract_strided_slice %97 {offsets = [0, 0, 0], sizes = [1, 16, 1], strides = [1, 1, 1]} : vector<8x16x1xf32> to vector<1x16x1xf32>
    %190 = vector.shape_cast %189 : vector<1x16x1xf32> to vector<16x1xf32>
    %191 = vector.shape_cast %190 : vector<16x1xf32> to vector<1x16x1xf32>
    %192 = vector.broadcast %191 : vector<1x16x1xf32> to vector<8x16x1xf32>
    %193 = arith.mulf %181, %192 : vector<8x16x1xf32>
    %194 = arith.addf %177, %193 : vector<8x16x1xf32>
    %c1_i32_52 = arith.constant 1 : i32
    %195 = vector.broadcast %c1_i32_52 : i32 to vector<8x16x1xi32>
    %196 = arith.cmpi eq, %175, %195 : vector<8x16x1xi32>
    %197 = arith.extui %196 : vector<8x16x1xi1> to vector<8x16x1xi32>
    %198 = arith.sitofp %197 : vector<8x16x1xi32> to vector<8x16x1xf32>
    %199 = vector.extract_strided_slice %74 {offsets = [1, 0, 0], sizes = [1, 16, 64], strides = [1, 1, 1]} : vector<8x16x64xf32> to vector<1x16x64xf32>
    %200 = vector.shape_cast %199 : vector<1x16x64xf32> to vector<16x64xf32>
    %201 = vector.shape_cast %200 : vector<16x64xf32> to vector<1x16x64xf32>
    %202 = vector.broadcast %198 : vector<8x16x1xf32> to vector<8x16x64xf32>
    %203 = vector.broadcast %201 : vector<1x16x64xf32> to vector<8x16x64xf32>
    %204 = arith.mulf %202, %203 : vector<8x16x64xf32>
    %205 = arith.addf %188, %204 : vector<8x16x64xf32>
    %206 = vector.extract_strided_slice %97 {offsets = [1, 0, 0], sizes = [1, 16, 1], strides = [1, 1, 1]} : vector<8x16x1xf32> to vector<1x16x1xf32>
    %207 = vector.shape_cast %206 : vector<1x16x1xf32> to vector<16x1xf32>
    %208 = vector.shape_cast %207 : vector<16x1xf32> to vector<1x16x1xf32>
    %209 = vector.broadcast %208 : vector<1x16x1xf32> to vector<8x16x1xf32>
    %210 = arith.mulf %198, %209 : vector<8x16x1xf32>
    %211 = arith.addf %194, %210 : vector<8x16x1xf32>
    %c2_i32_53 = arith.constant 2 : i32
    %212 = vector.broadcast %c2_i32_53 : i32 to vector<8x16x1xi32>
    %213 = arith.cmpi eq, %175, %212 : vector<8x16x1xi32>
    %214 = arith.extui %213 : vector<8x16x1xi1> to vector<8x16x1xi32>
    %215 = arith.sitofp %214 : vector<8x16x1xi32> to vector<8x16x1xf32>
    %216 = vector.extract_strided_slice %74 {offsets = [2, 0, 0], sizes = [1, 16, 64], strides = [1, 1, 1]} : vector<8x16x64xf32> to vector<1x16x64xf32>
    %217 = vector.shape_cast %216 : vector<1x16x64xf32> to vector<16x64xf32>
    %218 = vector.shape_cast %217 : vector<16x64xf32> to vector<1x16x64xf32>
    %219 = vector.broadcast %215 : vector<8x16x1xf32> to vector<8x16x64xf32>
    %220 = vector.broadcast %218 : vector<1x16x64xf32> to vector<8x16x64xf32>
    %221 = arith.mulf %219, %220 : vector<8x16x64xf32>
    %222 = arith.addf %205, %221 : vector<8x16x64xf32>
    %223 = vector.extract_strided_slice %97 {offsets = [2, 0, 0], sizes = [1, 16, 1], strides = [1, 1, 1]} : vector<8x16x1xf32> to vector<1x16x1xf32>
    %224 = vector.shape_cast %223 : vector<1x16x1xf32> to vector<16x1xf32>
    %225 = vector.shape_cast %224 : vector<16x1xf32> to vector<1x16x1xf32>
    %226 = vector.broadcast %225 : vector<1x16x1xf32> to vector<8x16x1xf32>
    %227 = arith.mulf %215, %226 : vector<8x16x1xf32>
    %228 = arith.addf %211, %227 : vector<8x16x1xf32>
    %c3_i32_54 = arith.constant 3 : i32
    %229 = vector.broadcast %c3_i32_54 : i32 to vector<8x16x1xi32>
    %230 = arith.cmpi eq, %175, %229 : vector<8x16x1xi32>
    %231 = arith.extui %230 : vector<8x16x1xi1> to vector<8x16x1xi32>
    %232 = arith.sitofp %231 : vector<8x16x1xi32> to vector<8x16x1xf32>
    %233 = vector.extract_strided_slice %74 {offsets = [3, 0, 0], sizes = [1, 16, 64], strides = [1, 1, 1]} : vector<8x16x64xf32> to vector<1x16x64xf32>
    %234 = vector.shape_cast %233 : vector<1x16x64xf32> to vector<16x64xf32>
    %235 = vector.shape_cast %234 : vector<16x64xf32> to vector<1x16x64xf32>
    %236 = vector.broadcast %232 : vector<8x16x1xf32> to vector<8x16x64xf32>
    %237 = vector.broadcast %235 : vector<1x16x64xf32> to vector<8x16x64xf32>
    %238 = arith.mulf %236, %237 : vector<8x16x64xf32>
    %239 = arith.addf %222, %238 : vector<8x16x64xf32>
    %240 = vector.extract_strided_slice %97 {offsets = [3, 0, 0], sizes = [1, 16, 1], strides = [1, 1, 1]} : vector<8x16x1xf32> to vector<1x16x1xf32>
    %241 = vector.shape_cast %240 : vector<1x16x1xf32> to vector<16x1xf32>
    %242 = vector.shape_cast %241 : vector<16x1xf32> to vector<1x16x1xf32>
    %243 = vector.broadcast %242 : vector<1x16x1xf32> to vector<8x16x1xf32>
    %244 = arith.mulf %232, %243 : vector<8x16x1xf32>
    %245 = arith.addf %228, %244 : vector<8x16x1xf32>
    %c4_i32_55 = arith.constant 4 : i32
    %246 = vector.broadcast %c4_i32_55 : i32 to vector<8x16x1xi32>
    %247 = arith.cmpi eq, %175, %246 : vector<8x16x1xi32>
    %248 = arith.extui %247 : vector<8x16x1xi1> to vector<8x16x1xi32>
    %249 = arith.sitofp %248 : vector<8x16x1xi32> to vector<8x16x1xf32>
    %250 = vector.extract_strided_slice %74 {offsets = [4, 0, 0], sizes = [1, 16, 64], strides = [1, 1, 1]} : vector<8x16x64xf32> to vector<1x16x64xf32>
    %251 = vector.shape_cast %250 : vector<1x16x64xf32> to vector<16x64xf32>
    %252 = vector.shape_cast %251 : vector<16x64xf32> to vector<1x16x64xf32>
    %253 = vector.broadcast %249 : vector<8x16x1xf32> to vector<8x16x64xf32>
    %254 = vector.broadcast %252 : vector<1x16x64xf32> to vector<8x16x64xf32>
    %255 = arith.mulf %253, %254 : vector<8x16x64xf32>
    %256 = arith.addf %239, %255 : vector<8x16x64xf32>
    %257 = vector.extract_strided_slice %97 {offsets = [4, 0, 0], sizes = [1, 16, 1], strides = [1, 1, 1]} : vector<8x16x1xf32> to vector<1x16x1xf32>
    %258 = vector.shape_cast %257 : vector<1x16x1xf32> to vector<16x1xf32>
    %259 = vector.shape_cast %258 : vector<16x1xf32> to vector<1x16x1xf32>
    %260 = vector.broadcast %259 : vector<1x16x1xf32> to vector<8x16x1xf32>
    %261 = arith.mulf %249, %260 : vector<8x16x1xf32>
    %262 = arith.addf %245, %261 : vector<8x16x1xf32>
    %c5_i32_56 = arith.constant 5 : i32
    %263 = vector.broadcast %c5_i32_56 : i32 to vector<8x16x1xi32>
    %264 = arith.cmpi eq, %175, %263 : vector<8x16x1xi32>
    %265 = arith.extui %264 : vector<8x16x1xi1> to vector<8x16x1xi32>
    %266 = arith.sitofp %265 : vector<8x16x1xi32> to vector<8x16x1xf32>
    %267 = vector.extract_strided_slice %74 {offsets = [5, 0, 0], sizes = [1, 16, 64], strides = [1, 1, 1]} : vector<8x16x64xf32> to vector<1x16x64xf32>
    %268 = vector.shape_cast %267 : vector<1x16x64xf32> to vector<16x64xf32>
    %269 = vector.shape_cast %268 : vector<16x64xf32> to vector<1x16x64xf32>
    %270 = vector.broadcast %266 : vector<8x16x1xf32> to vector<8x16x64xf32>
    %271 = vector.broadcast %269 : vector<1x16x64xf32> to vector<8x16x64xf32>
    %272 = arith.mulf %270, %271 : vector<8x16x64xf32>
    %273 = arith.addf %256, %272 : vector<8x16x64xf32>
    %274 = vector.extract_strided_slice %97 {offsets = [5, 0, 0], sizes = [1, 16, 1], strides = [1, 1, 1]} : vector<8x16x1xf32> to vector<1x16x1xf32>
    %275 = vector.shape_cast %274 : vector<1x16x1xf32> to vector<16x1xf32>
    %276 = vector.shape_cast %275 : vector<16x1xf32> to vector<1x16x1xf32>
    %277 = vector.broadcast %276 : vector<1x16x1xf32> to vector<8x16x1xf32>
    %278 = arith.mulf %266, %277 : vector<8x16x1xf32>
    %279 = arith.addf %262, %278 : vector<8x16x1xf32>
    %c6_i32_57 = arith.constant 6 : i32
    %280 = vector.broadcast %c6_i32_57 : i32 to vector<8x16x1xi32>
    %281 = arith.cmpi eq, %175, %280 : vector<8x16x1xi32>
    %282 = arith.extui %281 : vector<8x16x1xi1> to vector<8x16x1xi32>
    %283 = arith.sitofp %282 : vector<8x16x1xi32> to vector<8x16x1xf32>
    %284 = vector.extract_strided_slice %74 {offsets = [6, 0, 0], sizes = [1, 16, 64], strides = [1, 1, 1]} : vector<8x16x64xf32> to vector<1x16x64xf32>
    %285 = vector.shape_cast %284 : vector<1x16x64xf32> to vector<16x64xf32>
    %286 = vector.shape_cast %285 : vector<16x64xf32> to vector<1x16x64xf32>
    %287 = vector.broadcast %283 : vector<8x16x1xf32> to vector<8x16x64xf32>
    %288 = vector.broadcast %286 : vector<1x16x64xf32> to vector<8x16x64xf32>
    %289 = arith.mulf %287, %288 : vector<8x16x64xf32>
    %290 = arith.addf %273, %289 : vector<8x16x64xf32>
    %291 = vector.extract_strided_slice %97 {offsets = [6, 0, 0], sizes = [1, 16, 1], strides = [1, 1, 1]} : vector<8x16x1xf32> to vector<1x16x1xf32>
    %292 = vector.shape_cast %291 : vector<1x16x1xf32> to vector<16x1xf32>
    %293 = vector.shape_cast %292 : vector<16x1xf32> to vector<1x16x1xf32>
    %294 = vector.broadcast %293 : vector<1x16x1xf32> to vector<8x16x1xf32>
    %295 = arith.mulf %283, %294 : vector<8x16x1xf32>
    %296 = arith.addf %279, %295 : vector<8x16x1xf32>
    %c7_i32_58 = arith.constant 7 : i32
    %297 = vector.broadcast %c7_i32_58 : i32 to vector<8x16x1xi32>
    %298 = arith.cmpi eq, %175, %297 : vector<8x16x1xi32>
    %299 = arith.extui %298 : vector<8x16x1xi1> to vector<8x16x1xi32>
    %300 = arith.sitofp %299 : vector<8x16x1xi32> to vector<8x16x1xf32>
    %301 = vector.extract_strided_slice %74 {offsets = [7, 0, 0], sizes = [1, 16, 64], strides = [1, 1, 1]} : vector<8x16x64xf32> to vector<1x16x64xf32>
    %302 = vector.shape_cast %301 : vector<1x16x64xf32> to vector<16x64xf32>
    %303 = vector.shape_cast %302 : vector<16x64xf32> to vector<1x16x64xf32>
    %304 = vector.broadcast %300 : vector<8x16x1xf32> to vector<8x16x64xf32>
    %305 = vector.broadcast %303 : vector<1x16x64xf32> to vector<8x16x64xf32>
    %306 = arith.mulf %304, %305 : vector<8x16x64xf32>
    %307 = arith.addf %290, %306 : vector<8x16x64xf32>
    %308 = vector.extract_strided_slice %97 {offsets = [7, 0, 0], sizes = [1, 16, 1], strides = [1, 1, 1]} : vector<8x16x1xf32> to vector<1x16x1xf32>
    %309 = vector.shape_cast %308 : vector<1x16x1xf32> to vector<16x1xf32>
    %310 = vector.shape_cast %309 : vector<16x1xf32> to vector<1x16x1xf32>
    %311 = vector.broadcast %310 : vector<1x16x1xf32> to vector<8x16x1xf32>
    %312 = arith.mulf %300, %311 : vector<8x16x1xf32>
    %313 = arith.addf %296, %312 : vector<8x16x1xf32>
    %314 = math.log %313 : vector<8x16x1xf32>
    %cst_59 = arith.constant 5.000000e-01 : f32
    %315 = vector.broadcast %cst_59 : f32 to vector<8x16x1xf32>
    %316 = arith.mulf %315, %313 : vector<8x16x1xf32>
    %cst_60 = arith.constant 6.250000e-02 : f32
    %317 = vector.broadcast %cst_60 : f32 to vector<8x16x1xf32>
    %318 = arith.addf %316, %317 : vector<8x16x1xf32>
    %319 = math.log %318 : vector<8x16x1xf32>
    %320 = arith.subf %314, %319 : vector<8x16x1xf32>
    %cst_61 = arith.constant dense<0xFF800000> : vector<16x1xf32>
    %321 = vector.multi_reduction <maximumf>, %320, %cst_61 [0] : vector<8x16x1xf32> to vector<16x1xf32>
    %322 = vector.shape_cast %321 : vector<16x1xf32> to vector<1x16x1xf32>
    %323 = vector.broadcast %322 : vector<1x16x1xf32> to vector<8x16x1xf32>
    %324 = arith.subf %320, %323 : vector<8x16x1xf32>
    %325 = math.exp %324 : vector<8x16x1xf32>
    %cst_62 = arith.constant dense<0.000000e+00> : vector<16x1xf32>
    %326 = vector.multi_reduction <add>, %325, %cst_62 [0] : vector<8x16x1xf32> to vector<16x1xf32>
    %327 = vector.shape_cast %326 : vector<16x1xf32> to vector<1x16x1xf32>
    %328 = math.log %327 : vector<1x16x1xf32>
    %329 = arith.addf %322, %328 : vector<1x16x1xf32>
    %330 = vector.broadcast %329 : vector<1x16x1xf32> to vector<8x16x1xf32>
    %331 = arith.subf %320, %330 : vector<8x16x1xf32>
    %c0_63 = arith.constant 0 : index
    %c0_64 = arith.constant 0 : index
    %c0_65 = arith.constant 0 : index
    %332 = vector.load %arg18[%c0_63, %c0_64, %c0_65] : memref<8x16x64xf32, #tpu.memory_space<vmem>>, vector<8x16x64xf32>
    tpu.vector_store %arg18[%c0_63, %c0_64, %c0_65], %307 {strides = array<i32>} : memref<8x16x64xf32, #tpu.memory_space<vmem>>, vector<8x16x64xf32>,
    %c0_66 = arith.constant 0 : index
    %c0_67 = arith.constant 0 : index
    %c0_68 = arith.constant 0 : index
    %333 = vector.load %arg19[%c0_66, %c0_67, %c0_68] : memref<8x16x1xf32, #tpu.memory_space<vmem>>, vector<8x16x1xf32>
    tpu.vector_store %arg19[%c0_66, %c0_67, %c0_68], %331 {strides = array<i32>} : memref<8x16x1xf32, #tpu.memory_space<vmem>>, vector<8x16x1xf32>,
    %334 = math.exp %331 : vector<8x16x1xf32>
    %335 = vector.broadcast %334 : vector<8x16x1xf32> to vector<8x16x64xf32>
    %336 = arith.mulf %335, %307 : vector<8x16x64xf32>
    %cst_69 = arith.constant dense<0.000000e+00> : vector<16x64xf32>
    %337 = vector.multi_reduction <add>, %336, %cst_69 [0] : vector<8x16x64xf32> to vector<16x64xf32>
    %338 = arith.truncf %337 : vector<16x64xf32> to vector<16x64xbf16>
    %c0_70 = arith.constant 0 : index
    %c0_71 = arith.constant 0 : index
    %339 = vector.load %arg15[%c0_70, %c0_71] : memref<64x8xbf16, #tpu.memory_space<vmem>>, vector<64x8xbf16>
    %cst_72 = arith.constant dense<0.000000e+00> : vector<16x8xf32>
    %340 = tpu.matmul %338, %339, %cst_72 {dimension_numbers = #tpu.dot_dimension_numbers<[1], [0], [0], [1], [0, 0, 1, 1], [], []>} : vector<16x64xbf16>, vector<64x8xbf16>, vector<16x8xf32> -> vector<16x8xf32>
    %c0_73 = arith.constant 0 : index
    %c0_74 = arith.constant 0 : index
    %341 = vector.load %arg16[%c0_73, %c0_74] : memref<1x8xf32, #tpu.memory_space<vmem>>, vector<1x8xf32>
    %342 = vector.broadcast %341 : vector<1x8xf32> to vector<16x8xf32>
    %343 = arith.addf %340, %342 : vector<16x8xf32>
    %c0_75 = arith.constant 0 : index
    %c0_76 = arith.constant 0 : index
    %344 = vector.load %arg17[%c0_75, %c0_76] : memref<16x8xf32, #tpu.memory_space<vmem>>, vector<16x8xf32>
    tpu.vector_store %arg17[%c0_75, %c0_76], %343 {strides = array<i32>} : memref<16x8xf32, #tpu.memory_space<vmem>>, vector<16x8xf32>,
    return
  }
  func.func @transform_0(%arg0: i32) -> (i32, i32) {
    %c0_i32 = arith.constant 0 : i32
    %c0_i32_0 = arith.constant 0 : i32
    return %arg0, %c0_i32 : i32, i32
  }
  func.func @transform_1(%arg0: i32) -> (i32, i32, i32) {
    %c0_i32 = arith.constant 0 : i32
    %c0_i32_0 = arith.constant 0 : i32
    %c0_i32_1 = arith.constant 0 : i32
    return %c0_i32, %arg0, %c0_i32_0 : i32, i32, i32
  }
  func.func @transform_2(%arg0: i32) -> (i32, i32, i32) {
    %c0_i32 = arith.constant 0 : i32
    %c0_i32_0 = arith.constant 0 : i32
    %c0_i32_1 = arith.constant 0 : i32
    return %c0_i32, %arg0, %c0_i32_0 : i32, i32, i32
  }
  func.func @transform_3(%arg0: i32) -> (i32, i32, i32) {
    %c0_i32 = arith.constant 0 : i32
    %c0_i32_0 = arith.constant 0 : i32
    %c0_i32_1 = arith.constant 0 : i32
    return %c0_i32, %arg0, %c0_i32_0 : i32, i32, i32
  }
  func.func @transform_4(%arg0: i32) -> (i32, i32, i32) {
    %c0_i32 = arith.constant 0 : i32
    %c0_i32_0 = arith.constant 0 : i32
    %c0_i32_1 = arith.constant 0 : i32
    return %c0_i32, %arg0, %c0_i32_0 : i32, i32, i32
  }
  func.func @transform_5(%arg0: i32) -> (i32, i32) {
    %c0_i32 = arith.constant 0 : i32
    %c0_i32_0 = arith.constant 0 : i32
    %c0_i32_1 = arith.constant 0 : i32
    return %c0_i32, %c0_i32_0 : i32, i32
  }
  func.func @transform_6(%arg0: i32) -> (i32, i32) {
    %c0_i32 = arith.constant 0 : i32
    %c0_i32_0 = arith.constant 0 : i32
    %c0_i32_1 = arith.constant 0 : i32
    return %c0_i32, %c0_i32_0 : i32, i32
  }
  func.func @transform_7(%arg0: i32) -> (i32, i32) {
    %c0_i32 = arith.constant 0 : i32
    %c0_i32_0 = arith.constant 0 : i32
    %c0_i32_1 = arith.constant 0 : i32
    return %c0_i32, %c0_i32_0 : i32, i32
  }
  func.func @transform_8(%arg0: i32) -> (i32, i32) {
    %c0_i32 = arith.constant 0 : i32
    %c0_i32_0 = arith.constant 0 : i32
    %c0_i32_1 = arith.constant 0 : i32
    return %c0_i32, %c0_i32_0 : i32, i32
  }
  func.func @transform_9(%arg0: i32) -> (i32, i32) {
    %c0_i32 = arith.constant 0 : i32
    %c0_i32_0 = arith.constant 0 : i32
    %c0_i32_1 = arith.constant 0 : i32
    return %c0_i32, %c0_i32_0 : i32, i32
  }
  func.func @transform_10(%arg0: i32) -> (i32, i32) {
    %c0_i32 = arith.constant 0 : i32
    %c0_i32_0 = arith.constant 0 : i32
    %c0_i32_1 = arith.constant 0 : i32
    return %c0_i32, %c0_i32_0 : i32, i32
  }
  func.func @transform_11(%arg0: i32) -> (i32, i32) {
    %c0_i32 = arith.constant 0 : i32
    %c0_i32_0 = arith.constant 0 : i32
    %c0_i32_1 = arith.constant 0 : i32
    return %c0_i32, %c0_i32_0 : i32, i32
  }
  func.func @transform_12(%arg0: i32) -> (i32, i32) {
    %c0_i32 = arith.constant 0 : i32
    %c0_i32_0 = arith.constant 0 : i32
    %c0_i32_1 = arith.constant 0 : i32
    return %c0_i32, %c0_i32_0 : i32, i32
  }
  func.func @transform_13(%arg0: i32) -> (i32, i32) {
    %c0_i32 = arith.constant 0 : i32
    %c0_i32_0 = arith.constant 0 : i32
    %c0_i32_1 = arith.constant 0 : i32
    return %c0_i32, %c0_i32_0 : i32, i32
  }
  func.func @transform_14(%arg0: i32) -> (i32, i32) {
    %c0_i32 = arith.constant 0 : i32
    %c0_i32_0 = arith.constant 0 : i32
    %c0_i32_1 = arith.constant 0 : i32
    return %c0_i32, %c0_i32_0 : i32, i32
  }
  func.func @transform_15(%arg0: i32) -> (i32, i32) {
    %c0_i32 = arith.constant 0 : i32
    %c0_i32_0 = arith.constant 0 : i32
    %c0_i32_1 = arith.constant 0 : i32
    return %c0_i32, %c0_i32_0 : i32, i32
  }
  func.func @transform_16(%arg0: i32) -> (i32, i32) {
    %c0_i32 = arith.constant 0 : i32
    %c0_i32_0 = arith.constant 0 : i32
    return %arg0, %c0_i32 : i32, i32
  }
  func.func @transform_17(%arg0: i32) -> (i32, i32, i32) {
    %c0_i32 = arith.constant 0 : i32
    %c0_i32_0 = arith.constant 0 : i32
    %c0_i32_1 = arith.constant 0 : i32
    return %c0_i32, %arg0, %c0_i32_0 : i32, i32, i32
  }
  func.func @transform_18(%arg0: i32) -> (i32, i32, i32) {
    %c0_i32 = arith.constant 0 : i32
    %c0_i32_0 = arith.constant 0 : i32
    %c0_i32_1 = arith.constant 0 : i32
    return %c0_i32, %arg0, %c0_i32_0 : i32, i32, i32
  }
}

</mosaic_0001>

<llo_original>
// kernel: pfrnn_agent_forward.1
$region0: #{pfrnn_agent_forward.1}
  #allocation0 [shape = 'u32[]', space=smem, size = 0x4, offset = 0x4, fixed_abs, tag = 'smem constant byte address 0x4 - core index']
  #allocation1 [shape = 'u32[144,128]{1,0:T(1,128)}', space=vmem, size = 0x12000, scoped, tag = 'internal scratch']
  #allocation2 [shape = 'f32[1,1]{1,0:T(1,128)S(1)}', space=vmem, size = 0x200, scoped, tag = 'scoped memory for pfrnn_agent_forward.1']
  %s0 = inlined_call_operand.vmem [shape: f32[32,32], index: 0, kind: input, shape index: {}]
  %s1 = inlined_call_operand.vmem [shape: f32[8,32,64], index: 1, kind: input, shape index: {}, may-alias: {1,17}]
  %s2 = inlined_call_operand.vmem [shape: f32[8,32,1], index: 2, kind: input, shape index: {}]
  %s3 = inlined_call_operand.vmem [shape: f32[8,32,64], index: 3, kind: input, shape index: {}]
  %s4 = inlined_call_operand.vmem [shape: f32[8,32,8], index: 4, kind: input, shape index: {}]
  %s5 = inlined_call_operand.vmem [shape: bf16[32,64], index: 5, kind: input, shape index: {}]
  %s6 = inlined_call_operand.vmem [shape: f32[1,64], index: 6, kind: input, shape index: {}]
  %s7 = inlined_call_operand.vmem [shape: bf16[64,256], index: 7, kind: input, shape index: {}]
  %s8 = inlined_call_operand.vmem [shape: f32[1,256], index: 8, kind: input, shape index: {}]
  %s9 = inlined_call_operand.vmem [shape: f32[1,64], index: 9, kind: input, shape index: {}]
  %s10 = inlined_call_operand.<no memory space> [shape: f32[1,1], index: 10, kind: input, shape index: {}]
  %s11 = inlined_call_operand.vmem [shape: bf16[64,128], index: 11, kind: input, shape index: {}]
  %s12 = inlined_call_operand.vmem [shape: bf16[64,128], index: 12, kind: input, shape index: {}]
  %s13 = inlined_call_operand.vmem [shape: f32[1,64], index: 13, kind: input, shape index: {}]
  %s14 = inlined_call_operand.vmem [shape: bf16[64,8], index: 14, kind: input, shape index: {}]
  %s15 = inlined_call_operand.vmem [shape: f32[1,8], index: 15, kind: input, shape index: {}]
  %s16 = inlined_call_operand.vmem [shape: f32[32,8], index: 16, kind: output, shape index: {0}]
  %s17 = inlined_call_operand.vmem [shape: f32[8,32,64], index: 17, kind: output, shape index: {1}, may-alias: {1,17}]
  %s18 = inlined_call_operand.vmem [shape: f32[8,32,1], index: 18, kind: output, shape index: {2}]
  %19 = xla_tuple %s16, %s17, %s18
  %s20 = sld [smem:[#allocation0]]
  $region333: #{pfrnn_agent_forward.1} parent=0
    _
  %s22 = ssub.s32 1, %s20
  %s23 = scalar_select 0, %s22, %s20
  %v24 = vstv %s10
  %25 = vst [vmem:[#allocation2] sm:$0x1] %v24
  $region1: #{pfrnn_agent_forward.1} parent=0
    #allocation3 [shape = 'u8[131072]{0}', space=vmem, size = 0x20000, scoped, tag = 'input window, operand 1']
    #allocation4 [shape = 'u8[131072]{0}', space=vmem, size = 0x20000, scoped, tag = 'input window, operand 2']
    #allocation5 [shape = 'u8[131072]{0}', space=vmem, size = 0x20000, scoped, tag = 'input window, operand 3']
    #allocation6 [shape = 'u8[131072]{0}', space=vmem, size = 0x20000, scoped, tag = 'input window, operand 4']
    #allocation7 [shape = 'u8[131072]{0}', space=vmem, size = 0x20000, scoped, tag = 'output window, operand 1']
    #allocation8 [shape = 'u8[131072]{0}', space=vmem, size = 0x20000, scoped, tag = 'output window, operand 2']
    loop: start=0, step=1, limit=4
    $region2: #{pfrnn_agent_forward.1} parent=1 // loop_pre_header
      _
    $region3: #{pfrnn_agent_forward.1} parent=1 // loop_header
      %s27 = sphi 0, %s31
      %p28 = scmp.ge.s32.totalorder %s27, 4
      %s37 = sphi 0, %s39
      %s40 = sphi 0, %s37
      %s41 = sphi 0, %s40
      %s57 = sphi 0, %s41
      %s63 = sphi 0, %s65
      %s66 = sphi 0, %s63
      %s67 = sphi 0, %s66
      %s83 = sphi 0, %s67
      %s89 = sphi 0, %s91
      %s92 = sphi 0, %s89
      %s93 = sphi 0, %s92
      %s109 = sphi 0, %s93
      %s115 = sphi 0, %s117
      %s118 = sphi 0, %s115
      %s119 = sphi 0, %s118
      %s135 = sphi 0, %s119
      %s141 = sphi 0, %s143
      %s144 = sphi 0, %s141
      %s145 = sphi 0, %s144
      %s161 = sphi 0, %s145
      %s165 = sphi 0, %s165
      %s167 = sphi 0, %s165
      %s168 = sphi 0, %s167
      %s182 = sphi 0, %s168
      %s186 = sphi 0, %s186
      %s188 = sphi 0, %s186
      %s189 = sphi 0, %s188
      %s203 = sphi 0, %s189
      %s207 = sphi 0, %s207
      %s209 = sphi 0, %s207
      %s210 = sphi 0, %s209
      %s224 = sphi 0, %s210
      %s228 = sphi 0, %s228
      %s230 = sphi 0, %s228
      %s231 = sphi 0, %s230
      %s245 = sphi 0, %s231
      %s249 = sphi 0, %s249
      %s251 = sphi 0, %s249
      %s252 = sphi 0, %s251
      %s266 = sphi 0, %s252
      %s270 = sphi 0, %s270
      %s272 = sphi 0, %s270
      %s273 = sphi 0, %s272
      %s287 = sphi 0, %s273
      %s291 = sphi 0, %s291
      %s293 = sphi 0, %s291
      %s294 = sphi 0, %s293
      %s308 = sphi 0, %s294
      %s312 = sphi 0, %s312
      %s314 = sphi 0, %s312
      %s315 = sphi 0, %s314
      %s329 = sphi 0, %s315
      %s333 = sphi 0, %s333
      %s335 = sphi 0, %s333
      %s336 = sphi 0, %s335
      %s350 = sphi 0, %s336
      %s354 = sphi 0, %s354
      %s356 = sphi 0, %s354
      %s357 = sphi 0, %s356
      %s371 = sphi 0, %s357
      %s375 = sphi 0, %s375
      %s377 = sphi 0, %s375
      %s378 = sphi 0, %s377
      %s392 = sphi 0, %s378
      %s398 = sphi 0, %s400
      %s401 = sphi 0, %s398
      %s402 = sphi 0, %s401
      %s418 = sphi 0, %s402
      %s424 = sphi 0, %s426
      %s427 = sphi 0, %s424
      %s428 = sphi 0, %s427
      %s444 = sphi 0, %s428
      %s450 = sphi 0, %s452
      %s453 = sphi 0, %s450
      %s454 = sphi 0, %s453
      %s470 = sphi 0, %s454
    $region4: #{pfrnn_agent_forward.1} parent=1 // loop_header_branch
      %30 = sbr.rel (%p28) target = $region8
    $region5: #{pfrnn_agent_forward.1} parent=1 // loop_body
      %s32 = ssub.s32 %s27, 1
      %s33 = ssub.s32 %s27, 2
      %s34 = sadd.s32 %s27, 1
      %s35 = ssub.s32 %s27, %s34
      %p36 = scmp.eq.s32.totalorder %s35, 0
      %s38 = sadd.s32 %s37, 1
      %s39 = scalar_select %p36, %s37, %s38
      %p42 = pneg %p36
      %p43 = scmp.eq.s32.totalorder %s27, 1
      %p44 = por %p42, %p43
      %p45 = scmp.ne.s32.totalorder %s37, %s40
      %p46 = scmp.eq.s32.totalorder %s27, 0
      %p47 = por %p45, %p46
      %p48 = scmp.ne.s32.totalorder %s37, %s40
      %p49 = scmp.eq.s32.totalorder %s32, 1
      %p50 = por %p48, %p49
      %p51 = scmp.ne.s32.totalorder %s40, %s41
      %p52 = scmp.eq.s32.totalorder %s32, 0
      %p53 = por %p51, %p52
      %p54 = scmp.ne.s32.totalorder %s40, %s41
      %p55 = scmp.eq.s32.totalorder %s33, 1
      %p56 = por %p54, %p55
      %p58 = scmp.ne.s32.totalorder %s41, %s57
      %p59 = scmp.eq.s32.totalorder %s33, 0
      %p60 = por %p58, %p59
      %s61 = ssub.s32 %s27, %s34
      %p62 = scmp.eq.s32.totalorder %s61, 0
      %s64 = sadd.s32 %s63, 1
      %s65 = scalar_select %p62, %s63, %s64
      %p68 = pneg %p62
      %p69 = scmp.eq.s32.totalorder %s27, 1
      %p70 = por %p68, %p69
      %p71 = scmp.ne.s32.totalorder %s63, %s66
      %p72 = scmp.eq.s32.totalorder %s27, 0
      %p73 = por %p71, %p72
      %p74 = scmp.ne.s32.totalorder %s63, %s66
      %p75 = scmp.eq.s32.totalorder %s32, 1
      %p76 = por %p74, %p75
      %p77 = scmp.ne.s32.totalorder %s66, %s67
      %p78 = scmp.eq.s32.totalorder %s32, 0
      %p79 = por %p77, %p78
      %p80 = scmp.ne.s32.totalorder %s66, %s67
      %p81 = scmp.eq.s32.totalorder %s33, 1
      %p82 = por %p80, %p81
      %p84 = scmp.ne.s32.totalorder %s67, %s83
      %p85 = scmp.eq.s32.totalorder %s33, 0
      %p86 = por %p84, %p85
      %s87 = ssub.s32 %s27, %s34
      %p88 = scmp.eq.s32.totalorder %s87, 0
      %s90 = sadd.s32 %s89, 1
      %s91 = scalar_select %p88, %s89, %s90
      %p94 = pneg %p88
      %p95 = scmp.eq.s32.totalorder %s27, 1
      %p96 = por %p94, %p95
      %p97 = scmp.ne.s32.totalorder %s89, %s92
      %p98 = scmp.eq.s32.totalorder %s27, 0
      %p99 = por %p97, %p98
      %p100 = scmp.ne.s32.totalorder %s89, %s92
      %p101 = scmp.eq.s32.totalorder %s32, 1
      %p102 = por %p100, %p101
      %p103 = scmp.ne.s32.totalorder %s92, %s93
      %p104 = scmp.eq.s32.totalorder %s32, 0
      %p105 = por %p103, %p104
      %p106 = scmp.ne.s32.totalorder %s92, %s93
      %p107 = scmp.eq.s32.totalorder %s33, 1
      %p108 = por %p106, %p107
      %p110 = scmp.ne.s32.totalorder %s93, %s109
      %p111 = scmp.eq.s32.totalorder %s33, 0
      %p112 = por %p110, %p111
      %s113 = ssub.s32 %s27, %s34
      %p114 = scmp.eq.s32.totalorder %s113, 0
      %s116 = sadd.s32 %s115, 1
      %s117 = scalar_select %p114, %s115, %s116
      %p120 = pneg %p114
      %p121 = scmp.eq.s32.totalorder %s27, 1
      %p122 = por %p120, %p121
      %p123 = scmp.ne.s32.totalorder %s115, %s118
      %p124 = scmp.eq.s32.totalorder %s27, 0
      %p125 = por %p123, %p124
      %p126 = scmp.ne.s32.totalorder %s115, %s118
      %p127 = scmp.eq.s32.totalorder %s32, 1
      %p128 = por %p126, %p127
      %p129 = scmp.ne.s32.totalorder %s118, %s119
      %p130 = scmp.eq.s32.totalorder %s32, 0
      %p131 = por %p129, %p130
      %p132 = scmp.ne.s32.totalorder %s118, %s119
      %p133 = scmp.eq.s32.totalorder %s33, 1
      %p134 = por %p132, %p133
      %p136 = scmp.ne.s32.totalorder %s119, %s135
      %p137 = scmp.eq.s32.totalorder %s33, 0
      %p138 = por %p136, %p137
      %s139 = ssub.s32 %s27, %s34
      %p140 = scmp.eq.s32.totalorder %s139, 0
      %s142 = sadd.s32 %s141, 1
      %s143 = scalar_select %p140, %s141, %s142
      %p146 = pneg %p140
      %p147 = scmp.eq.s32.totalorder %s27, 1
      %p148 = por %p146, %p147
      %p149 = scmp.ne.s32.totalorder %s141, %s144
      %p150 = scmp.eq.s32.totalorder %s27, 0
      %p151 = por %p149, %p150
      %p152 = scmp.ne.s32.totalorder %s141, %s144
      %p153 = scmp.eq.s32.totalorder %s32, 1
      %p154 = por %p152, %p153
      %p155 = scmp.ne.s32.totalorder %s144, %s145
      %p156 = scmp.eq.s32.totalorder %s32, 0
      %p157 = por %p155, %p156
      %p158 = scmp.ne.s32.totalorder %s144, %s145
      %p159 = scmp.eq.s32.totalorder %s33, 1
      %p160 = por %p158, %p159
      %p162 = scmp.ne.s32.totalorder %s145, %s161
      %p163 = scmp.eq.s32.totalorder %s33, 0
      %p164 = por %p162, %p163
      %s166 = sadd.s32 %s165, 1
      %p169 = scmp.eq.s32.totalorder %s27, 1
      %p170 = scmp.ne.s32.totalorder %s165, %s167
      %p171 = scmp.eq.s32.totalorder %s27, 0
      %p172 = por %p170, %p171
      %p173 = scmp.ne.s32.totalorder %s165, %s167
      %p174 = scmp.eq.s32.totalorder %s32, 1
      %p175 = por %p173, %p174
      %p176 = scmp.ne.s32.totalorder %s167, %s168
      %p177 = scmp.eq.s32.totalorder %s32, 0
      %p178 = por %p176, %p177
      %p179 = scmp.ne.s32.totalorder %s167, %s168
      %p180 = scmp.eq.s32.totalorder %s33, 1
      %p181 = por %p179, %p180
      %p183 = scmp.ne.s32.totalorder %s168, %s182
      %p184 = scmp.eq.s32.totalorder %s33, 0
      %p185 = por %p183, %p184
      %s187 = sadd.s32 %s186, 1
      %p190 = scmp.eq.s32.totalorder %s27, 1
      %p191 = scmp.ne.s32.totalorder %s186, %s188
      %p192 = scmp.eq.s32.totalorder %s27, 0
      %p193 = por %p191, %p192
      %p194 = scmp.ne.s32.totalorder %s186, %s188
      %p195 = scmp.eq.s32.totalorder %s32, 1
      %p196 = por %p194, %p195
      %p197 = scmp.ne.s32.totalorder %s188, %s189
      %p198 = scmp.eq.s32.totalorder %s32, 0
      %p199 = por %p197, %p198
      %p200 = scmp.ne.s32.totalorder %s188, %s189
      %p201 = scmp.eq.s32.totalorder %s33, 1
      %p202 = por %p200, %p201
      %p204 = scmp.ne.s32.totalorder %s189, %s203
      %p205 = scmp.eq.s32.totalorder %s33, 0
      %p206 = por %p204, %p205
      %s208 = sadd.s32 %s207, 1
      %p211 = scmp.eq.s32.totalorder %s27, 1
      %p212 = scmp.ne.s32.totalorder %s207, %s209
      %p213 = scmp.eq.s32.totalorder %s27, 0
      %p214 = por %p212, %p213
      %p215 = scmp.ne.s32.totalorder %s207, %s209
      %p216 = scmp.eq.s32.totalorder %s32, 1
      %p217 = por %p215, %p216
      %p218 = scmp.ne.s32.totalorder %s209, %s210
      %p219 = scmp.eq.s32.totalorder %s32, 0
      %p220 = por %p218, %p219
      %p221 = scmp.ne.s32.totalorder %s209, %s210
      %p222 = scmp.eq.s32.totalorder %s33, 1
      %p223 = por %p221, %p222
      %p225 = scmp.ne.s32.totalorder %s210, %s224
      %p226 = scmp.eq.s32.totalorder %s33, 0
      %p227 = por %p225, %p226
      %s229 = sadd.s32 %s228, 1
      %p232 = scmp.eq.s32.totalorder %s27, 1
      %p233 = scmp.ne.s32.totalorder %s228, %s230
      %p234 = scmp.eq.s32.totalorder %s27, 0
      %p235 = por %p233, %p234
      %p236 = scmp.ne.s32.totalorder %s228, %s230
      %p237 = scmp.eq.s32.totalorder %s32, 1
      %p238 = por %p236, %p237
      %p239 = scmp.ne.s32.totalorder %s230, %s231
      %p240 = scmp.eq.s32.totalorder %s32, 0
      %p241 = por %p239, %p240
      %p242 = scmp.ne.s32.totalorder %s230, %s231
      %p243 = scmp.eq.s32.totalorder %s33, 1
      %p244 = por %p242, %p243
      %p246 = scmp.ne.s32.totalorder %s231, %s245
      %p247 = scmp.eq.s32.totalorder %s33, 0
      %p248 = por %p246, %p247
      %s250 = sadd.s32 %s249, 1
      %p253 = scmp.eq.s32.totalorder %s27, 1
      %p254 = scmp.ne.s32.totalorder %s249, %s251
      %p255 = scmp.eq.s32.totalorder %s27, 0
      %p256 = por %p254, %p255
      %p257 = scmp.ne.s32.totalorder %s249, %s251
      %p258 = scmp.eq.s32.totalorder %s32, 1
      %p259 = por %p257, %p258
      %p260 = scmp.ne.s32.totalorder %s251, %s252
      %p261 = scmp.eq.s32.totalorder %s32, 0
      %p262 = por %p260, %p261
      %p263 = scmp.ne.s32.totalorder %s251, %s252
      %p264 = scmp.eq.s32.totalorder %s33, 1
      %p265 = por %p263, %p264
      %p267 = scmp.ne.s32.totalorder %s252, %s266
      %p268 = scmp.eq.s32.totalorder %s33, 0
      %p269 = por %p267, %p268
      %s271 = sadd.s32 %s270, 1
      %p274 = scmp.eq.s32.totalorder %s27, 1
      %p275 = scmp.ne.s32.totalorder %s270, %s272
      %p276 = scmp.eq.s32.totalorder %s27, 0
      %p277 = por %p275, %p276
      %p278 = scmp.ne.s32.totalorder %s270, %s272
      %p279 = scmp.eq.s32.totalorder %s32, 1
      %p280 = por %p278, %p279
      %p281 = scmp.ne.s32.totalorder %s272, %s273
      %p282 = scmp.eq.s32.totalorder %s32, 0
      %p283 = por %p281, %p282
      %p284 = scmp.ne.s32.totalorder %s272, %s273
      %p285 = scmp.eq.s32.totalorder %s33, 1
      %p286 = por %p284, %p285
      %p288 = scmp.ne.s32.totalorder %s273, %s287
      %p289 = scmp.eq.s32.totalorder %s33, 0
      %p290 = por %p288, %p289
      %s292 = sadd.s32 %s291, 1
      %p295 = scmp.eq.s32.totalorder %s27, 1
      %p296 = scmp.ne.s32.totalorder %s291, %s293
      %p297 = scmp.eq.s32.totalorder %s27, 0
      %p298 = por %p296, %p297
      %p299 = scmp.ne.s32.totalorder %s291, %s293
      %p300 = scmp.eq.s32.totalorder %s32, 1
      %p301 = por %p299, %p300
      %p302 = scmp.ne.s32.totalorder %s293, %s294
      %p303 = scmp.eq.s32.totalorder %s32, 0
      %p304 = por %p302, %p303
      %p305 = scmp.ne.s32.totalorder %s293, %s294
      %p306 = scmp.eq.s32.totalorder %s33, 1
      %p307 = por %p305, %p306
      %p309 = scmp.ne.s32.totalorder %s294, %s308
      %p310 = scmp.eq.s32.totalorder %s33, 0
      %p311 = por %p309, %p310
      %s313 = sadd.s32 %s312, 1
      %p316 = scmp.eq.s32.totalorder %s27, 1
      %p317 = scmp.ne.s32.totalorder %s312, %s314
      %p318 = scmp.eq.s32.totalorder %s27, 0
      %p319 = por %p317, %p318
      %p320 = scmp.ne.s32.totalorder %s312, %s314
      %p321 = scmp.eq.s32.totalorder %s32, 1
      %p322 = por %p320, %p321
      %p323 = scmp.ne.s32.totalorder %s314, %s315
      %p324 = scmp.eq.s32.totalorder %s32, 0
      %p325 = por %p323, %p324
      %p326 = scmp.ne.s32.totalorder %s314, %s315
      %p327 = scmp.eq.s32.totalorder %s33, 1
      %p328 = por %p326, %p327
      %p330 = scmp.ne.s32.totalorder %s315, %s329
      %p331 = scmp.eq.s32.totalorder %s33, 0
      %p332 = por %p330, %p331
      %s334 = sadd.s32 %s333, 1
      %p337 = scmp.eq.s32.totalorder %s27, 1
      %p338 = scmp.ne.s32.totalorder %s333, %s335
      %p339 = scmp.eq.s32.totalorder %s27, 0
      %p340 = por %p338, %p339
      %p341 = scmp.ne.s32.totalorder %s333, %s335
      %p342 = scmp.eq.s32.totalorder %s32, 1
      %p343 = por %p341, %p342
      %p344 = scmp.ne.s32.totalorder %s335, %s336
      %p345 = scmp.eq.s32.totalorder %s32, 0
      %p346 = por %p344, %p345
      %p347 = scmp.ne.s32.totalorder %s335, %s336
      %p348 = scmp.eq.s32.totalorder %s33, 1
      %p349 = por %p347, %p348
      %p351 = scmp.ne.s32.totalorder %s336, %s350
      %p352 = scmp.eq.s32.totalorder %s33, 0
      %p353 = por %p351, %p352
      %s355 = sadd.s32 %s354, 1
      %p358 = scmp.eq.s32.totalorder %s27, 1
      %p359 = scmp.ne.s32.totalorder %s354, %s356
      %p360 = scmp.eq.s32.totalorder %s27, 0
      %p361 = por %p359, %p360
      %p362 = scmp.ne.s32.totalorder %s354, %s356
      %p363 = scmp.eq.s32.totalorder %s32, 1
      %p364 = por %p362, %p363
      %p365 = scmp.ne.s32.totalorder %s356, %s357
      %p366 = scmp.eq.s32.totalorder %s32, 0
      %p367 = por %p365, %p366
      %p368 = scmp.ne.s32.totalorder %s356, %s357
      %p369 = scmp.eq.s32.totalorder %s33, 1
      %p370 = por %p368, %p369
      %p372 = scmp.ne.s32.totalorder %s357, %s371
      %p373 = scmp.eq.s32.totalorder %s33, 0
      %p374 = por %p372, %p373
      %s376 = sadd.s32 %s375, 1
      %p379 = scmp.eq.s32.totalorder %s27, 1
      %p380 = scmp.ne.s32.totalorder %s375, %s377
      %p381 = scmp.eq.s32.totalorder %s27, 0
      %p382 = por %p380, %p381
      %p383 = scmp.ne.s32.totalorder %s375, %s377
      %p384 = scmp.eq.s32.totalorder %s32, 1
      %p385 = por %p383, %p384
      %p386 = scmp.ne.s32.totalorder %s377, %s378
      %p387 = scmp.eq.s32.totalorder %s32, 0
      %p388 = por %p386, %p387
      %p389 = scmp.ne.s32.totalorder %s377, %s378
      %p390 = scmp.eq.s32.totalorder %s33, 1
      %p391 = por %p389, %p390
      %p393 = scmp.ne.s32.totalorder %s378, %s392
      %p394 = scmp.eq.s32.totalorder %s33, 0
      %p395 = por %p393, %p394
      %s396 = ssub.s32 %s27, %s34
      %p397 = scmp.eq.s32.totalorder %s396, 0
      %s399 = sadd.s32 %s398, 1
      %s400 = scalar_select %p397, %s398, %s399
      %p403 = pneg %p397
      %p404 = scmp.eq.s32.totalorder %s27, 1
      %p405 = por %p403, %p404
      %p406 = scmp.ne.s32.totalorder %s398, %s401
      %p407 = scmp.eq.s32.totalorder %s27, 0
      %p408 = por %p406, %p407
      %p409 = scmp.ne.s32.totalorder %s398, %s401
      %p410 = scmp.eq.s32.totalorder %s32, 1
      %p411 = por %p409, %p410
      %p412 = scmp.ne.s32.totalorder %s401, %s402
      %p413 = scmp.eq.s32.totalorder %s32, 0
      %p414 = por %p412, %p413
      %p415 = scmp.ne.s32.totalorder %s401, %s402
      %p416 = scmp.eq.s32.totalorder %s33, 1
      %p417 = por %p415, %p416
      %p419 = scmp.ne.s32.totalorder %s402, %s418
      %p420 = scmp.eq.s32.totalorder %s33, 0
      %p421 = por %p419, %p420
      %s422 = ssub.s32 %s27, %s34
      %p423 = scmp.eq.s32.totalorder %s422, 0
      %s425 = sadd.s32 %s424, 1
      %s426 = scalar_select %p423, %s424, %s425
      %p429 = pneg %p423
      %p430 = scmp.eq.s32.totalorder %s27, 1
      %p431 = por %p429, %p430
      %p432 = scmp.ne.s32.totalorder %s424, %s427
      %p433 = scmp.eq.s32.totalorder %s27, 0
      %p434 = por %p432, %p433
      %p435 = scmp.ne.s32.totalorder %s424, %s427
      %p436 = scmp.eq.s32.totalorder %s32, 1
      %p437 = por %p435, %p436
      %p438 = scmp.ne.s32.totalorder %s427, %s428
      %p439 = scmp.eq.s32.totalorder %s32, 0
      %p440 = por %p438, %p439
      %p441 = scmp.ne.s32.totalorder %s427, %s428
      %p442 = scmp.eq.s32.totalorder %s33, 1
      %p443 = por %p441, %p442
      %p445 = scmp.ne.s32.totalorder %s428, %s444
      %p446 = scmp.eq.s32.totalorder %s33, 0
      %p447 = por %p445, %p446
      %s448 = ssub.s32 %s27, %s34
      %p449 = scmp.eq.s32.totalorder %s448, 0
      %s451 = sadd.s32 %s450, 1
      %s452 = scalar_select %p449, %s450, %s451
      %p455 = pneg %p449
      %p456 = scmp.eq.s32.totalorder %s27, 1
      %p457 = por %p455, %p456
      %p458 = scmp.ne.s32.totalorder %s450, %s453
      %p459 = scmp.eq.s32.totalorder %s27, 0
      %p460 = por %p458, %p459
      %p461 = scmp.ne.s32.totalorder %s450, %s453
      %p462 = scmp.eq.s32.totalorder %s32, 1
      %p463 = por %p461, %p462
      %p464 = scmp.ne.s32.totalorder %s453, %s454
      %p465 = scmp.eq.s32.totalorder %s32, 0
      %p466 = por %p464, %p465
      %p467 = scmp.ne.s32.totalorder %s453, %s454
      %p468 = scmp.eq.s32.totalorder %s33, 1
      %p469 = por %p467, %p468
      %p471 = scmp.ne.s32.totalorder %s454, %s470
      %p472 = scmp.eq.s32.totalorder %s33, 0
      %p473 = por %p471, %p472
      %p474 = scmp.le.s32.totalorder 1, %s27
      %p475 = scmp.lt.s32.totalorder %s27, 3
      %p476 = pnand %p474, %p475
      %p477 = pneg %p476
      // Predicated region
      $region9: #{pfrnn_agent_forward.1} parent=5 // pred_check
        _
      $region10: #{pfrnn_agent_forward.1} parent=5 // pred_check_branch
        %479 = sbr.rel (%p476) target = $region12
      $region11: #{pfrnn_agent_forward.1} parent=5 // pred_region
        %s480 = ssub.s32 %s27, 1
        // Predicated region
        $region13: #{pfrnn_agent_forward.1} parent=11 // pred_check
          %p481 = pneg %p178
        $region14: #{pfrnn_agent_forward.1} parent=11 // pred_check_branch
          %483 = sbr.rel (%p481) target = $region16
        $region15: #{pfrnn_agent_forward.1} parent=11 // pred_region
          _
        $region16: #{pfrnn_agent_forward.1} parent=11 // pred_fallthru
          _
        // Predicated region
        $region17: #{pfrnn_agent_forward.1} parent=11 // pred_check
          %p484 = pneg %p199
        $region18: #{pfrnn_agent_forward.1} parent=11 // pred_check_branch
          %486 = sbr.rel (%p484) target = $region20
        $region19: #{pfrnn_agent_forward.1} parent=11 // pred_region
          _
        $region20: #{pfrnn_agent_forward.1} parent=11 // pred_fallthru
          _
        // Predicated region
        $region21: #{pfrnn_agent_forward.1} parent=11 // pred_check
          %p487 = pneg %p220
        $region22: #{pfrnn_agent_forward.1} parent=11 // pred_check_branch
          %489 = sbr.rel (%p487) target = $region24
        $region23: #{pfrnn_agent_forward.1} parent=11 // pred_region
          _
        $region24: #{pfrnn_agent_forward.1} parent=11 // pred_fallthru
          _
        // Predicated region
        $region25: #{pfrnn_agent_forward.1} parent=11 // pred_check
          %p490 = pneg %p241
        $region26: #{pfrnn_agent_forward.1} parent=11 // pred_check_branch
          %492 = sbr.rel (%p490) target = $region28
        $region27: #{pfrnn_agent_forward.1} parent=11 // pred_region
          _
        $region28: #{pfrnn_agent_forward.1} parent=11 // pred_fallthru
          _
        // Predicated region
        $region29: #{pfrnn_agent_forward.1} parent=11 // pred_check
          %p493 = pneg %p262
        $region30: #{pfrnn_agent_forward.1} parent=11 // pred_check_branch
          %495 = sbr.rel (%p493) target = $region32
        $region31: #{pfrnn_agent_forward.1} parent=11 // pred_region
          _
        $region32: #{pfrnn_agent_forward.1} parent=11 // pred_fallthru
          _
        // Predicated region
        $region33: #{pfrnn_agent_forward.1} parent=11 // pred_check
          %p496 = pneg %p283
        $region34: #{pfrnn_agent_forward.1} parent=11 // pred_check_branch
          %498 = sbr.rel (%p496) target = $region36
        $region35: #{pfrnn_agent_forward.1} parent=11 // pred_region
          _
        $region36: #{pfrnn_agent_forward.1} parent=11 // pred_fallthru
          _
        // Predicated region
        $region37: #{pfrnn_agent_forward.1} parent=11 // pred_check
          %p499 = pneg %p304
        $region38: #{pfrnn_agent_forward.1} parent=11 // pred_check_branch
          %501 = sbr.rel (%p499) target = $region40
        $region39: #{pfrnn_agent_forward.1} parent=11 // pred_region
          _
        $region40: #{pfrnn_agent_forward.1} parent=11 // pred_fallthru
          _
        // Predicated region
        $region41: #{pfrnn_agent_forward.1} parent=11 // pred_check
          %p502 = pneg %p325
        $region42: #{pfrnn_agent_forward.1} parent=11 // pred_check_branch
          %504 = sbr.rel (%p502) target = $region44
        $region43: #{pfrnn_agent_forward.1} parent=11 // pred_region
          _
        $region44: #{pfrnn_agent_forward.1} parent=11 // pred_fallthru
          _
        // Predicated region
        $region45: #{pfrnn_agent_forward.1} parent=11 // pred_check
          %p505 = pneg %p346
        $region46: #{pfrnn_agent_forward.1} parent=11 // pred_check_branch
          %507 = sbr.rel (%p505) target = $region48
        $region47: #{pfrnn_agent_forward.1} parent=11 // pred_region
          _
        $region48: #{pfrnn_agent_forward.1} parent=11 // pred_fallthru
          _
        // Predicated region
        $region49: #{pfrnn_agent_forward.1} parent=11 // pred_check
          %p508 = pneg %p367
        $region50: #{pfrnn_agent_forward.1} parent=11 // pred_check_branch
          %510 = sbr.rel (%p508) target = $region52
        $region51: #{pfrnn_agent_forward.1} parent=11 // pred_region
          _
        $region52: #{pfrnn_agent_forward.1} parent=11 // pred_fallthru
          _
        // Predicated region
        $region53: #{pfrnn_agent_forward.1} parent=11 // pred_check
          %p511 = pneg %p388
        $region54: #{pfrnn_agent_forward.1} parent=11 // pred_check_branch
          %513 = sbr.rel (%p511) target = $region56
        $region55: #{pfrnn_agent_forward.1} parent=11 // pred_region
          _
        $region56: #{pfrnn_agent_forward.1} parent=11 // pred_fallthru
          _
      $region12: #{pfrnn_agent_forward.1} parent=5 // pred_fallthru
        _
      %p514 = scmp.lt.s32.totalorder %s27, 2
      // Predicated region
      $region57: #{pfrnn_agent_forward.1} parent=5 // pred_check
        %p515 = pneg %p514
      $region58: #{pfrnn_agent_forward.1} parent=5 // pred_check_branch
        %517 = sbr.rel (%p515) target = $region60
      $region59: #{pfrnn_agent_forward.1} parent=5 // pred_region
        // Predicated region
        $region61: #{pfrnn_agent_forward.1} parent=59 // pred_check
          %p518 = pneg %p47
        $region62: #{pfrnn_agent_forward.1} parent=59 // pred_check_branch
          %520 = sbr.rel (%p518) target = $region64
        $region63: #{pfrnn_agent_forward.1} parent=59 // pred_region
          %s521 = smul.u32 2, %s27
          %p522 = scmp.lt.s32.totalorder %s521, 3
          %s523 = scalar_select %p522, %s521, 3
          %s524 = smul.addr %s523, 8
          %s525 = scalar_lea.vmem %s0, %s524
          %s526 = smul.u32 2, %s27
        $region64: #{pfrnn_agent_forward.1} parent=59 // pred_fallthru
          _
        // Predicated region
        $region65: #{pfrnn_agent_forward.1} parent=59 // pred_check
          %p527 = pneg %p73
        $region66: #{pfrnn_agent_forward.1} parent=59 // pred_check_branch
          %529 = sbr.rel (%p527) target = $region68
        $region67: #{pfrnn_agent_forward.1} parent=59 // pred_region
          %s530 = sand.u32 %s63, 1
          %s531 = sand.u32 %s63, 1
          %s532 = smul.addr %s531, 128
          %s533 = scalar_lea.vmem [#allocation3], %s532
          %s534 = smul.u32 2, %s27
          %s535 = smul.addr %s534, 8
          %s536 = scalar_lea.vmem %s1, %s535
          // Predicated region
          $region69: #{pfrnn_agent_forward.1} parent=67 // pred_check
            _
          $region70: #{pfrnn_agent_forward.1} parent=67 // pred_check_branch
            %538 = sbr.rel (0) target = $region72
          $region71: #{pfrnn_agent_forward.1} parent=67 // pred_region
            // Predicated region
            $region73: #{pfrnn_agent_forward.1} parent=71 // pred_check
              _
            $region74: #{pfrnn_agent_forward.1} parent=71 // pred_check_branch
              %540 = sbr.rel (0) target = $region76
            $region75: #{pfrnn_agent_forward.1} parent=71 // pred_region
              // Predicated region
              $region88: #{pfrnn_agent_forward.1} parent=75 // pred_check
                _
              $region89: #{pfrnn_agent_forward.1} parent=75 // pred_check_branch
                %585 = sbr.rel (0) target = $region91
              $region90: #{pfrnn_agent_forward.1} parent=75 // pred_region
                loop: start=0, step=1, limit=1
                $region92: #{pfrnn_agent_forward.1} parent=90 // loop_pre_header
                  _
                $region93: #{pfrnn_agent_forward.1} parent=90 // loop_header
                  %s587 = sphi 0, %s591
                  %p588 = scmp.ge.s32.totalorder %s587, 1
                  %s592 = sphi %s536, %s536
                  %s593 = sphi %s533, %s533
                $region94: #{pfrnn_agent_forward.1} parent=90 // loop_header_branch
                  %590 = sbr.rel (%p588) target = $region98
                $region95: #{pfrnn_agent_forward.1} parent=90 // loop_body
                  %v594 = vld [vmem:[%s592] sm:$0xff]
                  %595 = vst [vmem:[%s593] sm:$0xff] %v594
                  %v596 = vld [vmem:[%s592 + $0x8] sm:$0xff]
                  %597 = vst [vmem:[%s593 + $0x8] sm:$0xff] %v596
                  %v598 = vld [vmem:[%s592 + $0x20] sm:$0xff]
                  %599 = vst [vmem:[%s593 + $0x10] sm:$0xff] %v598
                  %v600 = vld [vmem:[%s592 + $0x28] sm:$0xff]
                  %601 = vst [vmem:[%s593 + $0x18] sm:$0xff] %v600
                  %v602 = vld [vmem:[%s592 + $0x40] sm:$0xff]
                  %603 = vst [vmem:[%s593 + $0x20] sm:$0xff] %v602
                  %v604 = vld [vmem:[%s592 + $0x48] sm:$0xff]
                  %605 = vst [vmem:[%s593 + $0x28] sm:$0xff] %v604
                  %v606 = vld [vmem:[%s592 + $0x60] sm:$0xff]
                  %607 = vst [vmem:[%s593 + $0x30] sm:$0xff] %v606
                  %v608 = vld [vmem:[%s592 + $0x68] sm:$0xff]
                  %609 = vst [vmem:[%s593 + $0x38] sm:$0xff] %v608
                  %v610 = vld [vmem:[%s592 + $0x80] sm:$0xff]
                  %611 = vst [vmem:[%s593 + $0x40] sm:$0xff] %v610
                  %v612 = vld [vmem:[%s592 + $0x88] sm:$0xff]
                  %613 = vst [vmem:[%s593 + $0x48] sm:$0xff] %v612
                  %v614 = vld [vmem:[%s592 + $0xa0] sm:$0xff]
                  %615 = vst [vmem:[%s593 + $0x50] sm:$0xff] %v614
                  %v616 = vld [vmem:[%s592 + $0xa8] sm:$0xff]
                  %617 = vst [vmem:[%s593 + $0x58] sm:$0xff] %v616
                  %v618 = vld [vmem:[%s592 + $0xc0] sm:$0xff]
                  %619 = vst [vmem:[%s593 + $0x60] sm:$0xff] %v618
                  %v620 = vld [vmem:[%s592 + $0xc8] sm:$0xff]
                  %621 = vst [vmem:[%s593 + $0x68] sm:$0xff] %v620
                  %v622 = vld [vmem:[%s592 + $0xe0] sm:$0xff]
                  %623 = vst [vmem:[%s593 + $0x70] sm:$0xff] %v622
                  %v624 = vld [vmem:[%s592 + $0xe8] sm:$0xff]
                  %625 = vst [vmem:[%s593 + $0x78] sm:$0xff] %v624
                $region96: #{pfrnn_agent_forward.1} parent=90 // loop_footer
                  %s591 = sadd.s32 1, %s587
                $region97: #{pfrnn_agent_forward.1} parent=90 // loop_footer_branch
                  %586 = sbr.rel target = $region93
                $region98: #{pfrnn_agent_forward.1} parent=90 // loop_exit
                  _
              $region91: #{pfrnn_agent_forward.1} parent=75 // pred_fallthru
                _
              // Predicated region
              $region99: #{pfrnn_agent_forward.1} parent=75 // pred_check
                _
              $region100: #{pfrnn_agent_forward.1} parent=75 // pred_check_branch
                %627 = sbr.rel target = $region102
              $region101: #{pfrnn_agent_forward.1} parent=75 // pred_region
                _
              $region102: #{pfrnn_agent_forward.1} parent=75 // pred_fallthru
                _
            $region76: #{pfrnn_agent_forward.1} parent=71 // pred_fallthru
              _
            // Predicated region
            $region77: #{pfrnn_agent_forward.1} parent=71 // pred_check
              _
            $region78: #{pfrnn_agent_forward.1} parent=71 // pred_check_branch
              %542 = sbr.rel target = $region80
            $region79: #{pfrnn_agent_forward.1} parent=71 // pred_region
              loop: start=0, step=1, limit=1
              $region81: #{pfrnn_agent_forward.1} parent=79 // loop_pre_header
                _
              $region82: #{pfrnn_agent_forward.1} parent=79 // loop_header
                %s545 = sphi 0, %s549
                %p546 = scmp.ge.s32.totalorder %s545, 1
                %s550 = sphi %s536, %s536
                %s551 = sphi %s533, %s533
              $region83: #{pfrnn_agent_forward.1} parent=79 // loop_header_branch
                %548 = sbr.rel (%p546) target = $region87
              $region84: #{pfrnn_agent_forward.1} parent=79 // loop_body
                %v552 = vld [vmem:[%s550] sm:$0xff]
                %553 = vst [vmem:[%s551] sm:$0xff] %v552
                %v554 = vld [vmem:[%s550 + $0x8] sm:$0xff]
                %555 = vst [vmem:[%s551 + $0x8] sm:$0xff] %v554
                %v556 = vld [vmem:[%s550 + $0x20] sm:$0xff]
                %557 = vst [vmem:[%s551 + $0x10] sm:$0xff] %v556
                %v558 = vld [vmem:[%s550 + $0x28] sm:$0xff]
                %559 = vst [vmem:[%s551 + $0x18] sm:$0xff] %v558
                %v560 = vld [vmem:[%s550 + $0x40] sm:$0xff]
                %561 = vst [vmem:[%s551 + $0x20] sm:$0xff] %v560
                %v562 = vld [vmem:[%s550 + $0x48] sm:$0xff]
                %563 = vst [vmem:[%s551 + $0x28] sm:$0xff] %v562
                %v564 = vld [vmem:[%s550 + $0x60] sm:$0xff]
                %565 = vst [vmem:[%s551 + $0x30] sm:$0xff] %v564
                %v566 = vld [vmem:[%s550 + $0x68] sm:$0xff]
                %567 = vst [vmem:[%s551 + $0x38] sm:$0xff] %v566
                %v568 = vld [vmem:[%s550 + $0x80] sm:$0xff]
                %569 = vst [vmem:[%s551 + $0x40] sm:$0xff] %v568
                %v570 = vld [vmem:[%s550 + $0x88] sm:$0xff]
                %571 = vst [vmem:[%s551 + $0x48] sm:$0xff] %v570
                %v572 = vld [vmem:[%s550 + $0xa0] sm:$0xff]
                %573 = vst [vmem:[%s551 + $0x50] sm:$0xff] %v572
                %v574 = vld [vmem:[%s550 + $0xa8] sm:$0xff]
                %575 = vst [vmem:[%s551 + $0x58] sm:$0xff] %v574
                %v576 = vld [vmem:[%s550 + $0xc0] sm:$0xff]
                %577 = vst [vmem:[%s551 + $0x60] sm:$0xff] %v576
                %v578 = vld [vmem:[%s550 + $0xc8] sm:$0xff]
                %579 = vst [vmem:[%s551 + $0x68] sm:$0xff] %v578
                %v580 = vld [vmem:[%s550 + $0xe0] sm:$0xff]
                %581 = vst [vmem:[%s551 + $0x70] sm:$0xff] %v580
                %v582 = vld [vmem:[%s550 + $0xe8] sm:$0xff]
                %583 = vst [vmem:[%s551 + $0x78] sm:$0xff] %v582
              $region85: #{pfrnn_agent_forward.1} parent=79 // loop_footer
                %s549 = sadd.s32 1, %s545
              $region86: #{pfrnn_agent_forward.1} parent=79 // loop_footer_branch
                %544 = sbr.rel target = $region82
              $region87: #{pfrnn_agent_forward.1} parent=79 // loop_exit
                _
            $region80: #{pfrnn_agent_forward.1} parent=71 // pred_fallthru
              _
          $region72: #{pfrnn_agent_forward.1} parent=67 // pred_fallthru
            _
          %628 = vnop
        $region68: #{pfrnn_agent_forward.1} parent=59 // pred_fallthru
          _
        // Predicated region
        $region103: #{pfrnn_agent_forward.1} parent=59 // pred_check
          %p629 = pneg %p99
        $region104: #{pfrnn_agent_forward.1} parent=59 // pred_check_branch
          %631 = sbr.rel (%p629) target = $region106
        $region105: #{pfrnn_agent_forward.1} parent=59 // pred_region
          %s632 = sand.u32 %s89, 1
          %s633 = sand.u32 %s89, 1
          %s634 = smul.addr %s633, 128
          %s635 = scalar_lea.vmem [#allocation4], %s634
          %s636 = smul.u32 2, %s27
          %s637 = smul.addr %s636, 8
          %s638 = scalar_lea.vmem %s2, %s637
          // Predicated region
          $region107: #{pfrnn_agent_forward.1} parent=105 // pred_check
            _
          $region108: #{pfrnn_agent_forward.1} parent=105 // pred_check_branch
            %640 = sbr.rel (0) target = $region110
          $region109: #{pfrnn_agent_forward.1} parent=105 // pred_region
            // Predicated region
            $region111: #{pfrnn_agent_forward.1} parent=109 // pred_check
              _
            $region112: #{pfrnn_agent_forward.1} parent=109 // pred_check_branch
              %642 = sbr.rel (0) target = $region114
            $region113: #{pfrnn_agent_forward.1} parent=109 // pred_region
              // Predicated region
              $region126: #{pfrnn_agent_forward.1} parent=113 // pred_check
                _
              $region127: #{pfrnn_agent_forward.1} parent=113 // pred_check_branch
                %687 = sbr.rel (0) target = $region129
              $region128: #{pfrnn_agent_forward.1} parent=113 // pred_region
                loop: start=0, step=1, limit=1
                $region130: #{pfrnn_agent_forward.1} parent=128 // loop_pre_header
                  _
                $region131: #{pfrnn_agent_forward.1} parent=128 // loop_header
                  %s689 = sphi 0, %s693
                  %p690 = scmp.ge.s32.totalorder %s689, 1
                  %s694 = sphi %s638, %s638
                  %s695 = sphi %s635, %s635
                $region132: #{pfrnn_agent_forward.1} parent=128 // loop_header_branch
                  %692 = sbr.rel (%p690) target = $region136
                $region133: #{pfrnn_agent_forward.1} parent=128 // loop_body
                  %v696 = vld [vmem:[%s694] sm:$0xff]
                  %697 = vst [vmem:[%s695] sm:$0xff] %v696
                  %v698 = vld [vmem:[%s694 + $0x8] sm:$0xff]
                  %699 = vst [vmem:[%s695 + $0x8] sm:$0xff] %v698
                  %v700 = vld [vmem:[%s694 + $0x20] sm:$0xff]
                  %701 = vst [vmem:[%s695 + $0x10] sm:$0xff] %v700
                  %v702 = vld [vmem:[%s694 + $0x28] sm:$0xff]
                  %703 = vst [vmem:[%s695 + $0x18] sm:$0xff] %v702
                  %v704 = vld [vmem:[%s694 + $0x40] sm:$0xff]
                  %705 = vst [vmem:[%s695 + $0x20] sm:$0xff] %v704
                  %v706 = vld [vmem:[%s694 + $0x48] sm:$0xff]
                  %707 = vst [vmem:[%s695 + $0x28] sm:$0xff] %v706
                  %v708 = vld [vmem:[%s694 + $0x60] sm:$0xff]
                  %709 = vst [vmem:[%s695 + $0x30] sm:$0xff] %v708
                  %v710 = vld [vmem:[%s694 + $0x68] sm:$0xff]
                  %711 = vst [vmem:[%s695 + $0x38] sm:$0xff] %v710
                  %v712 = vld [vmem:[%s694 + $0x80] sm:$0xff]
                  %713 = vst [vmem:[%s695 + $0x40] sm:$0xff] %v712
                  %v714 = vld [vmem:[%s694 + $0x88] sm:$0xff]
                  %715 = vst [vmem:[%s695 + $0x48] sm:$0xff] %v714
                  %v716 = vld [vmem:[%s694 + $0xa0] sm:$0xff]
                  %717 = vst [vmem:[%s695 + $0x50] sm:$0xff] %v716
                  %v718 = vld [vmem:[%s694 + $0xa8] sm:$0xff]
                  %719 = vst [vmem:[%s695 + $0x58] sm:$0xff] %v718
                  %v720 = vld [vmem:[%s694 + $0xc0] sm:$0xff]
                  %721 = vst [vmem:[%s695 + $0x60] sm:$0xff] %v720
                  %v722 = vld [vmem:[%s694 + $0xc8] sm:$0xff]
                  %723 = vst [vmem:[%s695 + $0x68] sm:$0xff] %v722
                  %v724 = vld [vmem:[%s694 + $0xe0] sm:$0xff]
                  %725 = vst [vmem:[%s695 + $0x70] sm:$0xff] %v724
                  %v726 = vld [vmem:[%s694 + $0xe8] sm:$0xff]
                  %727 = vst [vmem:[%s695 + $0x78] sm:$0xff] %v726
                $region134: #{pfrnn_agent_forward.1} parent=128 // loop_footer
                  %s693 = sadd.s32 1, %s689
                $region135: #{pfrnn_agent_forward.1} parent=128 // loop_footer_branch
                  %688 = sbr.rel target = $region131
                $region136: #{pfrnn_agent_forward.1} parent=128 // loop_exit
                  _
              $region129: #{pfrnn_agent_forward.1} parent=113 // pred_fallthru
                _
              // Predicated region
              $region137: #{pfrnn_agent_forward.1} parent=113 // pred_check
                _
              $region138: #{pfrnn_agent_forward.1} parent=113 // pred_check_branch
                %729 = sbr.rel target = $region140
              $region139: #{pfrnn_agent_forward.1} parent=113 // pred_region
                _
              $region140: #{pfrnn_agent_forward.1} parent=113 // pred_fallthru
                _
            $region114: #{pfrnn_agent_forward.1} parent=109 // pred_fallthru
              _
            // Predicated region
            $region115: #{pfrnn_agent_forward.1} parent=109 // pred_check
              _
            $region116: #{pfrnn_agent_forward.1} parent=109 // pred_check_branch
              %644 = sbr.rel target = $region118
            $region117: #{pfrnn_agent_forward.1} parent=109 // pred_region
              loop: start=0, step=1, limit=1
              $region119: #{pfrnn_agent_forward.1} parent=117 // loop_pre_header
                _
              $region120: #{pfrnn_agent_forward.1} parent=117 // loop_header
                %s647 = sphi 0, %s651
                %p648 = scmp.ge.s32.totalorder %s647, 1
                %s652 = sphi %s638, %s638
                %s653 = sphi %s635, %s635
              $region121: #{pfrnn_agent_forward.1} parent=117 // loop_header_branch
                %650 = sbr.rel (%p648) target = $region125
              $region122: #{pfrnn_agent_forward.1} parent=117 // loop_body
                %v654 = vld [vmem:[%s652] sm:$0xff]
                %655 = vst [vmem:[%s653] sm:$0xff] %v654
                %v656 = vld [vmem:[%s652 + $0x8] sm:$0xff]
                %657 = vst [vmem:[%s653 + $0x8] sm:$0xff] %v656
                %v658 = vld [vmem:[%s652 + $0x20] sm:$0xff]
                %659 = vst [vmem:[%s653 + $0x10] sm:$0xff] %v658
                %v660 = vld [vmem:[%s652 + $0x28] sm:$0xff]
                %661 = vst [vmem:[%s653 + $0x18] sm:$0xff] %v660
                %v662 = vld [vmem:[%s652 + $0x40] sm:$0xff]
                %663 = vst [vmem:[%s653 + $0x20] sm:$0xff] %v662
                %v664 = vld [vmem:[%s652 + $0x48] sm:$0xff]
                %665 = vst [vmem:[%s653 + $0x28] sm:$0xff] %v664
                %v666 = vld [vmem:[%s652 + $0x60] sm:$0xff]
                %667 = vst [vmem:[%s653 + $0x30] sm:$0xff] %v666
                %v668 = vld [vmem:[%s652 + $0x68] sm:$0xff]
                %669 = vst [vmem:[%s653 + $0x38] sm:$0xff] %v668
                %v670 = vld [vmem:[%s652 + $0x80] sm:$0xff]
                %671 = vst [vmem:[%s653 + $0x40] sm:$0xff] %v670
                %v672 = vld [vmem:[%s652 + $0x88] sm:$0xff]
                %673 = vst [vmem:[%s653 + $0x48] sm:$0xff] %v672
                %v674 = vld [vmem:[%s652 + $0xa0] sm:$0xff]
                %675 = vst [vmem:[%s653 + $0x50] sm:$0xff] %v674
                %v676 = vld [vmem:[%s652 + $0xa8] sm:$0xff]
                %677 = vst [vmem:[%s653 + $0x58] sm:$0xff] %v676
                %v678 = vld [vmem:[%s652 + $0xc0] sm:$0xff]
                %679 = vst [vmem:[%s653 + $0x60] sm:$0xff] %v678
                %v680 = vld [vmem:[%s652 + $0xc8] sm:$0xff]
                %681 = vst [vmem:[%s653 + $0x68] sm:$0xff] %v680
                %v682 = vld [vmem:[%s652 + $0xe0] sm:$0xff]
                %683 = vst [vmem:[%s653 + $0x70] sm:$0xff] %v682
                %v684 = vld [vmem:[%s652 + $0xe8] sm:$0xff]
                %685 = vst [vmem:[%s653 + $0x78] sm:$0xff] %v684
              $region123: #{pfrnn_agent_forward.1} parent=117 // loop_footer
                %s651 = sadd.s32 1, %s647
              $region124: #{pfrnn_agent_forward.1} parent=117 // loop_footer_branch
                %646 = sbr.rel target = $region120
              $region125: #{pfrnn_agent_forward.1} parent=117 // loop_exit
                _
            $region118: #{pfrnn_agent_forward.1} parent=109 // pred_fallthru
              _
          $region110: #{pfrnn_agent_forward.1} parent=105 // pred_fallthru
            _
          %730 = vnop
        $region106: #{pfrnn_agent_forward.1} parent=59 // pred_fallthru
          _
        // Predicated region
        $region141: #{pfrnn_agent_forward.1} parent=59 // pred_check
          %p731 = pneg %p125
        $region142: #{pfrnn_agent_forward.1} parent=59 // pred_check_branch
          %733 = sbr.rel (%p731) target = $region144
        $region143: #{pfrnn_agent_forward.1} parent=59 // pred_region
          %s734 = sand.u32 %s115, 1
          %s735 = sand.u32 %s115, 1
          %s736 = smul.addr %s735, 128
          %s737 = scalar_lea.vmem [#allocation5], %s736
          %s738 = smul.u32 2, %s27
          %s739 = smul.addr %s738, 8
          %s740 = scalar_lea.vmem %s3, %s739
          // Predicated region
          $region145: #{pfrnn_agent_forward.1} parent=143 // pred_check
            _
          $region146: #{pfrnn_agent_forward.1} parent=143 // pred_check_branch
            %742 = sbr.rel (0) target = $region148
          $region147: #{pfrnn_agent_forward.1} parent=143 // pred_region
            // Predicated region
            $region149: #{pfrnn_agent_forward.1} parent=147 // pred_check
              _
            $region150: #{pfrnn_agent_forward.1} parent=147 // pred_check_branch
              %744 = sbr.rel (0) target = $region152
            $region151: #{pfrnn_agent_forward.1} parent=147 // pred_region
              // Predicated region
              $region164: #{pfrnn_agent_forward.1} parent=151 // pred_check
                _
              $region165: #{pfrnn_agent_forward.1} parent=151 // pred_check_branch
                %789 = sbr.rel (0) target = $region167
              $region166: #{pfrnn_agent_forward.1} parent=151 // pred_region
                loop: start=0, step=1, limit=1
                $region168: #{pfrnn_agent_forward.1} parent=166 // loop_pre_header
                  _
                $region169: #{pfrnn_agent_forward.1} parent=166 // loop_header
                  %s791 = sphi 0, %s795
                  %p792 = scmp.ge.s32.totalorder %s791, 1
                  %s796 = sphi %s740, %s740
                  %s797 = sphi %s737, %s737
                $region170: #{pfrnn_agent_forward.1} parent=166 // loop_header_branch
                  %794 = sbr.rel (%p792) target = $region174
                $region171: #{pfrnn_agent_forward.1} parent=166 // loop_body
                  %v798 = vld [vmem:[%s796] sm:$0xff]
                  %799 = vst [vmem:[%s797] sm:$0xff] %v798
                  %v800 = vld [vmem:[%s796 + $0x8] sm:$0xff]
                  %801 = vst [vmem:[%s797 + $0x8] sm:$0xff] %v800
                  %v802 = vld [vmem:[%s796 + $0x20] sm:$0xff]
                  %803 = vst [vmem:[%s797 + $0x10] sm:$0xff] %v802
                  %v804 = vld [vmem:[%s796 + $0x28] sm:$0xff]
                  %805 = vst [vmem:[%s797 + $0x18] sm:$0xff] %v804
                  %v806 = vld [vmem:[%s796 + $0x40] sm:$0xff]
                  %807 = vst [vmem:[%s797 + $0x20] sm:$0xff] %v806
                  %v808 = vld [vmem:[%s796 + $0x48] sm:$0xff]
                  %809 = vst [vmem:[%s797 + $0x28] sm:$0xff] %v808
                  %v810 = vld [vmem:[%s796 + $0x60] sm:$0xff]
                  %811 = vst [vmem:[%s797 + $0x30] sm:$0xff] %v810
                  %v812 = vld [vmem:[%s796 + $0x68] sm:$0xff]
                  %813 = vst [vmem:[%s797 + $0x38] sm:$0xff] %v812
                  %v814 = vld [vmem:[%s796 + $0x80] sm:$0xff]
                  %815 = vst [vmem:[%s797 + $0x40] sm:$0xff] %v814
                  %v816 = vld [vmem:[%s796 + $0x88] sm:$0xff]
                  %817 = vst [vmem:[%s797 + $0x48] sm:$0xff] %v816
                  %v818 = vld [vmem:[%s796 + $0xa0] sm:$0xff]
                  %819 = vst [vmem:[%s797 + $0x50] sm:$0xff] %v818
                  %v820 = vld [vmem:[%s796 + $0xa8] sm:$0xff]
                  %821 = vst [vmem:[%s797 + $0x58] sm:$0xff] %v820
                  %v822 = vld [vmem:[%s796 + $0xc0] sm:$0xff]
                  %823 = vst [vmem:[%s797 + $0x60] sm:$0xff] %v822
                  %v824 = vld [vmem:[%s796 + $0xc8] sm:$0xff]
                  %825 = vst [vmem:[%s797 + $0x68] sm:$0xff] %v824
                  %v826 = vld [vmem:[%s796 + $0xe0] sm:$0xff]
                  %827 = vst [vmem:[%s797 + $0x70] sm:$0xff] %v826
                  %v828 = vld [vmem:[%s796 + $0xe8] sm:$0xff]
                  %829 = vst [vmem:[%s797 + $0x78] sm:$0xff] %v828
                $region172: #{pfrnn_agent_forward.1} parent=166 // loop_footer
                  %s795 = sadd.s32 1, %s791
                $region173: #{pfrnn_agent_forward.1} parent=166 // loop_footer_branch
                  %790 = sbr.rel target = $region169
                $region174: #{pfrnn_agent_forward.1} parent=166 // loop_exit
                  _
              $region167: #{pfrnn_agent_forward.1} parent=151 // pred_fallthru
                _
              // Predicated region
              $region175: #{pfrnn_agent_forward.1} parent=151 // pred_check
                _
              $region176: #{pfrnn_agent_forward.1} parent=151 // pred_check_branch
                %831 = sbr.rel target = $region178
              $region177: #{pfrnn_agent_forward.1} parent=151 // pred_region
                _
              $region178: #{pfrnn_agent_forward.1} parent=151 // pred_fallthru
                _
            $region152: #{pfrnn_agent_forward.1} parent=147 // pred_fallthru
              _
            // Predicated region
            $region153: #{pfrnn_agent_forward.1} parent=147 // pred_check
              _
            $region154: #{pfrnn_agent_forward.1} parent=147 // pred_check_branch
              %746 = sbr.rel target = $region156
            $region155: #{pfrnn_agent_forward.1} parent=147 // pred_region
              loop: start=0, step=1, limit=1
              $region157: #{pfrnn_agent_forward.1} parent=155 // loop_pre_header
                _
              $region158: #{pfrnn_agent_forward.1} parent=155 // loop_header
                %s749 = sphi 0, %s753
                %p750 = scmp.ge.s32.totalorder %s749, 1
                %s754 = sphi %s740, %s740
                %s755 = sphi %s737, %s737
              $region159: #{pfrnn_agent_forward.1} parent=155 // loop_header_branch
                %752 = sbr.rel (%p750) target = $region163
              $region160: #{pfrnn_agent_forward.1} parent=155 // loop_body
                %v756 = vld [vmem:[%s754] sm:$0xff]
                %757 = vst [vmem:[%s755] sm:$0xff] %v756
                %v758 = vld [vmem:[%s754 + $0x8] sm:$0xff]
                %759 = vst [vmem:[%s755 + $0x8] sm:$0xff] %v758
                %v760 = vld [vmem:[%s754 + $0x20] sm:$0xff]
                %761 = vst [vmem:[%s755 + $0x10] sm:$0xff] %v760
                %v762 = vld [vmem:[%s754 + $0x28] sm:$0xff]
                %763 = vst [vmem:[%s755 + $0x18] sm:$0xff] %v762
                %v764 = vld [vmem:[%s754 + $0x40] sm:$0xff]
                %765 = vst [vmem:[%s755 + $0x20] sm:$0xff] %v764
                %v766 = vld [vmem:[%s754 + $0x48] sm:$0xff]
                %767 = vst [vmem:[%s755 + $0x28] sm:$0xff] %v766
                %v768 = vld [vmem:[%s754 + $0x60] sm:$0xff]
                %769 = vst [vmem:[%s755 + $0x30] sm:$0xff] %v768
                %v770 = vld [vmem:[%s754 + $0x68] sm:$0xff]
                %771 = vst [vmem:[%s755 + $0x38] sm:$0xff] %v770
                %v772 = vld [vmem:[%s754 + $0x80] sm:$0xff]
                %773 = vst [vmem:[%s755 + $0x40] sm:$0xff] %v772
                %v774 = vld [vmem:[%s754 + $0x88] sm:$0xff]
                %775 = vst [vmem:[%s755 + $0x48] sm:$0xff] %v774
                %v776 = vld [vmem:[%s754 + $0xa0] sm:$0xff]
                %777 = vst [vmem:[%s755 + $0x50] sm:$0xff] %v776
                %v778 = vld [vmem:[%s754 + $0xa8] sm:$0xff]
                %779 = vst [vmem:[%s755 + $0x58] sm:$0xff] %v778
                %v780 = vld [vmem:[%s754 + $0xc0] sm:$0xff]
                %781 = vst [vmem:[%s755 + $0x60] sm:$0xff] %v780
                %v782 = vld [vmem:[%s754 + $0xc8] sm:$0xff]
                %783 = vst [vmem:[%s755 + $0x68] sm:$0xff] %v782
                %v784 = vld [vmem:[%s754 + $0xe0] sm:$0xff]
                %785 = vst [vmem:[%s755 + $0x70] sm:$0xff] %v784
                %v786 = vld [vmem:[%s754 + $0xe8] sm:$0xff]
                %787 = vst [vmem:[%s755 + $0x78] sm:$0xff] %v786
              $region161: #{pfrnn_agent_forward.1} parent=155 // loop_footer
                %s753 = sadd.s32 1, %s749
              $region162: #{pfrnn_agent_forward.1} parent=155 // loop_footer_branch
                %748 = sbr.rel target = $region158
              $region163: #{pfrnn_agent_forward.1} parent=155 // loop_exit
                _
            $region156: #{pfrnn_agent_forward.1} parent=147 // pred_fallthru
              _
          $region148: #{pfrnn_agent_forward.1} parent=143 // pred_fallthru
            _
          %832 = vnop
        $region144: #{pfrnn_agent_forward.1} parent=59 // pred_fallthru
          _
        // Predicated region
        $region179: #{pfrnn_agent_forward.1} parent=59 // pred_check
          %p833 = pneg %p151
        $region180: #{pfrnn_agent_forward.1} parent=59 // pred_check_branch
          %835 = sbr.rel (%p833) target = $region182
        $region181: #{pfrnn_agent_forward.1} parent=59 // pred_region
          %s836 = sand.u32 %s141, 1
          %s837 = sand.u32 %s141, 1
          %s838 = smul.addr %s837, 128
          %s839 = scalar_lea.vmem [#allocation6], %s838
          %s840 = smul.u32 2, %s27
          %s841 = smul.addr %s840, 8
          %s842 = scalar_lea.vmem %s4, %s841
          // Predicated region
          $region183: #{pfrnn_agent_forward.1} parent=181 // pred_check
            _
          $region184: #{pfrnn_agent_forward.1} parent=181 // pred_check_branch
            %844 = sbr.rel (0) target = $region186
          $region185: #{pfrnn_agent_forward.1} parent=181 // pred_region
            // Predicated region
            $region187: #{pfrnn_agent_forward.1} parent=185 // pred_check
              _
            $region188: #{pfrnn_agent_forward.1} parent=185 // pred_check_branch
              %846 = sbr.rel (0) target = $region190
            $region189: #{pfrnn_agent_forward.1} parent=185 // pred_region
              // Predicated region
              $region202: #{pfrnn_agent_forward.1} parent=189 // pred_check
                _
              $region203: #{pfrnn_agent_forward.1} parent=189 // pred_check_branch
                %891 = sbr.rel (0) target = $region205
              $region204: #{pfrnn_agent_forward.1} parent=189 // pred_region
                loop: start=0, step=1, limit=1
                $region206: #{pfrnn_agent_forward.1} parent=204 // loop_pre_header
                  _
                $region207: #{pfrnn_agent_forward.1} parent=204 // loop_header
                  %s893 = sphi 0, %s897
                  %p894 = scmp.ge.s32.totalorder %s893, 1
                  %s898 = sphi %s842, %s842
                  %s899 = sphi %s839, %s839
                $region208: #{pfrnn_agent_forward.1} parent=204 // loop_header_branch
                  %896 = sbr.rel (%p894) target = $region212
                $region209: #{pfrnn_agent_forward.1} parent=204 // loop_body
                  %v900 = vld [vmem:[%s898] sm:$0xff]
                  %901 = vst [vmem:[%s899] sm:$0xff] %v900
                  %v902 = vld [vmem:[%s898 + $0x8] sm:$0xff]
                  %903 = vst [vmem:[%s899 + $0x8] sm:$0xff] %v902
                  %v904 = vld [vmem:[%s898 + $0x20] sm:$0xff]
                  %905 = vst [vmem:[%s899 + $0x10] sm:$0xff] %v904
                  %v906 = vld [vmem:[%s898 + $0x28] sm:$0xff]
                  %907 = vst [vmem:[%s899 + $0x18] sm:$0xff] %v906
                  %v908 = vld [vmem:[%s898 + $0x40] sm:$0xff]
                  %909 = vst [vmem:[%s899 + $0x20] sm:$0xff] %v908
                  %v910 = vld [vmem:[%s898 + $0x48] sm:$0xff]
                  %911 = vst [vmem:[%s899 + $0x28] sm:$0xff] %v910
                  %v912 = vld [vmem:[%s898 + $0x60] sm:$0xff]
                  %913 = vst [vmem:[%s899 + $0x30] sm:$0xff] %v912
                  %v914 = vld [vmem:[%s898 + $0x68] sm:$0xff]
                  %915 = vst [vmem:[%s899 + $0x38] sm:$0xff] %v914
                  %v916 = vld [vmem:[%s898 + $0x80] sm:$0xff]
                  %917 = vst [vmem:[%s899 + $0x40] sm:$0xff] %v916
                  %v918 = vld [vmem:[%s898 + $0x88] sm:$0xff]
                  %919 = vst [vmem:[%s899 + $0x48] sm:$0xff] %v918
                  %v920 = vld [vmem:[%s898 + $0xa0] sm:$0xff]
                  %921 = vst [vmem:[%s899 + $0x50] sm:$0xff] %v920
                  %v922 = vld [vmem:[%s898 + $0xa8] sm:$0xff]
                  %923 = vst [vmem:[%s899 + $0x58] sm:$0xff] %v922
                  %v924 = vld [vmem:[%s898 + $0xc0] sm:$0xff]
                  %925 = vst [vmem:[%s899 + $0x60] sm:$0xff] %v924
                  %v926 = vld [vmem:[%s898 + $0xc8] sm:$0xff]
                  %927 = vst [vmem:[%s899 + $0x68] sm:$0xff] %v926
                  %v928 = vld [vmem:[%s898 + $0xe0] sm:$0xff]
                  %929 = vst [vmem:[%s899 + $0x70] sm:$0xff] %v928
                  %v930 = vld [vmem:[%s898 + $0xe8] sm:$0xff]
                  %931 = vst [vmem:[%s899 + $0x78] sm:$0xff] %v930
                $region210: #{pfrnn_agent_forward.1} parent=204 // loop_footer
                  %s897 = sadd.s32 1, %s893
                $region211: #{pfrnn_agent_forward.1} parent=204 // loop_footer_branch
                  %892 = sbr.rel target = $region207
                $region212: #{pfrnn_agent_forward.1} parent=204 // loop_exit
                  _
              $region205: #{pfrnn_agent_forward.1} parent=189 // pred_fallthru
                _
              // Predicated region
              $region213: #{pfrnn_agent_forward.1} parent=189 // pred_check
                _
              $region214: #{pfrnn_agent_forward.1} parent=189 // pred_check_branch
                %933 = sbr.rel target = $region216
              $region215: #{pfrnn_agent_forward.1} parent=189 // pred_region
                _
              $region216: #{pfrnn_agent_forward.1} parent=189 // pred_fallthru
                _
            $region190: #{pfrnn_agent_forward.1} parent=185 // pred_fallthru
              _
            // Predicated region
            $region191: #{pfrnn_agent_forward.1} parent=185 // pred_check
              _
            $region192: #{pfrnn_agent_forward.1} parent=185 // pred_check_branch
              %848 = sbr.rel target = $region194
            $region193: #{pfrnn_agent_forward.1} parent=185 // pred_region
              loop: start=0, step=1, limit=1
              $region195: #{pfrnn_agent_forward.1} parent=193 // loop_pre_header
                _
              $region196: #{pfrnn_agent_forward.1} parent=193 // loop_header
                %s851 = sphi 0, %s855
                %p852 = scmp.ge.s32.totalorder %s851, 1
                %s856 = sphi %s842, %s842
                %s857 = sphi %s839, %s839
              $region197: #{pfrnn_agent_forward.1} parent=193 // loop_header_branch
                %854 = sbr.rel (%p852) target = $region201
              $region198: #{pfrnn_agent_forward.1} parent=193 // loop_body
                %v858 = vld [vmem:[%s856] sm:$0xff]
                %859 = vst [vmem:[%s857] sm:$0xff] %v858
                %v860 = vld [vmem:[%s856 + $0x8] sm:$0xff]
                %861 = vst [vmem:[%s857 + $0x8] sm:$0xff] %v860
                %v862 = vld [vmem:[%s856 + $0x20] sm:$0xff]
                %863 = vst [vmem:[%s857 + $0x10] sm:$0xff] %v862
                %v864 = vld [vmem:[%s856 + $0x28] sm:$0xff]
                %865 = vst [vmem:[%s857 + $0x18] sm:$0xff] %v864
                %v866 = vld [vmem:[%s856 + $0x40] sm:$0xff]
                %867 = vst [vmem:[%s857 + $0x20] sm:$0xff] %v866
                %v868 = vld [vmem:[%s856 + $0x48] sm:$0xff]
                %869 = vst [vmem:[%s857 + $0x28] sm:$0xff] %v868
                %v870 = vld [vmem:[%s856 + $0x60] sm:$0xff]
                %871 = vst [vmem:[%s857 + $0x30] sm:$0xff] %v870
                %v872 = vld [vmem:[%s856 + $0x68] sm:$0xff]
                %873 = vst [vmem:[%s857 + $0x38] sm:$0xff] %v872
                %v874 = vld [vmem:[%s856 + $0x80] sm:$0xff]
                %875 = vst [vmem:[%s857 + $0x40] sm:$0xff] %v874
                %v876 = vld [vmem:[%s856 + $0x88] sm:$0xff]
                %877 = vst [vmem:[%s857 + $0x48] sm:$0xff] %v876
                %v878 = vld [vmem:[%s856 + $0xa0] sm:$0xff]
                %879 = vst [vmem:[%s857 + $0x50] sm:$0xff] %v878
                %v880 = vld [vmem:[%s856 + $0xa8] sm:$0xff]
                %881 = vst [vmem:[%s857 + $0x58] sm:$0xff] %v880
                %v882 = vld [vmem:[%s856 + $0xc0] sm:$0xff]
                %883 = vst [vmem:[%s857 + $0x60] sm:$0xff] %v882
                %v884 = vld [vmem:[%s856 + $0xc8] sm:$0xff]
                %885 = vst [vmem:[%s857 + $0x68] sm:$0xff] %v884
                %v886 = vld [vmem:[%s856 + $0xe0] sm:$0xff]
                %887 = vst [vmem:[%s857 + $0x70] sm:$0xff] %v886
                %v888 = vld [vmem:[%s856 + $0xe8] sm:$0xff]
                %889 = vst [vmem:[%s857 + $0x78] sm:$0xff] %v888
              $region199: #{pfrnn_agent_forward.1} parent=193 // loop_footer
                %s855 = sadd.s32 1, %s851
              $region200: #{pfrnn_agent_forward.1} parent=193 // loop_footer_branch
                %850 = sbr.rel target = $region196
              $region201: #{pfrnn_agent_forward.1} parent=193 // loop_exit
                _
            $region194: #{pfrnn_agent_forward.1} parent=185 // pred_fallthru
              _
          $region186: #{pfrnn_agent_forward.1} parent=181 // pred_fallthru
            _
          %934 = vnop
        $region182: #{pfrnn_agent_forward.1} parent=59 // pred_fallthru
          _
      $region60: #{pfrnn_agent_forward.1} parent=5 // pred_fallthru
        _
      %p935 = scmp.le.s32.totalorder 1, %s27
      %p936 = scmp.lt.s32.totalorder %s27, 3
      %p937 = pnand %p935, %p936
      %p938 = pneg %p937
      // Predicated region
      $region217: #{pfrnn_agent_forward.1} parent=5 // pred_check
        _
      $region218: #{pfrnn_agent_forward.1} parent=5 // pred_check_branch
        %940 = sbr.rel (%p937) target = $region220
      $region219: #{pfrnn_agent_forward.1} parent=5 // pred_region
        %s941 = ssub.s32 %s27, 1
        %s942 = sand.u32 %s66, 1
        %s943 = sand.u32 %s66, 1
        %s944 = smul.addr %s943, 128
        %s945 = scalar_lea.vmem [#allocation3], %s944
        // Predicated region
        $region221: #{pfrnn_agent_forward.1} parent=219 // pred_check
          %p946 = pneg %p79
        $region222: #{pfrnn_agent_forward.1} parent=219 // pred_check_branch
          %948 = sbr.rel (%p946) target = $region224
        $region223: #{pfrnn_agent_forward.1} parent=219 // pred_region
          _
        $region224: #{pfrnn_agent_forward.1} parent=219 // pred_fallthru
          _
        %s949 = sand.u32 %s92, 1
        %s950 = sand.u32 %s92, 1
        %s951 = smul.addr %s950, 128
        %s952 = scalar_lea.vmem [#allocation4], %s951
        // Predicated region
        $region225: #{pfrnn_agent_forward.1} parent=219 // pred_check
          %p953 = pneg %p105
        $region226: #{pfrnn_agent_forward.1} parent=219 // pred_check_branch
          %955 = sbr.rel (%p953) target = $region228
        $region227: #{pfrnn_agent_forward.1} parent=219 // pred_region
          _
        $region228: #{pfrnn_agent_forward.1} parent=219 // pred_fallthru
          _
        %s956 = sand.u32 %s118, 1
        %s957 = sand.u32 %s118, 1
        %s958 = smul.addr %s957, 128
        %s959 = scalar_lea.vmem [#allocation5], %s958
        // Predicated region
        $region229: #{pfrnn_agent_forward.1} parent=219 // pred_check
          %p960 = pneg %p131
        $region230: #{pfrnn_agent_forward.1} parent=219 // pred_check_branch
          %962 = sbr.rel (%p960) target = $region232
        $region231: #{pfrnn_agent_forward.1} parent=219 // pred_region
          _
        $region232: #{pfrnn_agent_forward.1} parent=219 // pred_fallthru
          _
        %s963 = sand.u32 %s144, 1
        %s964 = sand.u32 %s144, 1
        %s965 = smul.addr %s964, 128
        %s966 = scalar_lea.vmem [#allocation6], %s965
        // Predicated region
        $region233: #{pfrnn_agent_forward.1} parent=219 // pred_check
          %p967 = pneg %p157
        $region234: #{pfrnn_agent_forward.1} parent=219 // pred_check_branch
          %969 = sbr.rel (%p967) target = $region236
        $region235: #{pfrnn_agent_forward.1} parent=219 // pred_region
          _
        $region236: #{pfrnn_agent_forward.1} parent=219 // pred_fallthru
          _
        %s970 = smul.u32 2, %s32
        %p971 = scmp.lt.s32.totalorder %s970, 3
        %s972 = scalar_select %p971, %s970, 3
        %s973 = smul.addr %s972, 8
        %s974 = scalar_lea.vmem %s0, %s973
        %p975 = pneg %p53
        %p976 = pneg %p50
        %s977 = sand.u32 %s66, 1
        %s978 = sand.u32 %s66, 1
        %s979 = smul.addr %s978, 128
        %s980 = scalar_lea.vmem [#allocation3], %s979
        %p981 = pneg %p79
        %p982 = pneg %p76
        %s983 = sand.u32 %s92, 1
        %s984 = sand.u32 %s92, 1
        %s985 = smul.addr %s984, 128
        %s986 = scalar_lea.vmem [#allocation4], %s985
        %p987 = pneg %p105
        %p988 = pneg %p102
        %s989 = sand.u32 %s118, 1
        %s990 = sand.u32 %s118, 1
        %s991 = smul.addr %s990, 128
        %s992 = scalar_lea.vmem [#allocation5], %s991
        %p993 = pneg %p131
        %p994 = pneg %p128
        %s995 = sand.u32 %s144, 1
        %s996 = sand.u32 %s144, 1
        %s997 = smul.addr %s996, 128
        %s998 = scalar_lea.vmem [#allocation6], %s997
        %p999 = pneg %p157
        %p1000 = pneg %p154
        %p1001 = pneg %p178
        %p1002 = pneg %p175
        %p1003 = pneg %p199
        %p1004 = pneg %p196
        %p1005 = pneg %p220
        %p1006 = pneg %p217
        %p1007 = pneg %p241
        %p1008 = pneg %p238
        %p1009 = pneg %p262
        %p1010 = pneg %p259
        %p1011 = pneg %p283
        %p1012 = pneg %p280
        %p1013 = pneg %p304
        %p1014 = pneg %p301
        %p1015 = pneg %p325
        %p1016 = pneg %p322
        %p1017 = pneg %p346
        %p1018 = pneg %p343
        %p1019 = pneg %p367
        %p1020 = pneg %p364
        %p1021 = pneg %p388
        %p1022 = pneg %p385
        %p1023 = pneg %p414
        %p1024 = pneg %p411
        %s1025 = smul.u32 2, %s32
        %p1026 = scmp.lt.s32.totalorder %s1025, 3
        %s1027 = scalar_select %p1026, %s1025, 3
        %s1028 = smul.addr %s1027, 8
        %s1029 = scalar_lea.vmem %s16, %s1028
        %p1030 = pneg %p440
        %p1031 = pneg %p437
        %s1032 = sand.u32 %s427, 1
        %s1033 = sand.u32 %s427, 1
        %s1034 = smul.addr %s1033, 128
        %s1035 = scalar_lea.vmem [#allocation7], %s1034
        %p1036 = pneg %p466
        %p1037 = pneg %p463
        %s1038 = sand.u32 %s453, 1
        %s1039 = sand.u32 %s453, 1
        %s1040 = smul.addr %s1039, 128
        %s1041 = scalar_lea.vmem [#allocation8], %s1040
        %s1042 = smul.u32 2, %s32
        %p1043 = scmp.lt.s32.totalorder %s1042, 3
        %s1044 = scalar_select %p1043, %s1042, 3
        %s1045 = smul.addr %s1044, 8
        %s1046 = scalar_lea.vmem %s0, %s1045
        %s1047 = smul.u32 2, %s32
        %s1048 = smul.u32 2, %s32
        %s1049 = smul.u32 2, %s32
        %s1050 = smul.u32 2, %s32
        %s1051 = smul.u32 2, %s32
        %s1052 = smul.u32 2, %s32
        %p1053 = scmp.lt.s32.totalorder %s1052, 3
        %s1054 = scalar_select %p1053, %s1052, 3
        %s1055 = smul.addr %s1054, 8
        %s1056 = scalar_lea.vmem %s16, %s1055
        %s1057 = smul.u32 2, %s32
        %s1058 = smul.u32 2, %s32
        %s1059 = smul.u32 2, %s32
        %v1061 = vld [vmem:[%s1046] sm:$0xff]
        %v1062 = vld [vmem:[%s1046 + $0x8] sm:$0xff]
        %v1063 = vpack.c.bf16 %v1062, %v1061
        %v1064 = vld [vmem:[%s5] sm:$0xf]
        %v1065 = vld [vmem:[%s5 + $0x4] sm:$0xf]
        %v1066 = vld [vmem:[%s5 + $0x8] sm:$0xf]
        %v1067 = vld [vmem:[%s5 + $0xc] sm:$0xf]
        %v1068 = vld [vmem:[%s6] sm:$0x1]
        %v1070 = vlaneseq
        %v1071 = vshrl.u32 %v1070, 7
        %v1072 = vsub.s32 0, %v1071
        %v1073 = vrot.slane %v1068, %v1072
        %v1079 = vunpack.c.l.b16 %v1064
        %v1080 = vunpack.c.l.b16 %v1065
        %v1081 = vunpack.c.l.b16 %v1066
        %v1082 = vunpack.c.l.b16 %v1067
        %v1083 = vpack.c.b16 %v1080, %v1079
        %v1084 = vpack.c.b16 %v1082, %v1081
        %vm1087 = vcmask 261120
        %v1089 = vsel %vm1087, %v1063, 0
        %1091 = vmatprep.subr.bf16.mxu0 0
        %1092 = vmatpush1.bf16.msra.mxu0 %v1083
        %1093 = vmatprep.subr.bf16.mxu0 0
        %1094 = vmatpush1.bf16.msra.mxu0 %v1084
        %1095 = vmatprep.subr.bf16.mxu0 0
        %1096 = vmatpush1.bf16.msra.mxu0 0
        %1097 = vmatprep.subr.bf16.mxu0 0
        %1098 = vmatpush1.bf16.msra.mxu0 0
        %1099 = vmatprep.subr.bf16.mxu0 0
        %1100 = vmatpush1.bf16.msra.mxu0 0
        %1101 = vmatprep.subr.bf16.mxu0 0
        %1102 = vmatpush1.bf16.msra.mxu0 0
        %1103 = vmatprep.subr.bf16.mxu0 0
        %1104 = vmatpush1.bf16.msra.mxu0 0
        %1105 = vmatprep.subr.bf16.mxu0 0
        %1106 = vmatpush1.bf16.msra.mxu0 0
        %1107 = vmatprep.subr.bf16.mxu0 0
        %1108 = vmatpush1.bf16.msra.mxu0 0
        %1109 = vmatprep.subr.bf16.mxu0 0
        %1110 = vmatpush1.bf16.msra.mxu0 0
        %1111 = vmatprep.subr.bf16.mxu0 0
        %1112 = vmatpush1.bf16.msra.mxu0 0
        %1113 = vmatprep.subr.bf16.mxu0 0
        %1114 = vmatpush1.bf16.msra.mxu0 0
        %1115 = vmatprep.subr.bf16.mxu0 0
        %1116 = vmatpush1.bf16.msra.mxu0 0
        %1117 = vmatprep.subr.bf16.mxu0 0
        %1118 = vmatpush1.bf16.msra.mxu0 0
        %1119 = vmatprep.subr.bf16.mxu0 0
        %1120 = vmatpush1.bf16.msra.mxu0 0
        %1121 = vmatprep.subr.bf16.mxu0 0
        %1122 = vmatpush1.bf16.msra.mxu0 0
        %1123 = vmatprep.mubr.bf16.mxu0 0
        %1124 = vmatmul.mubr.bf16.gmra.mrb[0].mxu0 %v1089
        %v1125 = vpop.f32.mrb[0].mxu0
        %v1126 = vadd.f32 %v1073, %v1125
        %v1127 = vpop.f32.mrb[0].mxu0
        %v1128 = vpop.f32.mrb[0].mxu0
        %v1129 = vadd.f32 %v1073, %v1128
        %v1130 = vpop.f32.mrb[0].mxu0
        %1131 = vdwg.mxu0
        %v1132 = vmax.f32 %v1126, 0.0
        %v1133 = vmax.f32 %v1129, 0.0
        %v1134 = vpack.c.bf16 %v1133, %v1132
        %v1135 = vld [vmem:[%s7] sm:$0xff]
        %v1136 = vld [vmem:[%s7 + $0x8] sm:$0xff]
        %v1137 = vld [vmem:[%s7 + $0x10] sm:$0xff]
        %v1138 = vld [vmem:[%s7 + $0x18] sm:$0xff]
        %v1139 = vld [vmem:[%s7 + $0x20] sm:$0xff]
        %v1140 = vld [vmem:[%s7 + $0x28] sm:$0xff]
        %v1141 = vld [vmem:[%s7 + $0x30] sm:$0xff]
        %v1142 = vld [vmem:[%s7 + $0x38] sm:$0xff]
        %v1143 = vld [vmem:[%s8] sm:$0x3]
        %v1145 = vlaneseq
        %v1146 = vshrl.u32 %v1145, 7
        %v1147 = vsub.s32 0, %v1146
        %v1148 = vrot.slane %v1143, %v1147
        %v1149 = vlaneseq
        %v1150 = vshrl.u32 %v1149, 7
        %v1151 = vsub.s32 1, %v1150
        %v1152 = vrot.slane %v1143, %v1151
        %v1163 = vunpack.c.l.b16 %v1135
        %v1164 = vunpack.c.h.b16 %v1135
        %v1165 = vunpack.c.l.b16 %v1136
        %v1166 = vunpack.c.h.b16 %v1136
        %v1167 = vunpack.c.l.b16 %v1137
        %v1168 = vunpack.c.h.b16 %v1137
        %v1169 = vunpack.c.l.b16 %v1138
        %v1170 = vunpack.c.h.b16 %v1138
        %v1171 = vunpack.c.l.b16 %v1139
        %v1172 = vunpack.c.h.b16 %v1139
        %v1173 = vunpack.c.l.b16 %v1140
        %v1174 = vunpack.c.h.b16 %v1140
        %v1175 = vunpack.c.l.b16 %v1141
        %v1176 = vunpack.c.h.b16 %v1141
        %v1177 = vunpack.c.l.b16 %v1142
        %v1178 = vunpack.c.h.b16 %v1142
        %v1179 = vpack.c.b16 %v1165, %v1163
        %v1180 = vpack.c.b16 %v1166, %v1164
        %v1181 = vpack.c.b16 %v1169, %v1167
        %v1182 = vpack.c.b16 %v1170, %v1168
        %v1183 = vpack.c.b16 %v1173, %v1171
        %v1184 = vpack.c.b16 %v1174, %v1172
        %v1185 = vpack.c.b16 %v1177, %v1175
        %v1186 = vpack.c.b16 %v1178, %v1176
        %vm1195 = vcmask 523264
        %v1197 = vsel %vm1195, %v1134, 0
        %1199 = vmatprep.subr.bf16.mxu0 %v1180
        %1200 = vmatpush1.bf16.msra.mxu0 %v1179
        %1201 = vmatprep.subr.bf16.mxu0 %v1182
        %1202 = vmatpush1.bf16.msra.mxu0 %v1181
        %1203 = vmatprep.subr.bf16.mxu0 %v1184
        %1204 = vmatpush1.bf16.msra.mxu0 %v1183
        %1205 = vmatprep.subr.bf16.mxu0 %v1186
        %1206 = vmatpush1.bf16.msra.mxu0 %v1185
        %1207 = vmatprep.subr.bf16.mxu0 0
        %1208 = vmatpush1.bf16.msra.mxu0 0
        %1209 = vmatprep.subr.bf16.mxu0 0
        %1210 = vmatpush1.bf16.msra.mxu0 0
        %1211 = vmatprep.subr.bf16.mxu0 0
        %1212 = vmatpush1.bf16.msra.mxu0 0
        %1213 = vmatprep.subr.bf16.mxu0 0
        %1214 = vmatpush1.bf16.msra.mxu0 0
        %1215 = vmatprep.subr.bf16.mxu0 0
        %1216 = vmatpush1.bf16.msra.mxu0 0
        %1217 = vmatprep.subr.bf16.mxu0 0
        %1218 = vmatpush1.bf16.msra.mxu0 0
        %1219 = vmatprep.subr.bf16.mxu0 0
        %1220 = vmatpush1.bf16.msra.mxu0 0
        %1221 = vmatprep.subr.bf16.mxu0 0
        %1222 = vmatpush1.bf16.msra.mxu0 0
        %1223 = vmatprep.subr.bf16.mxu0 0
        %1224 = vmatpush1.bf16.msra.mxu0 0
        %1225 = vmatprep.subr.bf16.mxu0 0
        %1226 = vmatpush1.bf16.msra.mxu0 0
        %1227 = vmatprep.subr.bf16.mxu0 0
        %1228 = vmatpush1.bf16.msra.mxu0 0
        %1229 = vmatprep.subr.bf16.mxu0 0
        %1230 = vmatpush1.bf16.msra.mxu0 0
        %1231 = vmatprep.mubr.bf16.mxu0 0
        %1232 = vmatmul.mubr.bf16.gmra.mrb[0].mxu0 %v1197
        %v1233 = vpop.f32.mrb[0].mxu0
        %v1234 = vadd.f32 %v1148, %v1233
        %v1235 = vpop.f32.mrb[0].mxu0
        %v1236 = vadd.f32 %v1152, %v1235
        %v1237 = vpop.f32.mrb[0].mxu0
        %v1238 = vadd.f32 %v1148, %v1237
        %v1239 = vpop.f32.mrb[0].mxu0
        %v1240 = vadd.f32 %v1152, %v1239
        %1241 = vdwg.mxu0
        %v1242 = vld [vmem:[%s9] sm:$0x1]
        %v1244 = vlaneseq
        %v1245 = vshrl.u32 %v1244, 7
        %v1246 = vsub.s32 0, %v1245
        %v1247 = vrot.slane %v1242, %v1246
        %v1249 = vmul.f32 %v1132, %v1247
        %v1250 = vmul.f32 %v1133, %v1247
        %v1251 = vsel %vm1195, %v1249, 0.0
        %1252 = vadd.xlane.f32.xlu0 %v1251
        %v1253 = vpop.xlane.xlu0 %1252
        %v1254 = vsel %vm1195, %v1250, 0.0
        %1255 = vadd.xlane.f32.xlu0 %v1254
        %v1256 = vpop.xlane.xlu0 %1255
        %v1257 = vld [vmem:[#allocation2] sm:$0x1]
        %v1259 = vlaneseq
        %v1260 = vshrl.u32 %v1259, 7
        %v1261 = vsub.s32 0, %v1260
        %v1262 = vrot.slane %v1257, %v1261
        %v1264 = vadd.f32 %v1253, %v1262
        %v1265 = vadd.f32 %v1256, %v1262
        %v1266 = vld [vmem:[%s945] sm:$0xff]
        %v1267 = vld [vmem:[%s945 + $0x8] sm:$0xff]
        %v1268 = vld [vmem:[%s945 + $0x10] sm:$0xff]
        %v1269 = vld [vmem:[%s945 + $0x18] sm:$0xff]
        %v1270 = vld [vmem:[%s945 + $0x20] sm:$0xff]
        %v1271 = vld [vmem:[%s945 + $0x28] sm:$0xff]
        %v1272 = vld [vmem:[%s945 + $0x30] sm:$0xff]
        %v1273 = vld [vmem:[%s945 + $0x38] sm:$0xff]
        %v1274 = vld [vmem:[%s945 + $0x40] sm:$0xff]
        %v1275 = vld [vmem:[%s945 + $0x48] sm:$0xff]
        %v1276 = vld [vmem:[%s945 + $0x50] sm:$0xff]
        %v1277 = vld [vmem:[%s945 + $0x58] sm:$0xff]
        %v1278 = vld [vmem:[%s945 + $0x60] sm:$0xff]
        %v1279 = vld [vmem:[%s945 + $0x68] sm:$0xff]
        %v1280 = vld [vmem:[%s945 + $0x70] sm:$0xff]
        %v1281 = vld [vmem:[%s945 + $0x78] sm:$0xff]
        %v1282 = vpack.c.bf16 %v1267, %v1266
        %v1283 = vpack.c.bf16 %v1269, %v1268
        %v1284 = vpack.c.bf16 %v1271, %v1270
        %v1285 = vpack.c.bf16 %v1273, %v1272
        %v1286 = vpack.c.bf16 %v1275, %v1274
        %v1287 = vpack.c.bf16 %v1277, %v1276
        %v1288 = vpack.c.bf16 %v1279, %v1278
        %v1289 = vpack.c.bf16 %v1281, %v1280
        %v1290 = vld [vmem:[%s11] sm:$0xf]
        %v1291 = vld [vmem:[%s11 + $0x4] sm:$0xf]
        %v1292 = vld [vmem:[%s11 + $0x8] sm:$0xf]
        %v1293 = vld [vmem:[%s11 + $0xc] sm:$0xf]
        %v1294 = vld [vmem:[%s11 + $0x10] sm:$0xf]
        %v1295 = vld [vmem:[%s11 + $0x14] sm:$0xf]
        %v1296 = vld [vmem:[%s11 + $0x18] sm:$0xf]
        %v1297 = vld [vmem:[%s11 + $0x1c] sm:$0xf]
        %v1306 = vunpack.c.l.b16 %v1290
        %v1307 = vunpack.c.l.b16 %v1291
        %v1308 = vunpack.c.l.b16 %v1292
        %v1309 = vunpack.c.l.b16 %v1293
        %v1310 = vunpack.c.l.b16 %v1294
        %v1311 = vunpack.c.l.b16 %v1295
        %v1312 = vunpack.c.l.b16 %v1296
        %v1313 = vunpack.c.l.b16 %v1297
        %v1314 = vpack.c.b16 %v1307, %v1306
        %v1315 = vpack.c.b16 %v1309, %v1308
        %v1316 = vpack.c.b16 %v1311, %v1310
        %v1317 = vpack.c.b16 %v1313, %v1312
        %v1323 = vsel %vm1195, %v1282, 0
        %v1326 = vsel %vm1195, %v1283, 0
        %v1329 = vsel %vm1195, %v1284, 0
        %v1332 = vsel %vm1195, %v1285, 0
        %v1335 = vsel %vm1195, %v1286, 0
        %v1338 = vsel %vm1195, %v1287, 0
        %v1341 = vsel %vm1195, %v1288, 0
        %v1344 = vsel %vm1195, %v1289, 0
        %1346 = vmatprep.subr.bf16.mxu0 0
        %1347 = vmatpush1.bf16.msra.mxu0 %v1314
        %1348 = vmatprep.subr.bf16.mxu0 0
        %1349 = vmatpush1.bf16.msra.mxu0 %v1315
        %1350 = vmatprep.subr.bf16.mxu0 0
        %1351 = vmatpush1.bf16.msra.mxu0 %v1316
        %1352 = vmatprep.subr.bf16.mxu0 0
        %1353 = vmatpush1.bf16.msra.mxu0 %v1317
        %1354 = vmatprep.subr.bf16.mxu0 0
        %1355 = vmatpush1.bf16.msra.mxu0 0
        %1356 = vmatprep.subr.bf16.mxu0 0
        %1357 = vmatpush1.bf16.msra.mxu0 0
        %1358 = vmatprep.subr.bf16.mxu0 0
        %1359 = vmatpush1.bf16.msra.mxu0 0
        %1360 = vmatprep.subr.bf16.mxu0 0
        %1361 = vmatpush1.bf16.msra.mxu0 0
        %1362 = vmatprep.subr.bf16.mxu0 0
        %1363 = vmatpush1.bf16.msra.mxu0 0
        %1364 = vmatprep.subr.bf16.mxu0 0
        %1365 = vmatpush1.bf16.msra.mxu0 0
        %1366 = vmatprep.subr.bf16.mxu0 0
        %1367 = vmatpush1.bf16.msra.mxu0 0
        %1368 = vmatprep.subr.bf16.mxu0 0
        %1369 = vmatpush1.bf16.msra.mxu0 0
        %1370 = vmatprep.subr.bf16.mxu0 0
        %1371 = vmatpush1.bf16.msra.mxu0 0
        %1372 = vmatprep.subr.bf16.mxu0 0
        %1373 = vmatpush1.bf16.msra.mxu0 0
        %1374 = vmatprep.subr.bf16.mxu0 0
        %1375 = vmatpush1.bf16.msra.mxu0 0
        %1376 = vmatprep.subr.bf16.mxu0 0
        %1377 = vmatpush1.bf16.msra.mxu0 0
        %1378 = vmatprep.mubr.bf16.mxu0 0
        %1379 = vmatmul.mubr.bf16.gmra.mrb[0].mxu0 %v1323
        %v1380 = vpop.f32.mrb[0].mxu0
        %v1381 = vadd.f32 0.0, %v1380
        %v1382 = vpop.f32.mrb[0].mxu0
        %v1383 = vpop.f32.mrb[0].mxu0
        %v1384 = vadd.f32 0.0, %v1383
        %v1385 = vpop.f32.mrb[0].mxu0
        %1386 = vmatprep.mubr.bf16.mxu0 0
        %1387 = vmatmul.mubr.bf16.gmra.mrb[0].mxu0 %v1326
        %v1388 = vpop.f32.mrb[0].mxu0
        %v1389 = vadd.f32 0.0, %v1388
        %v1390 = vpop.f32.mrb[0].mxu0
        %v1391 = vpop.f32.mrb[0].mxu0
        %v1392 = vadd.f32 0.0, %v1391
        %v1393 = vpop.f32.mrb[0].mxu0
        %1394 = vmatprep.mubr.bf16.mxu0 0
        %1395 = vmatmul.mubr.bf16.gmra.mrb[0].mxu0 %v1329
        %v1396 = vpop.f32.mrb[0].mxu0
        %v1397 = vadd.f32 0.0, %v1396
        %v1398 = vpop.f32.mrb[0].mxu0
        %v1399 = vpop.f32.mrb[0].mxu0
        %v1400 = vadd.f32 0.0, %v1399
        %v1401 = vpop.f32.mrb[0].mxu0
        %1402 = vmatprep.mubr.bf16.mxu0 0
        %1403 = vmatmul.mubr.bf16.gmra.mrb[0].mxu0 %v1332
        %v1404 = vpop.f32.mrb[0].mxu0
        %v1405 = vadd.f32 0.0, %v1404
        %v1406 = vpop.f32.mrb[0].mxu0
        %v1407 = vpop.f32.mrb[0].mxu0
        %v1408 = vadd.f32 0.0, %v1407
        %v1409 = vpop.f32.mrb[0].mxu0
        %1410 = vmatprep.mubr.bf16.mxu0 0
        %1411 = vmatmul.mubr.bf16.gmra.mrb[0].mxu0 %v1335
        %v1412 = vpop.f32.mrb[0].mxu0
        %v1413 = vadd.f32 0.0, %v1412
        %v1414 = vpop.f32.mrb[0].mxu0
        %v1415 = vpop.f32.mrb[0].mxu0
        %v1416 = vadd.f32 0.0, %v1415
        %v1417 = vpop.f32.mrb[0].mxu0
        %1418 = vmatprep.mubr.bf16.mxu0 0
        %1419 = vmatmul.mubr.bf16.gmra.mrb[0].mxu0 %v1338
        %v1420 = vpop.f32.mrb[0].mxu0
        %v1421 = vadd.f32 0.0, %v1420
        %v1422 = vpop.f32.mrb[0].mxu0
        %v1423 = vpop.f32.mrb[0].mxu0
        %v1424 = vadd.f32 0.0, %v1423
        %v1425 = vpop.f32.mrb[0].mxu0
        %1426 = vmatprep.mubr.bf16.mxu0 0
        %1427 = vmatmul.mubr.bf16.gmra.mrb[0].mxu0 %v1341
        %v1428 = vpop.f32.mrb[0].mxu0
        %v1429 = vadd.f32 0.0, %v1428
        %v1430 = vpop.f32.mrb[0].mxu0
        %v1431 = vpop.f32.mrb[0].mxu0
        %v1432 = vadd.f32 0.0, %v1431
        %v1433 = vpop.f32.mrb[0].mxu0
        %1434 = vmatprep.mubr.bf16.mxu0 0
        %1435 = vmatmul.mubr.bf16.gmra.mrb[0].mxu0 %v1344
        %v1436 = vpop.f32.mrb[0].mxu0
        %v1437 = vadd.f32 0.0, %v1436
        %v1438 = vpop.f32.mrb[0].mxu0
        %v1439 = vpop.f32.mrb[0].mxu0
        %v1440 = vadd.f32 0.0, %v1439
        %v1441 = vpop.f32.mrb[0].mxu0
        %1442 = vdwg.mxu0
        %v1443 = vadd.f32 %v1381, %v1234
        %v1444 = vadd.f32 %v1384, %v1238
        %v1445 = vadd.f32 %v1389, %v1234
        %v1446 = vadd.f32 %v1392, %v1238
        %v1447 = vadd.f32 %v1397, %v1234
        %v1448 = vadd.f32 %v1400, %v1238
        %v1449 = vadd.f32 %v1405, %v1234
        %v1450 = vadd.f32 %v1408, %v1238
        %v1451 = vadd.f32 %v1413, %v1234
        %v1452 = vadd.f32 %v1416, %v1238
        %v1453 = vadd.f32 %v1421, %v1234
        %v1454 = vadd.f32 %v1424, %v1238
        %v1455 = vadd.f32 %v1429, %v1234
        %v1456 = vadd.f32 %v1432, %v1238
        %v1457 = vadd.f32 %v1437, %v1234
        %v1458 = vadd.f32 %v1440, %v1238
        %v1459 = vxor.u32 %v1443, 2147483648
        %v1460 = vxor.u32 %v1444, 2147483648
        %v1461 = vxor.u32 %v1445, 2147483648
        %v1462 = vxor.u32 %v1446, 2147483648
        %v1463 = vxor.u32 %v1447, 2147483648
        %v1464 = vxor.u32 %v1448, 2147483648
        %v1465 = vxor.u32 %v1449, 2147483648
        %v1466 = vxor.u32 %v1450, 2147483648
        %v1467 = vxor.u32 %v1451, 2147483648
        %v1468 = vxor.u32 %v1452, 2147483648
        %v1469 = vxor.u32 %v1453, 2147483648
        %v1470 = vxor.u32 %v1454, 2147483648
        %v1471 = vxor.u32 %v1455, 2147483648
        %v1472 = vxor.u32 %v1456, 2147483648
        %v1473 = vxor.u32 %v1457, 2147483648
        %v1474 = vxor.u32 %v1458, 2147483648
        %v1475 = vmul.f32 %v1459, 1.442695
        %v1476 = vpow.pop %v1475
        %v1477 = vmul.f32 %v1460, 1.442695
        %v1478 = vpow.pop %v1477
        %v1479 = vmul.f32 %v1461, 1.442695
        %v1480 = vpow.pop %v1479
        %v1481 = vmul.f32 %v1462, 1.442695
        %v1482 = vpow.pop %v1481
        %v1483 = vmul.f32 %v1463, 1.442695
        %v1484 = vpow.pop %v1483
        %v1485 = vmul.f32 %v1464, 1.442695
        %v1486 = vpow.pop %v1485
        %v1487 = vmul.f32 %v1465, 1.442695
        %v1488 = vpow.pop %v1487
        %v1489 = vmul.f32 %v1466, 1.442695
        %v1490 = vpow.pop %v1489
        %v1491 = vmul.f32 %v1467, 1.442695
        %v1492 = vpow.pop %v1491
        %v1493 = vmul.f32 %v1468, 1.442695
        %v1494 = vpow.pop %v1493
        %v1495 = vmul.f32 %v1469, 1.442695
        %v1496 = vpow.pop %v1495
        %v1497 = vmul.f32 %v1470, 1.442695
        %v1498 = vpow.pop %v1497
        %v1499 = vmul.f32 %v1471, 1.442695
        %v1500 = vpow.pop %v1499
        %v1501 = vmul.f32 %v1472, 1.442695
        %v1502 = vpow.pop %v1501
        %v1503 = vmul.f32 %v1473, 1.442695
        %v1504 = vpow.pop %v1503
        %v1505 = vmul.f32 %v1474, 1.442695
        %v1506 = vpow.pop %v1505
        %v1507 = vadd.f32 %v1476, 1.0
        %v1508 = vadd.f32 %v1478, 1.0
        %v1509 = vadd.f32 %v1480, 1.0
        %v1510 = vadd.f32 %v1482, 1.0
        %v1511 = vadd.f32 %v1484, 1.0
        %v1512 = vadd.f32 %v1486, 1.0
        %v1513 = vadd.f32 %v1488, 1.0
        %v1514 = vadd.f32 %v1490, 1.0
        %v1515 = vadd.f32 %v1492, 1.0
        %v1516 = vadd.f32 %v1494, 1.0
        %v1517 = vadd.f32 %v1496, 1.0
        %v1518 = vadd.f32 %v1498, 1.0
        %v1519 = vadd.f32 %v1500, 1.0
        %v1520 = vadd.f32 %v1502, 1.0
        %v1521 = vadd.f32 %v1504, 1.0
        %v1522 = vadd.f32 %v1506, 1.0
        %v1523 = vrcp.pop %v1507
        %v1524 = vmul.f32 1.0, %v1523
        %v1525 = vrcp.pop %v1508
        %v1526 = vmul.f32 1.0, %v1525
        %v1527 = vrcp.pop %v1509
        %v1528 = vmul.f32 1.0, %v1527
        %v1529 = vrcp.pop %v1510
        %v1530 = vmul.f32 1.0, %v1529
        %v1531 = vrcp.pop %v1511
        %v1532 = vmul.f32 1.0, %v1531
        %v1533 = vrcp.pop %v1512
        %v1534 = vmul.f32 1.0, %v1533
        %v1535 = vrcp.pop %v1513
        %v1536 = vmul.f32 1.0, %v1535
        %v1537 = vrcp.pop %v1514
        %v1538 = vmul.f32 1.0, %v1537
        %v1539 = vrcp.pop %v1515
        %v1540 = vmul.f32 1.0, %v1539
        %v1541 = vrcp.pop %v1516
        %v1542 = vmul.f32 1.0, %v1541
        %v1543 = vrcp.pop %v1517
        %v1544 = vmul.f32 1.0, %v1543
        %v1545 = vrcp.pop %v1518
        %v1546 = vmul.f32 1.0, %v1545
        %v1547 = vrcp.pop %v1519
        %v1548 = vmul.f32 1.0, %v1547
        %v1549 = vrcp.pop %v1520
        %v1550 = vmul.f32 1.0, %v1549
        %v1551 = vrcp.pop %v1521
        %v1552 = vmul.f32 1.0, %v1551
        %v1553 = vrcp.pop %v1522
        %v1554 = vmul.f32 1.0, %v1553
        %1571 = vrot.lane.b32.xlu0 %v1266, 64
        %v1572 = vpop.permute.xlu0 %1571
        %1573 = vrot.lane.b32.xlu0 %v1267, 64
        %v1574 = vpop.permute.xlu0 %1573
        %1575 = vrot.lane.b32.xlu0 %v1268, 64
        %v1576 = vpop.permute.xlu0 %1575
        %1577 = vrot.lane.b32.xlu0 %v1269, 64
        %v1578 = vpop.permute.xlu0 %1577
        %1579 = vrot.lane.b32.xlu0 %v1270, 64
        %v1580 = vpop.permute.xlu0 %1579
        %1581 = vrot.lane.b32.xlu0 %v1271, 64
        %v1582 = vpop.permute.xlu0 %1581
        %1583 = vrot.lane.b32.xlu0 %v1272, 64
        %v1584 = vpop.permute.xlu0 %1583
        %1585 = vrot.lane.b32.xlu0 %v1273, 64
        %v1586 = vpop.permute.xlu0 %1585
        %1587 = vrot.lane.b32.xlu0 %v1274, 64
        %v1588 = vpop.permute.xlu0 %1587
        %1589 = vrot.lane.b32.xlu0 %v1275, 64
        %v1590 = vpop.permute.xlu0 %1589
        %1591 = vrot.lane.b32.xlu0 %v1276, 64
        %v1592 = vpop.permute.xlu0 %1591
        %1593 = vrot.lane.b32.xlu0 %v1277, 64
        %v1594 = vpop.permute.xlu0 %1593
        %1595 = vrot.lane.b32.xlu0 %v1278, 64
        %v1596 = vpop.permute.xlu0 %1595
        %1597 = vrot.lane.b32.xlu0 %v1279, 64
        %v1598 = vpop.permute.xlu0 %1597
        %1599 = vrot.lane.b32.xlu0 %v1280, 64
        %v1600 = vpop.permute.xlu0 %1599
        %1601 = vrot.lane.b32.xlu0 %v1281, 64
        %v1602 = vpop.permute.xlu0 %1601
        %v1619 = vmul.f32 %v1524, %v1572
        %v1620 = vmul.f32 %v1526, %v1574
        %v1621 = vmul.f32 %v1528, %v1576
        %v1622 = vmul.f32 %v1530, %v1578
        %v1623 = vmul.f32 %v1532, %v1580
        %v1624 = vmul.f32 %v1534, %v1582
        %v1625 = vmul.f32 %v1536, %v1584
        %v1626 = vmul.f32 %v1538, %v1586
        %v1627 = vmul.f32 %v1540, %v1588
        %v1628 = vmul.f32 %v1542, %v1590
        %v1629 = vmul.f32 %v1544, %v1592
        %v1630 = vmul.f32 %v1546, %v1594
        %v1631 = vmul.f32 %v1548, %v1596
        %v1632 = vmul.f32 %v1550, %v1598
        %v1633 = vmul.f32 %v1552, %v1600
        %v1634 = vmul.f32 %v1554, %v1602
        %v1635 = vpack.c.bf16 %v1620, %v1619
        %v1636 = vpack.c.bf16 %v1622, %v1621
        %v1637 = vpack.c.bf16 %v1624, %v1623
        %v1638 = vpack.c.bf16 %v1626, %v1625
        %v1639 = vpack.c.bf16 %v1628, %v1627
        %v1640 = vpack.c.bf16 %v1630, %v1629
        %v1641 = vpack.c.bf16 %v1632, %v1631
        %v1642 = vpack.c.bf16 %v1634, %v1633
        %v1643 = vld [vmem:[%s12] sm:$0xf]
        %v1644 = vld [vmem:[%s12 + $0x4] sm:$0xf]
        %v1645 = vld [vmem:[%s12 + $0x8] sm:$0xf]
        %v1646 = vld [vmem:[%s12 + $0xc] sm:$0xf]
        %v1647 = vld [vmem:[%s12 + $0x10] sm:$0xf]
        %v1648 = vld [vmem:[%s12 + $0x14] sm:$0xf]
        %v1649 = vld [vmem:[%s12 + $0x18] sm:$0xf]
        %v1650 = vld [vmem:[%s12 + $0x1c] sm:$0xf]
        %1659 = vrot.lane.b32.xlu0 %v1635, 64
        %v1660 = vpop.permute.xlu0 %1659
        %1661 = vrot.lane.b32.xlu0 %v1636, 64
        %v1662 = vpop.permute.xlu0 %1661
        %1663 = vrot.lane.b32.xlu0 %v1637, 64
        %v1664 = vpop.permute.xlu0 %1663
        %1665 = vrot.lane.b32.xlu0 %v1638, 64
        %v1666 = vpop.permute.xlu0 %1665
        %1667 = vrot.lane.b32.xlu0 %v1639, 64
        %v1668 = vpop.permute.xlu0 %1667
        %1669 = vrot.lane.b32.xlu0 %v1640, 64
        %v1670 = vpop.permute.xlu0 %1669
        %1671 = vrot.lane.b32.xlu0 %v1641, 64
        %v1672 = vpop.permute.xlu0 %1671
        %1673 = vrot.lane.b32.xlu0 %v1642, 64
        %v1674 = vpop.permute.xlu0 %1673
        %v1683 = vunpack.c.l.b16 %v1643
        %v1684 = vunpack.c.l.b16 %v1644
        %v1685 = vunpack.c.l.b16 %v1645
        %v1686 = vunpack.c.l.b16 %v1646
        %v1687 = vunpack.c.l.b16 %v1647
        %v1688 = vunpack.c.l.b16 %v1648
        %v1689 = vunpack.c.l.b16 %v1649
        %v1690 = vunpack.c.l.b16 %v1650
        %v1691 = vpack.c.b16 %v1684, %v1683
        %v1692 = vpack.c.b16 %v1686, %v1685
        %v1693 = vpack.c.b16 %v1688, %v1687
        %v1694 = vpack.c.b16 %v1690, %v1689
        %v1700 = vsel %vm1195, %v1660, 0
        %v1703 = vsel %vm1195, %v1662, 0
        %v1706 = vsel %vm1195, %v1664, 0
        %v1709 = vsel %vm1195, %v1666, 0
        %v1712 = vsel %vm1195, %v1668, 0
        %v1715 = vsel %vm1195, %v1670, 0
        %v1718 = vsel %vm1195, %v1672, 0
        %v1721 = vsel %vm1195, %v1674, 0
        %1723 = vmatprep.subr.bf16.mxu0 0
        %1724 = vmatpush1.bf16.msra.mxu0 %v1691
        %1725 = vmatprep.subr.bf16.mxu0 0
        %1726 = vmatpush1.bf16.msra.mxu0 %v1692
        %1727 = vmatprep.subr.bf16.mxu0 0
        %1728 = vmatpush1.bf16.msra.mxu0 %v1693
        %1729 = vmatprep.subr.bf16.mxu0 0
        %1730 = vmatpush1.bf16.msra.mxu0 %v1694
        %1731 = vmatprep.subr.bf16.mxu0 0
        %1732 = vmatpush1.bf16.msra.mxu0 0
        %1733 = vmatprep.subr.bf16.mxu0 0
        %1734 = vmatpush1.bf16.msra.mxu0 0
        %1735 = vmatprep.subr.bf16.mxu0 0
        %1736 = vmatpush1.bf16.msra.mxu0 0
        %1737 = vmatprep.subr.bf16.mxu0 0
        %1738 = vmatpush1.bf16.msra.mxu0 0
        %1739 = vmatprep.subr.bf16.mxu0 0
        %1740 = vmatpush1.bf16.msra.mxu0 0
        %1741 = vmatprep.subr.bf16.mxu0 0
        %1742 = vmatpush1.bf16.msra.mxu0 0
        %1743 = vmatprep.subr.bf16.mxu0 0
        %1744 = vmatpush1.bf16.msra.mxu0 0
        %1745 = vmatprep.subr.bf16.mxu0 0
        %1746 = vmatpush1.bf16.msra.mxu0 0
        %1747 = vmatprep.subr.bf16.mxu0 0
        %1748 = vmatpush1.bf16.msra.mxu0 0
        %1749 = vmatprep.subr.bf16.mxu0 0
        %1750 = vmatpush1.bf16.msra.mxu0 0
        %1751 = vmatprep.subr.bf16.mxu0 0
        %1752 = vmatpush1.bf16.msra.mxu0 0
        %1753 = vmatprep.subr.bf16.mxu0 0
        %1754 = vmatpush1.bf16.msra.mxu0 0
        %1755 = vmatprep.mubr.bf16.mxu0 0
        %1756 = vmatmul.mubr.bf16.gmra.mrb[0].mxu0 %v1700
        %v1757 = vpop.f32.mrb[0].mxu0
        %v1758 = vadd.f32 0.0, %v1757
        %v1759 = vpop.f32.mrb[0].mxu0
        %v1760 = vpop.f32.mrb[0].mxu0
        %v1761 = vadd.f32 0.0, %v1760
        %v1762 = vpop.f32.mrb[0].mxu0
        %1763 = vmatprep.mubr.bf16.mxu0 0
        %1764 = vmatmul.mubr.bf16.gmra.mrb[0].mxu0 %v1703
        %v1765 = vpop.f32.mrb[0].mxu0
        %v1766 = vadd.f32 0.0, %v1765
        %v1767 = vpop.f32.mrb[0].mxu0
        %v1768 = vpop.f32.mrb[0].mxu0
        %v1769 = vadd.f32 0.0, %v1768
        %v1770 = vpop.f32.mrb[0].mxu0
        %1771 = vmatprep.mubr.bf16.mxu0 0
        %1772 = vmatmul.mubr.bf16.gmra.mrb[0].mxu0 %v1706
        %v1773 = vpop.f32.mrb[0].mxu0
        %v1774 = vadd.f32 0.0, %v1773
        %v1775 = vpop.f32.mrb[0].mxu0
        %v1776 = vpop.f32.mrb[0].mxu0
        %v1777 = vadd.f32 0.0, %v1776
        %v1778 = vpop.f32.mrb[0].mxu0
        %1779 = vmatprep.mubr.bf16.mxu0 0
        %1780 = vmatmul.mubr.bf16.gmra.mrb[0].mxu0 %v1709
        %v1781 = vpop.f32.mrb[0].mxu0
        %v1782 = vadd.f32 0.0, %v1781
        %v1783 = vpop.f32.mrb[0].mxu0
        %v1784 = vpop.f32.mrb[0].mxu0
        %v1785 = vadd.f32 0.0, %v1784
        %v1786 = vpop.f32.mrb[0].mxu0
        %1787 = vmatprep.mubr.bf16.mxu0 0
        %1788 = vmatmul.mubr.bf16.gmra.mrb[0].mxu0 %v1712
        %v1789 = vpop.f32.mrb[0].mxu0
        %v1790 = vadd.f32 0.0, %v1789
        %v1791 = vpop.f32.mrb[0].mxu0
        %v1792 = vpop.f32.mrb[0].mxu0
        %v1793 = vadd.f32 0.0, %v1792
        %v1794 = vpop.f32.mrb[0].mxu0
        %1795 = vmatprep.mubr.bf16.mxu0 0
        %1796 = vmatmul.mubr.bf16.gmra.mrb[0].mxu0 %v1715
        %v1797 = vpop.f32.mrb[0].mxu0
        %v1798 = vadd.f32 0.0, %v1797
        %v1799 = vpop.f32.mrb[0].mxu0
        %v1800 = vpop.f32.mrb[0].mxu0
        %v1801 = vadd.f32 0.0, %v1800
        %v1802 = vpop.f32.mrb[0].mxu0
        %1803 = vmatprep.mubr.bf16.mxu0 0
        %1804 = vmatmul.mubr.bf16.gmra.mrb[0].mxu0 %v1718
        %v1805 = vpop.f32.mrb[0].mxu0
        %v1806 = vadd.f32 0.0, %v1805
        %v1807 = vpop.f32.mrb[0].mxu0
        %v1808 = vpop.f32.mrb[0].mxu0
        %v1809 = vadd.f32 0.0, %v1808
        %v1810 = vpop.f32.mrb[0].mxu0
        %1811 = vmatprep.mubr.bf16.mxu0 0
        %1812 = vmatmul.mubr.bf16.gmra.mrb[0].mxu0 %v1721
        %v1813 = vpop.f32.mrb[0].mxu0
        %v1814 = vadd.f32 0.0, %v1813
        %v1815 = vpop.f32.mrb[0].mxu0
        %v1816 = vpop.f32.mrb[0].mxu0
        %v1817 = vadd.f32 0.0, %v1816
        %v1818 = vpop.f32.mrb[0].mxu0
        %1819 = vdwg.mxu0
        %v1820 = vadd.f32 %v1758, %v1236
        %v1821 = vadd.f32 %v1761, %v1240
        %v1822 = vadd.f32 %v1766, %v1236
        %v1823 = vadd.f32 %v1769, %v1240
        %v1824 = vadd.f32 %v1774, %v1236
        %v1825 = vadd.f32 %v1777, %v1240
        %v1826 = vadd.f32 %v1782, %v1236
        %v1827 = vadd.f32 %v1785, %v1240
        %v1828 = vadd.f32 %v1790, %v1236
        %v1829 = vadd.f32 %v1793, %v1240
        %v1830 = vadd.f32 %v1798, %v1236
        %v1831 = vadd.f32 %v1801, %v1240
        %v1832 = vadd.f32 %v1806, %v1236
        %v1833 = vadd.f32 %v1809, %v1240
        %v1834 = vadd.f32 %v1814, %v1236
        %v1835 = vadd.f32 %v1817, %v1240
        %v1836 = vmax.f32 %v1820, 0.0
        %v1837 = vmax.f32 %v1821, 0.0
        %v1838 = vmax.f32 %v1822, 0.0
        %v1839 = vmax.f32 %v1823, 0.0
        %v1840 = vmax.f32 %v1824, 0.0
        %v1841 = vmax.f32 %v1825, 0.0
        %v1842 = vmax.f32 %v1826, 0.0
        %v1843 = vmax.f32 %v1827, 0.0
        %v1844 = vmax.f32 %v1828, 0.0
        %v1845 = vmax.f32 %v1829, 0.0
        %v1846 = vmax.f32 %v1830, 0.0
        %v1847 = vmax.f32 %v1831, 0.0
        %v1848 = vmax.f32 %v1832, 0.0
        %v1849 = vmax.f32 %v1833, 0.0
        %v1850 = vmax.f32 %v1834, 0.0
        %v1851 = vmax.f32 %v1835, 0.0
        %vm1852 = vcmp.ne.f32.partialorder %v1820, %v1820
        %vm1853 = vcmp.ne.f32.partialorder %v1821, %v1821
        %vm1854 = vcmp.ne.f32.partialorder %v1822, %v1822
        %vm1855 = vcmp.ne.f32.partialorder %v1823, %v1823
        %vm1856 = vcmp.ne.f32.partialorder %v1824, %v1824
        %vm1857 = vcmp.ne.f32.partialorder %v1825, %v1825
        %vm1858 = vcmp.ne.f32.partialorder %v1826, %v1826
        %vm1859 = vcmp.ne.f32.partialorder %v1827, %v1827
        %vm1860 = vcmp.ne.f32.partialorder %v1828, %v1828
        %vm1861 = vcmp.ne.f32.partialorder %v1829, %v1829
        %vm1862 = vcmp.ne.f32.partialorder %v1830, %v1830
        %vm1863 = vcmp.ne.f32.partialorder %v1831, %v1831
        %vm1864 = vcmp.ne.f32.partialorder %v1832, %v1832
        %vm1865 = vcmp.ne.f32.partialorder %v1833, %v1833
        %vm1866 = vcmp.ne.f32.partialorder %v1834, %v1834
        %vm1867 = vcmp.ne.f32.partialorder %v1835, %v1835
        %v1868 = vadd.f32 %v1820, 0.0
        %v1869 = vadd.f32 %v1821, 0.0
        %v1870 = vadd.f32 %v1822, 0.0
        %v1871 = vadd.f32 %v1823, 0.0
        %v1872 = vadd.f32 %v1824, 0.0
        %v1873 = vadd.f32 %v1825, 0.0
        %v1874 = vadd.f32 %v1826, 0.0
        %v1875 = vadd.f32 %v1827, 0.0
        %v1876 = vadd.f32 %v1828, 0.0
        %v1877 = vadd.f32 %v1829, 0.0
        %v1878 = vadd.f32 %v1830, 0.0
        %v1879 = vadd.f32 %v1831, 0.0
        %v1880 = vadd.f32 %v1832, 0.0
        %v1881 = vadd.f32 %v1833, 0.0
        %v1882 = vadd.f32 %v1834, 0.0
        %v1883 = vadd.f32 %v1835, 0.0
        %v1884 = vand.u32 2147483647, %v1820
        %v1885 = vand.u32 2147483647, %v1821
        %v1886 = vand.u32 2147483647, %v1822
        %v1887 = vand.u32 2147483647, %v1823
        %v1888 = vand.u32 2147483647, %v1824
        %v1889 = vand.u32 2147483647, %v1825
        %v1890 = vand.u32 2147483647, %v1826
        %v1891 = vand.u32 2147483647, %v1827
        %v1892 = vand.u32 2147483647, %v1828
        %v1893 = vand.u32 2147483647, %v1829
        %v1894 = vand.u32 2147483647, %v1830
        %v1895 = vand.u32 2147483647, %v1831
        %v1896 = vand.u32 2147483647, %v1832
        %v1897 = vand.u32 2147483647, %v1833
        %v1898 = vand.u32 2147483647, %v1834
        %v1899 = vand.u32 2147483647, %v1835
        %v1900 = vsub.f32 0.0, %v1884
        %v1901 = vsub.f32 0.0, %v1885
        %v1902 = vsub.f32 0.0, %v1886
        %v1903 = vsub.f32 0.0, %v1887
        %v1904 = vsub.f32 0.0, %v1888
        %v1905 = vsub.f32 0.0, %v1889
        %v1906 = vsub.f32 0.0, %v1890
        %v1907 = vsub.f32 0.0, %v1891
        %v1908 = vsub.f32 0.0, %v1892
        %v1909 = vsub.f32 0.0, %v1893
        %v1910 = vsub.f32 0.0, %v1894
        %v1911 = vsub.f32 0.0, %v1895
        %v1912 = vsub.f32 0.0, %v1896
        %v1913 = vsub.f32 0.0, %v1897
        %v1914 = vsub.f32 0.0, %v1898
        %v1915 = vsub.f32 0.0, %v1899
        %v1916 = vmul.f32 %v1900, 1.442695
        %v1917 = vpow.pop %v1916
        %v1918 = vmul.f32 %v1901, 1.442695
        %v1919 = vpow.pop %v1918
        %v1920 = vmul.f32 %v1902, 1.442695
        %v1921 = vpow.pop %v1920
        %v1922 = vmul.f32 %v1903, 1.442695
        %v1923 = vpow.pop %v1922
        %v1924 = vmul.f32 %v1904, 1.442695
        %v1925 = vpow.pop %v1924
        %v1926 = vmul.f32 %v1905, 1.442695
        %v1927 = vpow.pop %v1926
        %v1928 = vmul.f32 %v1906, 1.442695
        %v1929 = vpow.pop %v1928
        %v1930 = vmul.f32 %v1907, 1.442695
        %v1931 = vpow.pop %v1930
        %v1932 = vmul.f32 %v1908, 1.442695
        %v1933 = vpow.pop %v1932
        %v1934 = vmul.f32 %v1909, 1.442695
        %v1935 = vpow.pop %v1934
        %v1936 = vmul.f32 %v1910, 1.442695
        %v1937 = vpow.pop %v1936
        %v1938 = vmul.f32 %v1911, 1.442695
        %v1939 = vpow.pop %v1938
        %v1940 = vmul.f32 %v1912, 1.442695
        %v1941 = vpow.pop %v1940
        %v1942 = vmul.f32 %v1913, 1.442695
        %v1943 = vpow.pop %v1942
        %v1944 = vmul.f32 %v1914, 1.442695
        %v1945 = vpow.pop %v1944
        %v1946 = vmul.f32 %v1915, 1.442695
        %v1947 = vpow.pop %v1946
        %v1948 = vadd.f32 %v1917, 1.0
        %v1949 = vlog2.pop %v1948
        %v1950 = vmul.f32 %v1949, 0.6931472
        %v1951 = vmul.f32 -0.5, %v1917
        %v1952 = vadd.f32 %v1951, 1.0
        %v1953 = vmul.f32 %v1952, %v1917
        %v1954 = vand.u32 2147483647, %v1917
        %vm1955 = vcmp.lt.f32.partialorder %v1954, 0.0004427343
        %v1956 = vsel %vm1955, %v1953, %v1950
        %v1957 = vadd.f32 %v1919, 1.0
        %v1958 = vlog2.pop %v1957
        %v1959 = vmul.f32 %v1958, 0.6931472
        %v1960 = vmul.f32 -0.5, %v1919
        %v1961 = vadd.f32 %v1960, 1.0
        %v1962 = vmul.f32 %v1961, %v1919
        %v1963 = vand.u32 2147483647, %v1919
        %vm1964 = vcmp.lt.f32.partialorder %v1963, 0.0004427343
        %v1965 = vsel %vm1964, %v1962, %v1959
        %v1966 = vadd.f32 %v1921, 1.0
        %v1967 = vlog2.pop %v1966
        %v1968 = vmul.f32 %v1967, 0.6931472
        %v1969 = vmul.f32 -0.5, %v1921
        %v1970 = vadd.f32 %v1969, 1.0
        %v1971 = vmul.f32 %v1970, %v1921
        %v1972 = vand.u32 2147483647, %v1921
        %vm1973 = vcmp.lt.f32.partialorder %v1972, 0.0004427343
        %v1974 = vsel %vm1973, %v1971, %v1968
        %v1975 = vadd.f32 %v1923, 1.0
        %v1976 = vlog2.pop %v1975
        %v1977 = vmul.f32 %v1976, 0.6931472
        %v1978 = vmul.f32 -0.5, %v1923
        %v1979 = vadd.f32 %v1978, 1.0
        %v1980 = vmul.f32 %v1979, %v1923
        %v1981 = vand.u32 2147483647, %v1923
        %vm1982 = vcmp.lt.f32.partialorder %v1981, 0.0004427343
        %v1983 = vsel %vm1982, %v1980, %v1977
        %v1984 = vadd.f32 %v1925, 1.0
        %v1985 = vlog2.pop %v1984
        %v1986 = vmul.f32 %v1985, 0.6931472
        %v1987 = vmul.f32 -0.5, %v1925
        %v1988 = vadd.f32 %v1987, 1.0
        %v1989 = vmul.f32 %v1988, %v1925
        %v1990 = vand.u32 2147483647, %v1925
        %vm1991 = vcmp.lt.f32.partialorder %v1990, 0.0004427343
        %v1992 = vsel %vm1991, %v1989, %v1986
        %v1993 = vadd.f32 %v1927, 1.0
        %v1994 = vlog2.pop %v1993
        %v1995 = vmul.f32 %v1994, 0.6931472
        %v1996 = vmul.f32 -0.5, %v1927
        %v1997 = vadd.f32 %v1996, 1.0
        %v1998 = vmul.f32 %v1997, %v1927
        %v1999 = vand.u32 2147483647, %v1927
        %vm2000 = vcmp.lt.f32.partialorder %v1999, 0.0004427343
        %v2001 = vsel %vm2000, %v1998, %v1995
        %v2002 = vadd.f32 %v1929, 1.0
        %v2003 = vlog2.pop %v2002
        %v2004 = vmul.f32 %v2003, 0.6931472
        %v2005 = vmul.f32 -0.5, %v1929
        %v2006 = vadd.f32 %v2005, 1.0
        %v2007 = vmul.f32 %v2006, %v1929
        %v2008 = vand.u32 2147483647, %v1929
        %vm2009 = vcmp.lt.f32.partialorder %v2008, 0.0004427343
        %v2010 = vsel %vm2009, %v2007, %v2004
        %v2011 = vadd.f32 %v1931, 1.0
        %v2012 = vlog2.pop %v2011
        %v2013 = vmul.f32 %v2012, 0.6931472
        %v2014 = vmul.f32 -0.5, %v1931
        %v2015 = vadd.f32 %v2014, 1.0
        %v2016 = vmul.f32 %v2015, %v1931
        %v2017 = vand.u32 2147483647, %v1931
        %vm2018 = vcmp.lt.f32.partialorder %v2017, 0.0004427343
        %v2019 = vsel %vm2018, %v2016, %v2013
        %v2020 = vadd.f32 %v1933, 1.0
        %v2021 = vlog2.pop %v2020
        %v2022 = vmul.f32 %v2021, 0.6931472
        %v2023 = vmul.f32 -0.5, %v1933
        %v2024 = vadd.f32 %v2023, 1.0
        %v2025 = vmul.f32 %v2024, %v1933
        %v2026 = vand.u32 2147483647, %v1933
        %vm2027 = vcmp.lt.f32.partialorder %v2026, 0.0004427343
        %v2028 = vsel %vm2027, %v2025, %v2022
        %v2029 = vadd.f32 %v1935, 1.0
        %v2030 = vlog2.pop %v2029
        %v2031 = vmul.f32 %v2030, 0.6931472
        %v2032 = vmul.f32 -0.5, %v1935
        %v2033 = vadd.f32 %v2032, 1.0
        %v2034 = vmul.f32 %v2033, %v1935
        %v2035 = vand.u32 2147483647, %v1935
        %vm2036 = vcmp.lt.f32.partialorder %v2035, 0.0004427343
        %v2037 = vsel %vm2036, %v2034, %v2031
        %v2038 = vadd.f32 %v1937, 1.0
        %v2039 = vlog2.pop %v2038
        %v2040 = vmul.f32 %v2039, 0.6931472
        %v2041 = vmul.f32 -0.5, %v1937
        %v2042 = vadd.f32 %v2041, 1.0
        %v2043 = vmul.f32 %v2042, %v1937
        %v2044 = vand.u32 2147483647, %v1937
        %vm2045 = vcmp.lt.f32.partialorder %v2044, 0.0004427343
        %v2046 = vsel %vm2045, %v2043, %v2040
        %v2047 = vadd.f32 %v1939, 1.0
        %v2048 = vlog2.pop %v2047
        %v2049 = vmul.f32 %v2048, 0.6931472
        %v2050 = vmul.f32 -0.5, %v1939
        %v2051 = vadd.f32 %v2050, 1.0
        %v2052 = vmul.f32 %v2051, %v1939
        %v2053 = vand.u32 2147483647, %v1939
        %vm2054 = vcmp.lt.f32.partialorder %v2053, 0.0004427343
        %v2055 = vsel %vm2054, %v2052, %v2049
        %v2056 = vadd.f32 %v1941, 1.0
        %v2057 = vlog2.pop %v2056
        %v2058 = vmul.f32 %v2057, 0.6931472
        %v2059 = vmul.f32 -0.5, %v1941
        %v2060 = vadd.f32 %v2059, 1.0
        %v2061 = vmul.f32 %v2060, %v1941
        %v2062 = vand.u32 2147483647, %v1941
        %vm2063 = vcmp.lt.f32.partialorder %v2062, 0.0004427343
        %v2064 = vsel %vm2063, %v2061, %v2058
        %v2065 = vadd.f32 %v1943, 1.0
        %v2066 = vlog2.pop %v2065
        %v2067 = vmul.f32 %v2066, 0.6931472
        %v2068 = vmul.f32 -0.5, %v1943
        %v2069 = vadd.f32 %v2068, 1.0
        %v2070 = vmul.f32 %v2069, %v1943
        %v2071 = vand.u32 2147483647, %v1943
        %vm2072 = vcmp.lt.f32.partialorder %v2071, 0.0004427343
        %v2073 = vsel %vm2072, %v2070, %v2067
        %v2074 = vadd.f32 %v1945, 1.0
        %v2075 = vlog2.pop %v2074
        %v2076 = vmul.f32 %v2075, 0.6931472
        %v2077 = vmul.f32 -0.5, %v1945
        %v2078 = vadd.f32 %v2077, 1.0
        %v2079 = vmul.f32 %v2078, %v1945
        %v2080 = vand.u32 2147483647, %v1945
        %vm2081 = vcmp.lt.f32.partialorder %v2080, 0.0004427343
        %v2082 = vsel %vm2081, %v2079, %v2076
        %v2083 = vadd.f32 %v1947, 1.0
        %v2084 = vlog2.pop %v2083
        %v2085 = vmul.f32 %v2084, 0.6931472
        %v2086 = vmul.f32 -0.5, %v1947
        %v2087 = vadd.f32 %v2086, 1.0
        %v2088 = vmul.f32 %v2087, %v1947
        %v2089 = vand.u32 2147483647, %v1947
        %vm2090 = vcmp.lt.f32.partialorder %v2089, 0.0004427343
        %v2091 = vsel %vm2090, %v2088, %v2085
        %v2092 = vadd.f32 %v1836, %v1956
        %v2093 = vadd.f32 %v1837, %v1965
        %v2094 = vadd.f32 %v1838, %v1974
        %v2095 = vadd.f32 %v1839, %v1983
        %v2096 = vadd.f32 %v1840, %v1992
        %v2097 = vadd.f32 %v1841, %v2001
        %v2098 = vadd.f32 %v1842, %v2010
        %v2099 = vadd.f32 %v1843, %v2019
        %v2100 = vadd.f32 %v1844, %v2028
        %v2101 = vadd.f32 %v1845, %v2037
        %v2102 = vadd.f32 %v1846, %v2046
        %v2103 = vadd.f32 %v1847, %v2055
        %v2104 = vadd.f32 %v1848, %v2064
        %v2105 = vadd.f32 %v1849, %v2073
        %v2106 = vadd.f32 %v1850, %v2082
        %v2107 = vadd.f32 %v1851, %v2091
        %v2108 = vsel %vm1852, %v1868, %v2092
        %v2109 = vsel %vm1853, %v1869, %v2093
        %v2110 = vsel %vm1854, %v1870, %v2094
        %v2111 = vsel %vm1855, %v1871, %v2095
        %v2112 = vsel %vm1856, %v1872, %v2096
        %v2113 = vsel %vm1857, %v1873, %v2097
        %v2114 = vsel %vm1858, %v1874, %v2098
        %v2115 = vsel %vm1859, %v1875, %v2099
        %v2116 = vsel %vm1860, %v1876, %v2100
        %v2117 = vsel %vm1861, %v1877, %v2101
        %v2118 = vsel %vm1862, %v1878, %v2102
        %v2119 = vsel %vm1863, %v1879, %v2103
        %v2120 = vsel %vm1864, %v1880, %v2104
        %v2121 = vsel %vm1865, %v1881, %v2105
        %v2122 = vsel %vm1866, %v1882, %v2106
        %v2123 = vsel %vm1867, %v1883, %v2107
        %v2124 = vrsqrt.pop %v2108
        %v2125 = vmul.f32 %v2108, %v2124
        %vm2126 = vcmp.eq.f32.partialorder %v2108, inf
        %v2127 = vsel %vm2126, %v2108, %v2125
        %vm2128 = vcmp.eq.f32.partialorder %v2108, 0.0
        %v2129 = vand.u32 %v2108, 2147483648
        %v2130 = vsel %vm2128, %v2129, %v2127
        %v2131 = vrsqrt.pop %v2109
        %v2132 = vmul.f32 %v2109, %v2131
        %vm2133 = vcmp.eq.f32.partialorder %v2109, inf
        %v2134 = vsel %vm2133, %v2109, %v2132
        %vm2135 = vcmp.eq.f32.partialorder %v2109, 0.0
        %v2136 = vand.u32 %v2109, 2147483648
        %v2137 = vsel %vm2135, %v2136, %v2134
        %v2138 = vrsqrt.pop %v2110
        %v2139 = vmul.f32 %v2110, %v2138
        %vm2140 = vcmp.eq.f32.partialorder %v2110, inf
        %v2141 = vsel %vm2140, %v2110, %v2139
        %vm2142 = vcmp.eq.f32.partialorder %v2110, 0.0
        %v2143 = vand.u32 %v2110, 2147483648
        %v2144 = vsel %vm2142, %v2143, %v2141
        %v2145 = vrsqrt.pop %v2111
        %v2146 = vmul.f32 %v2111, %v2145
        %vm2147 = vcmp.eq.f32.partialorder %v2111, inf
        %v2148 = vsel %vm2147, %v2111, %v2146
        %vm2149 = vcmp.eq.f32.partialorder %v2111, 0.0
        %v2150 = vand.u32 %v2111, 2147483648
        %v2151 = vsel %vm2149, %v2150, %v2148
        %v2152 = vrsqrt.pop %v2112
        %v2153 = vmul.f32 %v2112, %v2152
        %vm2154 = vcmp.eq.f32.partialorder %v2112, inf
        %v2155 = vsel %vm2154, %v2112, %v2153
        %vm2156 = vcmp.eq.f32.partialorder %v2112, 0.0
        %v2157 = vand.u32 %v2112, 2147483648
        %v2158 = vsel %vm2156, %v2157, %v2155
        %v2159 = vrsqrt.pop %v2113
        %v2160 = vmul.f32 %v2113, %v2159
        %vm2161 = vcmp.eq.f32.partialorder %v2113, inf
        %v2162 = vsel %vm2161, %v2113, %v2160
        %vm2163 = vcmp.eq.f32.partialorder %v2113, 0.0
        %v2164 = vand.u32 %v2113, 2147483648
        %v2165 = vsel %vm2163, %v2164, %v2162
        %v2166 = vrsqrt.pop %v2114
        %v2167 = vmul.f32 %v2114, %v2166
        %vm2168 = vcmp.eq.f32.partialorder %v2114, inf
        %v2169 = vsel %vm2168, %v2114, %v2167
        %vm2170 = vcmp.eq.f32.partialorder %v2114, 0.0
        %v2171 = vand.u32 %v2114, 2147483648
        %v2172 = vsel %vm2170, %v2171, %v2169
        %v2173 = vrsqrt.pop %v2115
        %v2174 = vmul.f32 %v2115, %v2173
        %vm2175 = vcmp.eq.f32.partialorder %v2115, inf
        %v2176 = vsel %vm2175, %v2115, %v2174
        %vm2177 = vcmp.eq.f32.partialorder %v2115, 0.0
        %v2178 = vand.u32 %v2115, 2147483648
        %v2179 = vsel %vm2177, %v2178, %v2176
        %v2180 = vrsqrt.pop %v2116
        %v2181 = vmul.f32 %v2116, %v2180
        %vm2182 = vcmp.eq.f32.partialorder %v2116, inf
        %v2183 = vsel %vm2182, %v2116, %v2181
        %vm2184 = vcmp.eq.f32.partialorder %v2116, 0.0
        %v2185 = vand.u32 %v2116, 2147483648
        %v2186 = vsel %vm2184, %v2185, %v2183
        %v2187 = vrsqrt.pop %v2117
        %v2188 = vmul.f32 %v2117, %v2187
        %vm2189 = vcmp.eq.f32.partialorder %v2117, inf
        %v2190 = vsel %vm2189, %v2117, %v2188
        %vm2191 = vcmp.eq.f32.partialorder %v2117, 0.0
        %v2192 = vand.u32 %v2117, 2147483648
        %v2193 = vsel %vm2191, %v2192, %v2190
        %v2194 = vrsqrt.pop %v2118
        %v2195 = vmul.f32 %v2118, %v2194
        %vm2196 = vcmp.eq.f32.partialorder %v2118, inf
        %v2197 = vsel %vm2196, %v2118, %v2195
        %vm2198 = vcmp.eq.f32.partialorder %v2118, 0.0
        %v2199 = vand.u32 %v2118, 2147483648
        %v2200 = vsel %vm2198, %v2199, %v2197
        %v2201 = vrsqrt.pop %v2119
        %v2202 = vmul.f32 %v2119, %v2201
        %vm2203 = vcmp.eq.f32.partialorder %v2119, inf
        %v2204 = vsel %vm2203, %v2119, %v2202
        %vm2205 = vcmp.eq.f32.partialorder %v2119, 0.0
        %v2206 = vand.u32 %v2119, 2147483648
        %v2207 = vsel %vm2205, %v2206, %v2204
        %v2208 = vrsqrt.pop %v2120
        %v2209 = vmul.f32 %v2120, %v2208
        %vm2210 = vcmp.eq.f32.partialorder %v2120, inf
        %v2211 = vsel %vm2210, %v2120, %v2209
        %vm2212 = vcmp.eq.f32.partialorder %v2120, 0.0
        %v2213 = vand.u32 %v2120, 2147483648
        %v2214 = vsel %vm2212, %v2213, %v2211
        %v2215 = vrsqrt.pop %v2121
        %v2216 = vmul.f32 %v2121, %v2215
        %vm2217 = vcmp.eq.f32.partialorder %v2121, inf
        %v2218 = vsel %vm2217, %v2121, %v2216
        %vm2219 = vcmp.eq.f32.partialorder %v2121, 0.0
        %v2220 = vand.u32 %v2121, 2147483648
        %v2221 = vsel %vm2219, %v2220, %v2218
        %v2222 = vrsqrt.pop %v2122
        %v2223 = vmul.f32 %v2122, %v2222
        %vm2224 = vcmp.eq.f32.partialorder %v2122, inf
        %v2225 = vsel %vm2224, %v2122, %v2223
        %vm2226 = vcmp.eq.f32.partialorder %v2122, 0.0
        %v2227 = vand.u32 %v2122, 2147483648
        %v2228 = vsel %vm2226, %v2227, %v2225
        %v2229 = vrsqrt.pop %v2123
        %v2230 = vmul.f32 %v2123, %v2229
        %vm2231 = vcmp.eq.f32.partialorder %v2123, inf
        %v2232 = vsel %vm2231, %v2123, %v2230
        %vm2233 = vcmp.eq.f32.partialorder %v2123, 0.0
        %v2234 = vand.u32 %v2123, 2147483648
        %v2235 = vsel %vm2233, %v2234, %v2232
        %v2236 = vld [vmem:[%s959] sm:$0xff]
        %v2237 = vld [vmem:[%s959 + $0x8] sm:$0xff]
        %v2238 = vld [vmem:[%s959 + $0x10] sm:$0xff]
        %v2239 = vld [vmem:[%s959 + $0x18] sm:$0xff]
        %v2240 = vld [vmem:[%s959 + $0x20] sm:$0xff]
        %v2241 = vld [vmem:[%s959 + $0x28] sm:$0xff]
        %v2242 = vld [vmem:[%s959 + $0x30] sm:$0xff]
        %v2243 = vld [vmem:[%s959 + $0x38] sm:$0xff]
        %v2244 = vld [vmem:[%s959 + $0x40] sm:$0xff]
        %v2245 = vld [vmem:[%s959 + $0x48] sm:$0xff]
        %v2246 = vld [vmem:[%s959 + $0x50] sm:$0xff]
        %v2247 = vld [vmem:[%s959 + $0x58] sm:$0xff]
        %v2248 = vld [vmem:[%s959 + $0x60] sm:$0xff]
        %v2249 = vld [vmem:[%s959 + $0x68] sm:$0xff]
        %v2250 = vld [vmem:[%s959 + $0x70] sm:$0xff]
        %v2251 = vld [vmem:[%s959 + $0x78] sm:$0xff]
        %2268 = vrot.lane.b32.xlu0 %v2130, 64
        %v2269 = vpop.permute.xlu0 %2268
        %2270 = vrot.lane.b32.xlu0 %v2137, 64
        %v2271 = vpop.permute.xlu0 %2270
        %2272 = vrot.lane.b32.xlu0 %v2144, 64
        %v2273 = vpop.permute.xlu0 %2272
        %2274 = vrot.lane.b32.xlu0 %v2151, 64
        %v2275 = vpop.permute.xlu0 %2274
        %2276 = vrot.lane.b32.xlu0 %v2158, 64
        %v2277 = vpop.permute.xlu0 %2276
        %2278 = vrot.lane.b32.xlu0 %v2165, 64
        %v2279 = vpop.permute.xlu0 %2278
        %2280 = vrot.lane.b32.xlu0 %v2172, 64
        %v2281 = vpop.permute.xlu0 %2280
        %2282 = vrot.lane.b32.xlu0 %v2179, 64
        %v2283 = vpop.permute.xlu0 %2282
        %2284 = vrot.lane.b32.xlu0 %v2186, 64
        %v2285 = vpop.permute.xlu0 %2284
        %2286 = vrot.lane.b32.xlu0 %v2193, 64
        %v2287 = vpop.permute.xlu0 %2286
        %2288 = vrot.lane.b32.xlu0 %v2200, 64
        %v2289 = vpop.permute.xlu0 %2288
        %2290 = vrot.lane.b32.xlu0 %v2207, 64
        %v2291 = vpop.permute.xlu0 %2290
        %2292 = vrot.lane.b32.xlu0 %v2214, 64
        %v2293 = vpop.permute.xlu0 %2292
        %2294 = vrot.lane.b32.xlu0 %v2221, 64
        %v2295 = vpop.permute.xlu0 %2294
        %2296 = vrot.lane.b32.xlu0 %v2228, 64
        %v2297 = vpop.permute.xlu0 %2296
        %2298 = vrot.lane.b32.xlu0 %v2235, 64
        %v2299 = vpop.permute.xlu0 %2298
        %v2316 = vmul.f32 %v2236, %v2269
        %v2317 = vmul.f32 %v2237, %v2271
        %v2318 = vmul.f32 %v2238, %v2273
        %v2319 = vmul.f32 %v2239, %v2275
        %v2320 = vmul.f32 %v2240, %v2277
        %v2321 = vmul.f32 %v2241, %v2279
        %v2322 = vmul.f32 %v2242, %v2281
        %v2323 = vmul.f32 %v2243, %v2283
        %v2324 = vmul.f32 %v2244, %v2285
        %v2325 = vmul.f32 %v2245, %v2287
        %v2326 = vmul.f32 %v2246, %v2289
        %v2327 = vmul.f32 %v2247, %v2291
        %v2328 = vmul.f32 %v2248, %v2293
        %v2329 = vmul.f32 %v2249, %v2295
        %v2330 = vmul.f32 %v2250, %v2297
        %v2331 = vmul.f32 %v2251, %v2299
        %v2332 = vadd.f32 %v1820, %v2316
        %v2333 = vadd.f32 %v1821, %v2317
        %v2334 = vadd.f32 %v1822, %v2318
        %v2335 = vadd.f32 %v1823, %v2319
        %v2336 = vadd.f32 %v1824, %v2320
        %v2337 = vadd.f32 %v1825, %v2321
        %v2338 = vadd.f32 %v1826, %v2322
        %v2339 = vadd.f32 %v1827, %v2323
        %v2340 = vadd.f32 %v1828, %v2324
        %v2341 = vadd.f32 %v1829, %v2325
        %v2342 = vadd.f32 %v1830, %v2326
        %v2343 = vadd.f32 %v1831, %v2327
        %v2344 = vadd.f32 %v1832, %v2328
        %v2345 = vadd.f32 %v1833, %v2329
        %v2346 = vadd.f32 %v1834, %v2330
        %v2347 = vadd.f32 %v1835, %v2331
        %v2348 = vsub.f32 1.0, %v1524
        %v2349 = vsub.f32 1.0, %v1526
        %v2350 = vsub.f32 1.0, %v1528
        %v2351 = vsub.f32 1.0, %v1530
        %v2352 = vsub.f32 1.0, %v1532
        %v2353 = vsub.f32 1.0, %v1534
        %v2354 = vsub.f32 1.0, %v1536
        %v2355 = vsub.f32 1.0, %v1538
        %v2356 = vsub.f32 1.0, %v1540
        %v2357 = vsub.f32 1.0, %v1542
        %v2358 = vsub.f32 1.0, %v1544
        %v2359 = vsub.f32 1.0, %v1546
        %v2360 = vsub.f32 1.0, %v1548
        %v2361 = vsub.f32 1.0, %v1550
        %v2362 = vsub.f32 1.0, %v1552
        %v2363 = vsub.f32 1.0, %v1554
        %v2364 = vmul.f32 %v2348, %v2332
        %v2365 = vmul.f32 %v2349, %v2333
        %v2366 = vmul.f32 %v2350, %v2334
        %v2367 = vmul.f32 %v2351, %v2335
        %v2368 = vmul.f32 %v2352, %v2336
        %v2369 = vmul.f32 %v2353, %v2337
        %v2370 = vmul.f32 %v2354, %v2338
        %v2371 = vmul.f32 %v2355, %v2339
        %v2372 = vmul.f32 %v2356, %v2340
        %v2373 = vmul.f32 %v2357, %v2341
        %v2374 = vmul.f32 %v2358, %v2342
        %v2375 = vmul.f32 %v2359, %v2343
        %v2376 = vmul.f32 %v2360, %v2344
        %v2377 = vmul.f32 %v2361, %v2345
        %v2378 = vmul.f32 %v2362, %v2346
        %v2379 = vmul.f32 %v2363, %v2347
        %v2380 = vmul.f32 %v1524, %v1266
        %v2381 = vmul.f32 %v1526, %v1267
        %v2382 = vmul.f32 %v1528, %v1268
        %v2383 = vmul.f32 %v1530, %v1269
        %v2384 = vmul.f32 %v1532, %v1270
        %v2385 = vmul.f32 %v1534, %v1271
        %v2386 = vmul.f32 %v1536, %v1272
        %v2387 = vmul.f32 %v1538, %v1273
        %v2388 = vmul.f32 %v1540, %v1274
        %v2389 = vmul.f32 %v1542, %v1275
        %v2390 = vmul.f32 %v1544, %v1276
        %v2391 = vmul.f32 %v1546, %v1277
        %v2392 = vmul.f32 %v1548, %v1278
        %v2393 = vmul.f32 %v1550, %v1279
        %v2394 = vmul.f32 %v1552, %v1280
        %v2395 = vmul.f32 %v1554, %v1281
        %v2396 = vadd.f32 %v2364, %v2380
        %v2397 = vadd.f32 %v2365, %v2381
        %v2398 = vadd.f32 %v2366, %v2382
        %v2399 = vadd.f32 %v2367, %v2383
        %v2400 = vadd.f32 %v2368, %v2384
        %v2401 = vadd.f32 %v2369, %v2385
        %v2402 = vadd.f32 %v2370, %v2386
        %v2403 = vadd.f32 %v2371, %v2387
        %v2404 = vadd.f32 %v2372, %v2388
        %v2405 = vadd.f32 %v2373, %v2389
        %v2406 = vadd.f32 %v2374, %v2390
        %v2407 = vadd.f32 %v2375, %v2391
        %v2408 = vadd.f32 %v2376, %v2392
        %v2409 = vadd.f32 %v2377, %v2393
        %v2410 = vadd.f32 %v2378, %v2394
        %v2411 = vadd.f32 %v2379, %v2395
        %v2412 = vld [vmem:[%s13] sm:$0x1]
        %v2414 = vlaneseq
        %v2415 = vshrl.u32 %v2414, 7
        %v2416 = vsub.s32 0, %v2415
        %v2417 = vrot.slane %v2412, %v2416
        %v2419 = vmul.f32 %v2396, %v2417
        %v2420 = vmul.f32 %v2397, %v2417
        %v2421 = vmul.f32 %v2398, %v2417
        %v2422 = vmul.f32 %v2399, %v2417
        %v2423 = vmul.f32 %v2400, %v2417
        %v2424 = vmul.f32 %v2401, %v2417
        %v2425 = vmul.f32 %v2402, %v2417
        %v2426 = vmul.f32 %v2403, %v2417
        %v2427 = vmul.f32 %v2404, %v2417
        %v2428 = vmul.f32 %v2405, %v2417
        %v2429 = vmul.f32 %v2406, %v2417
        %v2430 = vmul.f32 %v2407, %v2417
        %v2431 = vmul.f32 %v2408, %v2417
        %v2432 = vmul.f32 %v2409, %v2417
        %v2433 = vmul.f32 %v2410, %v2417
        %v2434 = vmul.f32 %v2411, %v2417
        %v2435 = vsel %vm1195, %v2419, 0.0
        %2436 = vadd.xlane.f32.xlu0 %v2435
        %v2437 = vpop.xlane.xlu0 %2436
        %v2438 = vsel %vm1195, %v2420, 0.0
        %2439 = vadd.xlane.f32.xlu0 %v2438
        %v2440 = vpop.xlane.xlu0 %2439
        %v2441 = vsel %vm1195, %v2421, 0.0
        %2442 = vadd.xlane.f32.xlu0 %v2441
        %v2443 = vpop.xlane.xlu0 %2442
        %v2444 = vsel %vm1195, %v2422, 0.0
        %2445 = vadd.xlane.f32.xlu0 %v2444
        %v2446 = vpop.xlane.xlu0 %2445
        %v2447 = vsel %vm1195, %v2423, 0.0
        %2448 = vadd.xlane.f32.xlu0 %v2447
        %v2449 = vpop.xlane.xlu0 %2448
        %v2450 = vsel %vm1195, %v2424, 0.0
        %2451 = vadd.xlane.f32.xlu0 %v2450
        %v2452 = vpop.xlane.xlu0 %2451
        %v2453 = vsel %vm1195, %v2425, 0.0
        %2454 = vadd.xlane.f32.xlu0 %v2453
        %v2455 = vpop.xlane.xlu0 %2454
        %v2456 = vsel %vm1195, %v2426, 0.0
        %2457 = vadd.xlane.f32.xlu0 %v2456
        %v2458 = vpop.xlane.xlu0 %2457
        %v2459 = vsel %vm1195, %v2427, 0.0
        %2460 = vadd.xlane.f32.xlu0 %v2459
        %v2461 = vpop.xlane.xlu0 %2460
        %v2462 = vsel %vm1195, %v2428, 0.0
        %2463 = vadd.xlane.f32.xlu0 %v2462
        %v2464 = vpop.xlane.xlu0 %2463
        %v2465 = vsel %vm1195, %v2429, 0.0
        %2466 = vadd.xlane.f32.xlu0 %v2465
        %v2467 = vpop.xlane.xlu0 %2466
        %v2468 = vsel %vm1195, %v2430, 0.0
        %2469 = vadd.xlane.f32.xlu0 %v2468
        %v2470 = vpop.xlane.xlu0 %2469
        %v2471 = vsel %vm1195, %v2431, 0.0
        %2472 = vadd.xlane.f32.xlu0 %v2471
        %v2473 = vpop.xlane.xlu0 %2472
        %v2474 = vsel %vm1195, %v2432, 0.0
        %2475 = vadd.xlane.f32.xlu0 %v2474
        %v2476 = vpop.xlane.xlu0 %2475
        %v2477 = vsel %vm1195, %v2433, 0.0
        %2478 = vadd.xlane.f32.xlu0 %v2477
        %v2479 = vpop.xlane.xlu0 %2478
        %v2480 = vsel %vm1195, %v2434, 0.0
        %2481 = vadd.xlane.f32.xlu0 %v2480
        %v2482 = vpop.xlane.xlu0 %2481
        %v2483 = vadd.f32 %v2437, %v1264
        %v2484 = vadd.f32 %v2440, %v1265
        %v2485 = vadd.f32 %v2443, %v1264
        %v2486 = vadd.f32 %v2446, %v1265
        %v2487 = vadd.f32 %v2449, %v1264
        %v2488 = vadd.f32 %v2452, %v1265
        %v2489 = vadd.f32 %v2455, %v1264
        %v2490 = vadd.f32 %v2458, %v1265
        %v2491 = vadd.f32 %v2461, %v1264
        %v2492 = vadd.f32 %v2464, %v1265
        %v2493 = vadd.f32 %v2467, %v1264
        %v2494 = vadd.f32 %v2470, %v1265
        %v2495 = vadd.f32 %v2473, %v1264
        %v2496 = vadd.f32 %v2476, %v1265
        %v2497 = vadd.f32 %v2479, %v1264
        %v2498 = vadd.f32 %v2482, %v1265
        %v2499 = vld [vmem:[%s952] sm:$0xff]
        %v2500 = vld [vmem:[%s952 + $0x8] sm:$0xff]
        %v2501 = vld [vmem:[%s952 + $0x10] sm:$0xff]
        %v2502 = vld [vmem:[%s952 + $0x18] sm:$0xff]
        %v2503 = vld [vmem:[%s952 + $0x20] sm:$0xff]
        %v2504 = vld [vmem:[%s952 + $0x28] sm:$0xff]
        %v2505 = vld [vmem:[%s952 + $0x30] sm:$0xff]
        %v2506 = vld [vmem:[%s952 + $0x38] sm:$0xff]
        %v2507 = vld [vmem:[%s952 + $0x40] sm:$0xff]
        %v2508 = vld [vmem:[%s952 + $0x48] sm:$0xff]
        %v2509 = vld [vmem:[%s952 + $0x50] sm:$0xff]
        %v2510 = vld [vmem:[%s952 + $0x58] sm:$0xff]
        %v2511 = vld [vmem:[%s952 + $0x60] sm:$0xff]
        %v2512 = vld [vmem:[%s952 + $0x68] sm:$0xff]
        %v2513 = vld [vmem:[%s952 + $0x70] sm:$0xff]
        %v2514 = vld [vmem:[%s952 + $0x78] sm:$0xff]
        %v2515 = vadd.f32 %v2483, %v2499
        %v2516 = vadd.f32 %v2484, %v2500
        %v2517 = vadd.f32 %v2485, %v2501
        %v2518 = vadd.f32 %v2486, %v2502
        %v2519 = vadd.f32 %v2487, %v2503
        %v2520 = vadd.f32 %v2488, %v2504
        %v2521 = vadd.f32 %v2489, %v2505
        %v2522 = vadd.f32 %v2490, %v2506
        %v2523 = vadd.f32 %v2491, %v2507
        %v2524 = vadd.f32 %v2492, %v2508
        %v2525 = vadd.f32 %v2493, %v2509
        %v2526 = vadd.f32 %v2494, %v2510
        %v2527 = vadd.f32 %v2495, %v2511
        %v2528 = vadd.f32 %v2496, %v2512
        %v2529 = vadd.f32 %v2497, %v2513
        %v2530 = vadd.f32 %v2498, %v2514
        %vm2531 = vcmask 7168
        %v2532 = vsel %vm2531, %v2515, -inf
        %v2533 = vsel %vm2531, %v2517, -inf
        %v2534 = vsel %vm2531, %v2519, -inf
        %v2535 = vmax.f32 %v2532, %v2534
        %v2536 = vsel %vm2531, %v2521, -inf
        %v2537 = vmax.f32 %v2533, %v2536
        %v2538 = vsel %vm2531, %v2523, -inf
        %v2539 = vmax.f32 %v2535, %v2538
        %v2540 = vsel %vm2531, %v2525, -inf
        %v2541 = vmax.f32 %v2537, %v2540
        %v2542 = vsel %vm2531, %v2527, -inf
        %v2543 = vmax.f32 %v2539, %v2542
        %v2544 = vsel %vm2531, %v2529, -inf
        %v2545 = vmax.f32 %v2541, %v2544
        %v2546 = vmax.f32 %v2543, %v2545
        %v2547 = vsel %vm2531, %v2516, -inf
        %v2548 = vsel %vm2531, %v2518, -inf
        %v2549 = vsel %vm2531, %v2520, -inf
        %v2550 = vmax.f32 %v2547, %v2549
        %v2551 = vsel %vm2531, %v2522, -inf
        %v2552 = vmax.f32 %v2548, %v2551
        %v2553 = vsel %vm2531, %v2524, -inf
        %v2554 = vmax.f32 %v2550, %v2553
        %v2555 = vsel %vm2531, %v2526, -inf
        %v2556 = vmax.f32 %v2552, %v2555
        %v2557 = vsel %vm2531, %v2528, -inf
        %v2558 = vmax.f32 %v2554, %v2557
        %v2559 = vsel %vm2531, %v2530, -inf
        %v2560 = vmax.f32 %v2556, %v2559
        %v2561 = vmax.f32 %v2558, %v2560
        %v2562 = vsub.f32 %v2515, %v2546
        %v2563 = vsub.f32 %v2516, %v2561
        %v2564 = vsub.f32 %v2517, %v2546
        %v2565 = vsub.f32 %v2518, %v2561
        %v2566 = vsub.f32 %v2519, %v2546
        %v2567 = vsub.f32 %v2520, %v2561
        %v2568 = vsub.f32 %v2521, %v2546
        %v2569 = vsub.f32 %v2522, %v2561
        %v2570 = vsub.f32 %v2523, %v2546
        %v2571 = vsub.f32 %v2524, %v2561
        %v2572 = vsub.f32 %v2525, %v2546
        %v2573 = vsub.f32 %v2526, %v2561
        %v2574 = vsub.f32 %v2527, %v2546
        %v2575 = vsub.f32 %v2528, %v2561
        %v2576 = vsub.f32 %v2529, %v2546
        %v2577 = vsub.f32 %v2530, %v2561
        %v2578 = vmul.f32 %v2562, 1.442695
        %v2579 = vpow.pop %v2578
        %v2580 = vmul.f32 %v2563, 1.442695
        %v2581 = vpow.pop %v2580
        %v2582 = vmul.f32 %v2564, 1.442695
        %v2583 = vpow.pop %v2582
        %v2584 = vmul.f32 %v2565, 1.442695
        %v2585 = vpow.pop %v2584
        %v2586 = vmul.f32 %v2566, 1.442695
        %v2587 = vpow.pop %v2586
        %v2588 = vmul.f32 %v2567, 1.442695
        %v2589 = vpow.pop %v2588
        %v2590 = vmul.f32 %v2568, 1.442695
        %v2591 = vpow.pop %v2590
        %v2592 = vmul.f32 %v2569, 1.442695
        %v2593 = vpow.pop %v2592
        %v2594 = vmul.f32 %v2570, 1.442695
        %v2595 = vpow.pop %v2594
        %v2596 = vmul.f32 %v2571, 1.442695
        %v2597 = vpow.pop %v2596
        %v2598 = vmul.f32 %v2572, 1.442695
        %v2599 = vpow.pop %v2598
        %v2600 = vmul.f32 %v2573, 1.442695
        %v2601 = vpow.pop %v2600
        %v2602 = vmul.f32 %v2574, 1.442695
        %v2603 = vpow.pop %v2602
        %v2604 = vmul.f32 %v2575, 1.442695
        %v2605 = vpow.pop %v2604
        %v2606 = vmul.f32 %v2576, 1.442695
        %v2607 = vpow.pop %v2606
        %v2608 = vmul.f32 %v2577, 1.442695
        %v2609 = vpow.pop %v2608
        %v2610 = vsel %vm2531, %v2579, 0.0
        %v2611 = vsel %vm2531, %v2583, 0.0
        %v2612 = vadd.f32 %v2610, %v2611
        %v2613 = vsel %vm2531, %v2587, 0.0
        %v2614 = vadd.f32 %v2612, %v2613
        %v2615 = vsel %vm2531, %v2591, 0.0
        %v2616 = vadd.f32 %v2614, %v2615
        %v2617 = vsel %vm2531, %v2595, 0.0
        %v2618 = vadd.f32 %v2616, %v2617
        %v2619 = vsel %vm2531, %v2599, 0.0
        %v2620 = vadd.f32 %v2618, %v2619
        %v2621 = vsel %vm2531, %v2603, 0.0
        %v2622 = vadd.f32 %v2620, %v2621
        %v2623 = vsel %vm2531, %v2607, 0.0
        %v2624 = vadd.f32 %v2622, %v2623
        %v2625 = vsel %vm2531, %v2581, 0.0
        %v2626 = vsel %vm2531, %v2585, 0.0
        %v2627 = vadd.f32 %v2625, %v2626
        %v2628 = vsel %vm2531, %v2589, 0.0
        %v2629 = vadd.f32 %v2627, %v2628
        %v2630 = vsel %vm2531, %v2593, 0.0
        %v2631 = vadd.f32 %v2629, %v2630
        %v2632 = vsel %vm2531, %v2597, 0.0
        %v2633 = vadd.f32 %v2631, %v2632
        %v2634 = vsel %vm2531, %v2601, 0.0
        %v2635 = vadd.f32 %v2633, %v2634
        %v2636 = vsel %vm2531, %v2605, 0.0
        %v2637 = vadd.f32 %v2635, %v2636
        %v2638 = vsel %vm2531, %v2609, 0.0
        %v2639 = vadd.f32 %v2637, %v2638
        %v2640 = vlog2.pop %v2624
        %v2641 = vmul.f32 %v2640, 0.6931472
        %v2642 = vlog2.pop %v2639
        %v2643 = vmul.f32 %v2642, 0.6931472
        %v2644 = vadd.f32 %v2546, %v2641
        %v2645 = vadd.f32 %v2561, %v2643
        %v2646 = vsub.f32 %v2515, %v2644
        %v2647 = vsub.f32 %v2516, %v2645
        %v2648 = vsub.f32 %v2517, %v2644
        %v2649 = vsub.f32 %v2518, %v2645
        %v2650 = vsub.f32 %v2519, %v2644
        %v2651 = vsub.f32 %v2520, %v2645
        %v2652 = vsub.f32 %v2521, %v2644
        %v2653 = vsub.f32 %v2522, %v2645
        %v2654 = vsub.f32 %v2523, %v2644
        %v2655 = vsub.f32 %v2524, %v2645
        %v2656 = vsub.f32 %v2525, %v2644
        %v2657 = vsub.f32 %v2526, %v2645
        %v2658 = vsub.f32 %v2527, %v2644
        %v2659 = vsub.f32 %v2528, %v2645
        %v2660 = vsub.f32 %v2529, %v2644
        %v2661 = vsub.f32 %v2530, %v2645
        %v2662 = vmul.f32 %v2646, 1.442695
        %v2663 = vpow.pop %v2662
        %v2664 = vmul.f32 %v2647, 1.442695
        %v2665 = vpow.pop %v2664
        %v2666 = vmul.f32 %v2648, 1.442695
        %v2667 = vpow.pop %v2666
        %v2668 = vmul.f32 %v2649, 1.442695
        %v2669 = vpow.pop %v2668
        %v2670 = vmul.f32 %v2650, 1.442695
        %v2671 = vpow.pop %v2670
        %v2672 = vmul.f32 %v2651, 1.442695
        %v2673 = vpow.pop %v2672
        %v2674 = vmul.f32 %v2652, 1.442695
        %v2675 = vpow.pop %v2674
        %v2676 = vmul.f32 %v2653, 1.442695
        %v2677 = vpow.pop %v2676
        %v2678 = vmul.f32 %v2654, 1.442695
        %v2679 = vpow.pop %v2678
        %v2680 = vmul.f32 %v2655, 1.442695
        %v2681 = vpow.pop %v2680
        %v2682 = vmul.f32 %v2656, 1.442695
        %v2683 = vpow.pop %v2682
        %v2684 = vmul.f32 %v2657, 1.442695
        %v2685 = vpow.pop %v2684
        %v2686 = vmul.f32 %v2658, 1.442695
        %v2687 = vpow.pop %v2686
        %v2688 = vmul.f32 %v2659, 1.442695
        %v2689 = vpow.pop %v2688
        %v2690 = vmul.f32 %v2660, 1.442695
        %v2691 = vpow.pop %v2690
        %v2692 = vmul.f32 %v2661, 1.442695
        %v2693 = vpow.pop %v2692
        %v2694 = vlaneseq
        %v2695 = vand.u32 %v2694, 127
        %vm2696 = vcmp.eq.s32.totalorder %v2695, 0
        %2698 = vset.pattern.permute.xlu0 0
        %2699 = vperm.xlu0 %2698, %v2663
        %v2700 = vpop.permute.xlu0 %2699
        %2703 = vset.pattern.permute.xlu0 0
        %2704 = vperm.xlu0 %2703, %v2665
        %v2705 = vpop.permute.xlu0 %2704
        %v2707 = vsel %vm2696, %v2700, 0.0
        %v2708 = vsel %vm2696, %v2705, 0.0
        %vm2709 = vcmp.eq.s32.totalorder %v2695, 1
        %2711 = vset.pattern.permute.xlu0 0
        %2712 = vperm.xlu0 %2711, %v2667
        %v2713 = vpop.permute.xlu0 %2712
        %2716 = vset.pattern.permute.xlu0 0
        %2717 = vperm.xlu0 %2716, %v2669
        %v2718 = vpop.permute.xlu0 %2717
        %v2720 = vsel %vm2709, %v2713, %v2707
        %v2721 = vsel %vm2709, %v2718, %v2708
        %vm2722 = vcmp.eq.s32.totalorder %v2695, 2
        %2724 = vset.pattern.permute.xlu0 0
        %2725 = vperm.xlu0 %2724, %v2671
        %v2726 = vpop.permute.xlu0 %2725
        %2729 = vset.pattern.permute.xlu0 0
        %2730 = vperm.xlu0 %2729, %v2673
        %v2731 = vpop.permute.xlu0 %2730
        %v2733 = vsel %vm2722, %v2726, %v2720
        %v2734 = vsel %vm2722, %v2731, %v2721
        %vm2735 = vcmp.eq.s32.totalorder %v2695, 3
        %2737 = vset.pattern.permute.xlu0 0
        %2738 = vperm.xlu0 %2737, %v2675
        %v2739 = vpop.permute.xlu0 %2738
        %2742 = vset.pattern.permute.xlu0 0
        %2743 = vperm.xlu0 %2742, %v2677
        %v2744 = vpop.permute.xlu0 %2743
        %v2746 = vsel %vm2735, %v2739, %v2733
        %v2747 = vsel %vm2735, %v2744, %v2734
        %vm2748 = vcmp.eq.s32.totalorder %v2695, 4
        %2750 = vset.pattern.permute.xlu0 0
        %2751 = vperm.xlu0 %2750, %v2679
        %v2752 = vpop.permute.xlu0 %2751
        %2755 = vset.pattern.permute.xlu0 0
        %2756 = vperm.xlu0 %2755, %v2681
        %v2757 = vpop.permute.xlu0 %2756
        %v2759 = vsel %vm2748, %v2752, %v2746
        %v2760 = vsel %vm2748, %v2757, %v2747
        %vm2761 = vcmp.eq.s32.totalorder %v2695, 5
        %2763 = vset.pattern.permute.xlu0 0
        %2764 = vperm.xlu0 %2763, %v2683
        %v2765 = vpop.permute.xlu0 %2764
        %2768 = vset.pattern.permute.xlu0 0
        %2769 = vperm.xlu0 %2768, %v2685
        %v2770 = vpop.permute.xlu0 %2769
        %v2772 = vsel %vm2761, %v2765, %v2759
        %v2773 = vsel %vm2761, %v2770, %v2760
        %vm2774 = vcmp.eq.s32.totalorder %v2695, 6
        %2776 = vset.pattern.permute.xlu0 0
        %2777 = vperm.xlu0 %2776, %v2687
        %v2778 = vpop.permute.xlu0 %2777
        %2781 = vset.pattern.permute.xlu0 0
        %2782 = vperm.xlu0 %2781, %v2689
        %v2783 = vpop.permute.xlu0 %2782
        %v2785 = vsel %vm2774, %v2778, %v2772
        %v2786 = vsel %vm2774, %v2783, %v2773
        %vm2787 = vcmp.eq.s32.totalorder %v2695, 7
        %2789 = vset.pattern.permute.xlu0 0
        %2790 = vperm.xlu0 %2789, %v2691
        %v2791 = vpop.permute.xlu0 %2790
        %2794 = vset.pattern.permute.xlu0 0
        %2795 = vperm.xlu0 %2794, %v2693
        %v2796 = vpop.permute.xlu0 %2795
        %v2798 = vsel %vm2787, %v2791, %v2785
        %v2799 = vsel %vm2787, %v2796, %v2786
        %v2800 = vmul.f32 %v2798, 0.5
        %v2801 = vmul.f32 %v2799, 0.5
        %v2802 = vadd.f32 %v2800, 0.0625
        %v2803 = vadd.f32 %v2801, 0.0625
        %v2804 = vlog2.pop %v2802
        %v2805 = vmul.f32 %v2804, 0.6931472
        %v2806 = vlog2.pop %v2803
        %v2807 = vmul.f32 %v2806, 0.6931472
        %v2808 = vld [vmem:[%s966] sm:$0xff]
        %v2809 = vld [vmem:[%s966 + $0x8] sm:$0xff]
        %v2810 = vld [vmem:[%s966 + $0x10] sm:$0xff]
        %v2811 = vld [vmem:[%s966 + $0x18] sm:$0xff]
        %v2812 = vld [vmem:[%s966 + $0x20] sm:$0xff]
        %v2813 = vld [vmem:[%s966 + $0x28] sm:$0xff]
        %v2814 = vld [vmem:[%s966 + $0x30] sm:$0xff]
        %v2815 = vld [vmem:[%s966 + $0x38] sm:$0xff]
        %v2816 = vld [vmem:[%s966 + $0x40] sm:$0xff]
        %v2817 = vld [vmem:[%s966 + $0x48] sm:$0xff]
        %v2818 = vld [vmem:[%s966 + $0x50] sm:$0xff]
        %v2819 = vld [vmem:[%s966 + $0x58] sm:$0xff]
        %v2820 = vld [vmem:[%s966 + $0x60] sm:$0xff]
        %v2821 = vld [vmem:[%s966 + $0x68] sm:$0xff]
        %v2822 = vld [vmem:[%s966 + $0x70] sm:$0xff]
        %v2823 = vld [vmem:[%s966 + $0x78] sm:$0xff]
        %v2824 = vadd.f32 %v2805, %v2808
        %v2825 = vadd.f32 %v2807, %v2809
        %v2826 = vadd.f32 %v2805, %v2810
        %v2827 = vadd.f32 %v2807, %v2811
        %v2828 = vadd.f32 %v2805, %v2812
        %v2829 = vadd.f32 %v2807, %v2813
        %v2830 = vadd.f32 %v2805, %v2814
        %v2831 = vadd.f32 %v2807, %v2815
        %v2832 = vadd.f32 %v2805, %v2816
        %v2833 = vadd.f32 %v2807, %v2817
        %v2834 = vadd.f32 %v2805, %v2818
        %v2835 = vadd.f32 %v2807, %v2819
        %v2836 = vadd.f32 %v2805, %v2820
        %v2837 = vadd.f32 %v2807, %v2821
        %v2838 = vadd.f32 %v2805, %v2822
        %v2839 = vadd.f32 %v2807, %v2823
        %vm2840 = vcmask 64512
        %v2841 = vsel %vm2840, %v2824, -inf
        %2842 = vmax.xlane.f32.xlu0 %v2841
        %v2843 = vpop.xlane.xlu0 %2842
        %v2844 = vsel %vm2840, %v2825, -inf
        %2845 = vmax.xlane.f32.xlu0 %v2844
        %v2846 = vpop.xlane.xlu0 %2845
        %v2847 = vsel %vm2840, %v2826, -inf
        %2848 = vmax.xlane.f32.xlu0 %v2847
        %v2849 = vpop.xlane.xlu0 %2848
        %v2850 = vsel %vm2840, %v2827, -inf
        %2851 = vmax.xlane.f32.xlu0 %v2850
        %v2852 = vpop.xlane.xlu0 %2851
        %v2853 = vsel %vm2840, %v2828, -inf
        %2854 = vmax.xlane.f32.xlu0 %v2853
        %v2855 = vpop.xlane.xlu0 %2854
        %v2856 = vsel %vm2840, %v2829, -inf
        %2857 = vmax.xlane.f32.xlu0 %v2856
        %v2858 = vpop.xlane.xlu0 %2857
        %v2859 = vsel %vm2840, %v2830, -inf
        %2860 = vmax.xlane.f32.xlu0 %v2859
        %v2861 = vpop.xlane.xlu0 %2860
        %v2862 = vsel %vm2840, %v2831, -inf
        %2863 = vmax.xlane.f32.xlu0 %v2862
        %v2864 = vpop.xlane.xlu0 %2863
        %v2865 = vsel %vm2840, %v2832, -inf
        %2866 = vmax.xlane.f32.xlu0 %v2865
        %v2867 = vpop.xlane.xlu0 %2866
        %v2868 = vsel %vm2840, %v2833, -inf
        %2869 = vmax.xlane.f32.xlu0 %v2868
        %v2870 = vpop.xlane.xlu0 %2869
        %v2871 = vsel %vm2840, %v2834, -inf
        %2872 = vmax.xlane.f32.xlu0 %v2871
        %v2873 = vpop.xlane.xlu0 %2872
        %v2874 = vsel %vm2840, %v2835, -inf
        %2875 = vmax.xlane.f32.xlu0 %v2874
        %v2876 = vpop.xlane.xlu0 %2875
        %v2877 = vsel %vm2840, %v2836, -inf
        %2878 = vmax.xlane.f32.xlu0 %v2877
        %v2879 = vpop.xlane.xlu0 %2878
        %v2880 = vsel %vm2840, %v2837, -inf
        %2881 = vmax.xlane.f32.xlu0 %v2880
        %v2882 = vpop.xlane.xlu0 %2881
        %v2883 = vsel %vm2840, %v2838, -inf
        %2884 = vmax.xlane.f32.xlu0 %v2883
        %v2885 = vpop.xlane.xlu0 %2884
        %v2886 = vsel %vm2840, %v2839, -inf
        %2887 = vmax.xlane.f32.xlu0 %v2886
        %v2888 = vpop.xlane.xlu0 %2887
        %vm2889 = vcmp.ge.f32.partialorder %v2824, %v2843
        %vm2890 = vcmp.ge.f32.partialorder %v2825, %v2846
        %vm2891 = vcmp.ge.f32.partialorder %v2826, %v2849
        %vm2892 = vcmp.ge.f32.partialorder %v2827, %v2852
        %vm2893 = vcmp.ge.f32.partialorder %v2828, %v2855
        %vm2894 = vcmp.ge.f32.partialorder %v2829, %v2858
        %vm2895 = vcmp.ge.f32.partialorder %v2830, %v2861
        %vm2896 = vcmp.ge.f32.partialorder %v2831, %v2864
        %vm2897 = vcmp.ge.f32.partialorder %v2832, %v2867
        %vm2898 = vcmp.ge.f32.partialorder %v2833, %v2870
        %vm2899 = vcmp.ge.f32.partialorder %v2834, %v2873
        %vm2900 = vcmp.ge.f32.partialorder %v2835, %v2876
        %vm2901 = vcmp.ge.f32.partialorder %v2836, %v2879
        %vm2902 = vcmp.ge.f32.partialorder %v2837, %v2882
        %vm2903 = vcmp.ge.f32.partialorder %v2838, %v2885
        %vm2904 = vcmp.ge.f32.partialorder %v2839, %v2888
        %v2905 = vcvt.s32.f32 %v2695
        %v2906 = vsel %vm2889, %v2905, 8.0
        %v2907 = vsel %vm2890, %v2905, 8.0
        %v2908 = vsel %vm2891, %v2905, 8.0
        %v2909 = vsel %vm2892, %v2905, 8.0
        %v2910 = vsel %vm2893, %v2905, 8.0
        %v2911 = vsel %vm2894, %v2905, 8.0
        %v2912 = vsel %vm2895, %v2905, 8.0
        %v2913 = vsel %vm2896, %v2905, 8.0
        %v2914 = vsel %vm2897, %v2905, 8.0
        %v2915 = vsel %vm2898, %v2905, 8.0
        %v2916 = vsel %vm2899, %v2905, 8.0
        %v2917 = vsel %vm2900, %v2905, 8.0
        %v2918 = vsel %vm2901, %v2905, 8.0
        %v2919 = vsel %vm2902, %v2905, 8.0
        %v2920 = vsel %vm2903, %v2905, 8.0
        %v2921 = vsel %vm2904, %v2905, 8.0
        %v2922 = vsel %vm2840, %v2906, inf
        %2923 = vmin.xlane.f32.xlu0 %v2922
        %v2924 = vpop.xlane.xlu0 %2923
        %v2925 = vsel %vm2840, %v2907, inf
        %2926 = vmin.xlane.f32.xlu0 %v2925
        %v2927 = vpop.xlane.xlu0 %2926
        %v2928 = vsel %vm2840, %v2908, inf
        %2929 = vmin.xlane.f32.xlu0 %v2928
        %v2930 = vpop.xlane.xlu0 %2929
        %v2931 = vsel %vm2840, %v2909, inf
        %2932 = vmin.xlane.f32.xlu0 %v2931
        %v2933 = vpop.xlane.xlu0 %2932
        %v2934 = vsel %vm2840, %v2910, inf
        %2935 = vmin.xlane.f32.xlu0 %v2934
        %v2936 = vpop.xlane.xlu0 %2935
        %v2937 = vsel %vm2840, %v2911, inf
        %2938 = vmin.xlane.f32.xlu0 %v2937
        %v2939 = vpop.xlane.xlu0 %2938
        %v2940 = vsel %vm2840, %v2912, inf
        %2941 = vmin.xlane.f32.xlu0 %v2940
        %v2942 = vpop.xlane.xlu0 %2941
        %v2943 = vsel %vm2840, %v2913, inf
        %2944 = vmin.xlane.f32.xlu0 %v2943
        %v2945 = vpop.xlane.xlu0 %2944
        %v2946 = vsel %vm2840, %v2914, inf
        %2947 = vmin.xlane.f32.xlu0 %v2946
        %v2948 = vpop.xlane.xlu0 %2947
        %v2949 = vsel %vm2840, %v2915, inf
        %2950 = vmin.xlane.f32.xlu0 %v2949
        %v2951 = vpop.xlane.xlu0 %2950
        %v2952 = vsel %vm2840, %v2916, inf
        %2953 = vmin.xlane.f32.xlu0 %v2952
        %v2954 = vpop.xlane.xlu0 %2953
        %v2955 = vsel %vm2840, %v2917, inf
        %2956 = vmin.xlane.f32.xlu0 %v2955
        %v2957 = vpop.xlane.xlu0 %2956
        %v2958 = vsel %vm2840, %v2918, inf
        %2959 = vmin.xlane.f32.xlu0 %v2958
        %v2960 = vpop.xlane.xlu0 %2959
        %v2961 = vsel %vm2840, %v2919, inf
        %2962 = vmin.xlane.f32.xlu0 %v2961
        %v2963 = vpop.xlane.xlu0 %2962
        %v2964 = vsel %vm2840, %v2920, inf
        %2965 = vmin.xlane.f32.xlu0 %v2964
        %v2966 = vpop.xlane.xlu0 %2965
        %v2967 = vsel %vm2840, %v2921, inf
        %2968 = vmin.xlane.f32.xlu0 %v2967
        %v2969 = vpop.xlane.xlu0 %2968
        %v2970 = vcvt.f32.s32.to.zero.pseudo %v2924
        %v2971 = vcvt.f32.s32.to.zero.pseudo %v2927
        %v2972 = vcvt.f32.s32.to.zero.pseudo %v2930
        %v2973 = vcvt.f32.s32.to.zero.pseudo %v2933
        %v2974 = vcvt.f32.s32.to.zero.pseudo %v2936
        %v2975 = vcvt.f32.s32.to.zero.pseudo %v2939
        %v2976 = vcvt.f32.s32.to.zero.pseudo %v2942
        %v2977 = vcvt.f32.s32.to.zero.pseudo %v2945
        %v2978 = vcvt.f32.s32.to.zero.pseudo %v2948
        %v2979 = vcvt.f32.s32.to.zero.pseudo %v2951
        %v2980 = vcvt.f32.s32.to.zero.pseudo %v2954
        %v2981 = vcvt.f32.s32.to.zero.pseudo %v2957
        %v2982 = vcvt.f32.s32.to.zero.pseudo %v2960
        %v2983 = vcvt.f32.s32.to.zero.pseudo %v2963
        %v2984 = vcvt.f32.s32.to.zero.pseudo %v2966
        %v2985 = vcvt.f32.s32.to.zero.pseudo %v2969
        %vm2986 = vcmp.eq.s32.totalorder %v2970, 0
        %vm2987 = vcmp.eq.s32.totalorder %v2971, 0
        %vm2988 = vcmp.eq.s32.totalorder %v2972, 0
        %vm2989 = vcmp.eq.s32.totalorder %v2973, 0
        %vm2990 = vcmp.eq.s32.totalorder %v2974, 0
        %vm2991 = vcmp.eq.s32.totalorder %v2975, 0
        %vm2992 = vcmp.eq.s32.totalorder %v2976, 0
        %vm2993 = vcmp.eq.s32.totalorder %v2977, 0
        %vm2994 = vcmp.eq.s32.totalorder %v2978, 0
        %vm2995 = vcmp.eq.s32.totalorder %v2979, 0
        %vm2996 = vcmp.eq.s32.totalorder %v2980, 0
        %vm2997 = vcmp.eq.s32.totalorder %v2981, 0
        %vm2998 = vcmp.eq.s32.totalorder %v2982, 0
        %vm2999 = vcmp.eq.s32.totalorder %v2983, 0
        %vm3000 = vcmp.eq.s32.totalorder %v2984, 0
        %vm3001 = vcmp.eq.s32.totalorder %v2985, 0
        %v3002 = vsel %vm2986, 1, 0
        %v3003 = vsel %vm2987, 1, 0
        %v3004 = vsel %vm2988, 1, 0
        %v3005 = vsel %vm2989, 1, 0
        %v3006 = vsel %vm2990, 1, 0
        %v3007 = vsel %vm2991, 1, 0
        %v3008 = vsel %vm2992, 1, 0
        %v3009 = vsel %vm2993, 1, 0
        %v3010 = vsel %vm2994, 1, 0
        %v3011 = vsel %vm2995, 1, 0
        %v3012 = vsel %vm2996, 1, 0
        %v3013 = vsel %vm2997, 1, 0
        %v3014 = vsel %vm2998, 1, 0
        %v3015 = vsel %vm2999, 1, 0
        %v3016 = vsel %vm3000, 1, 0
        %v3017 = vsel %vm3001, 1, 0
        %v3018 = vcvt.s32.f32 %v3002
        %v3019 = vcvt.s32.f32 %v3003
        %v3020 = vcvt.s32.f32 %v3004
        %v3021 = vcvt.s32.f32 %v3005
        %v3022 = vcvt.s32.f32 %v3006
        %v3023 = vcvt.s32.f32 %v3007
        %v3024 = vcvt.s32.f32 %v3008
        %v3025 = vcvt.s32.f32 %v3009
        %v3026 = vcvt.s32.f32 %v3010
        %v3027 = vcvt.s32.f32 %v3011
        %v3028 = vcvt.s32.f32 %v3012
        %v3029 = vcvt.s32.f32 %v3013
        %v3030 = vcvt.s32.f32 %v3014
        %v3031 = vcvt.s32.f32 %v3015
        %v3032 = vcvt.s32.f32 %v3016
        %v3033 = vcvt.s32.f32 %v3017
        %v3034 = vmul.f32 %v3018, %v2396
        %v3035 = vmul.f32 %v3019, %v2397
        %v3036 = vmul.f32 %v3020, %v2396
        %v3037 = vmul.f32 %v3021, %v2397
        %v3038 = vmul.f32 %v3022, %v2396
        %v3039 = vmul.f32 %v3023, %v2397
        %v3040 = vmul.f32 %v3024, %v2396
        %v3041 = vmul.f32 %v3025, %v2397
        %v3042 = vmul.f32 %v3026, %v2396
        %v3043 = vmul.f32 %v3027, %v2397
        %v3044 = vmul.f32 %v3028, %v2396
        %v3045 = vmul.f32 %v3029, %v2397
        %v3046 = vmul.f32 %v3030, %v2396
        %v3047 = vmul.f32 %v3031, %v2397
        %v3048 = vmul.f32 %v3032, %v2396
        %v3049 = vmul.f32 %v3033, %v2397
        %v3050 = vadd.f32 %v3034, 0.0
        %v3051 = vadd.f32 %v3035, 0.0
        %v3052 = vadd.f32 %v3036, 0.0
        %v3053 = vadd.f32 %v3037, 0.0
        %v3054 = vadd.f32 %v3038, 0.0
        %v3055 = vadd.f32 %v3039, 0.0
        %v3056 = vadd.f32 %v3040, 0.0
        %v3057 = vadd.f32 %v3041, 0.0
        %v3058 = vadd.f32 %v3042, 0.0
        %v3059 = vadd.f32 %v3043, 0.0
        %v3060 = vadd.f32 %v3044, 0.0
        %v3061 = vadd.f32 %v3045, 0.0
        %v3062 = vadd.f32 %v3046, 0.0
        %v3063 = vadd.f32 %v3047, 0.0
        %v3064 = vadd.f32 %v3048, 0.0
        %v3065 = vadd.f32 %v3049, 0.0
        %v3066 = vmul.f32 %v3018, %v2663
        %v3067 = vmul.f32 %v3019, %v2665
        %v3068 = vmul.f32 %v3020, %v2663
        %v3069 = vmul.f32 %v3021, %v2665
        %v3070 = vmul.f32 %v3022, %v2663
        %v3071 = vmul.f32 %v3023, %v2665
        %v3072 = vmul.f32 %v3024, %v2663
        %v3073 = vmul.f32 %v3025, %v2665
        %v3074 = vmul.f32 %v3026, %v2663
        %v3075 = vmul.f32 %v3027, %v2665
        %v3076 = vmul.f32 %v3028, %v2663
        %v3077 = vmul.f32 %v3029, %v2665
        %v3078 = vmul.f32 %v3030, %v2663
        %v3079 = vmul.f32 %v3031, %v2665
        %v3080 = vmul.f32 %v3032, %v2663
        %v3081 = vmul.f32 %v3033, %v2665
        %v3082 = vadd.f32 %v3066, 0.0
        %v3083 = vadd.f32 %v3067, 0.0
        %v3084 = vadd.f32 %v3068, 0.0
        %v3085 = vadd.f32 %v3069, 0.0
        %v3086 = vadd.f32 %v3070, 0.0
        %v3087 = vadd.f32 %v3071, 0.0
        %v3088 = vadd.f32 %v3072, 0.0
        %v3089 = vadd.f32 %v3073, 0.0
        %v3090 = vadd.f32 %v3074, 0.0
        %v3091 = vadd.f32 %v3075, 0.0
        %v3092 = vadd.f32 %v3076, 0.0
        %v3093 = vadd.f32 %v3077, 0.0
        %v3094 = vadd.f32 %v3078, 0.0
        %v3095 = vadd.f32 %v3079, 0.0
        %v3096 = vadd.f32 %v3080, 0.0
        %v3097 = vadd.f32 %v3081, 0.0
        %vm3098 = vcmp.eq.s32.totalorder %v2970, 1
        %vm3099 = vcmp.eq.s32.totalorder %v2971, 1
        %vm3100 = vcmp.eq.s32.totalorder %v2972, 1
        %vm3101 = vcmp.eq.s32.totalorder %v2973, 1
        %vm3102 = vcmp.eq.s32.totalorder %v2974, 1
        %vm3103 = vcmp.eq.s32.totalorder %v2975, 1
        %vm3104 = vcmp.eq.s32.totalorder %v2976, 1
        %vm3105 = vcmp.eq.s32.totalorder %v2977, 1
        %vm3106 = vcmp.eq.s32.totalorder %v2978, 1
        %vm3107 = vcmp.eq.s32.totalorder %v2979, 1
        %vm3108 = vcmp.eq.s32.totalorder %v2980, 1
        %vm3109 = vcmp.eq.s32.totalorder %v2981, 1
        %vm3110 = vcmp.eq.s32.totalorder %v2982, 1
        %vm3111 = vcmp.eq.s32.totalorder %v2983, 1
        %vm3112 = vcmp.eq.s32.totalorder %v2984, 1
        %vm3113 = vcmp.eq.s32.totalorder %v2985, 1
        %v3114 = vsel %vm3098, 1, 0
        %v3115 = vsel %vm3099, 1, 0
        %v3116 = vsel %vm3100, 1, 0
        %v3117 = vsel %vm3101, 1, 0
        %v3118 = vsel %vm3102, 1, 0
        %v3119 = vsel %vm3103, 1, 0
        %v3120 = vsel %vm3104, 1, 0
        %v3121 = vsel %vm3105, 1, 0
        %v3122 = vsel %vm3106, 1, 0
        %v3123 = vsel %vm3107, 1, 0
        %v3124 = vsel %vm3108, 1, 0
        %v3125 = vsel %vm3109, 1, 0
        %v3126 = vsel %vm3110, 1, 0
        %v3127 = vsel %vm3111, 1, 0
        %v3128 = vsel %vm3112, 1, 0
        %v3129 = vsel %vm3113, 1, 0
        %v3130 = vcvt.s32.f32 %v3114
        %v3131 = vcvt.s32.f32 %v3115
        %v3132 = vcvt.s32.f32 %v3116
        %v3133 = vcvt.s32.f32 %v3117
        %v3134 = vcvt.s32.f32 %v3118
        %v3135 = vcvt.s32.f32 %v3119
        %v3136 = vcvt.s32.f32 %v3120
        %v3137 = vcvt.s32.f32 %v3121
        %v3138 = vcvt.s32.f32 %v3122
        %v3139 = vcvt.s32.f32 %v3123
        %v3140 = vcvt.s32.f32 %v3124
        %v3141 = vcvt.s32.f32 %v3125
        %v3142 = vcvt.s32.f32 %v3126
        %v3143 = vcvt.s32.f32 %v3127
        %v3144 = vcvt.s32.f32 %v3128
        %v3145 = vcvt.s32.f32 %v3129
        %v3146 = vmul.f32 %v3130, %v2398
        %v3147 = vmul.f32 %v3131, %v2399
        %v3148 = vmul.f32 %v3132, %v2398
        %v3149 = vmul.f32 %v3133, %v2399
        %v3150 = vmul.f32 %v3134, %v2398
        %v3151 = vmul.f32 %v3135, %v2399
        %v3152 = vmul.f32 %v3136, %v2398
        %v3153 = vmul.f32 %v3137, %v2399
        %v3154 = vmul.f32 %v3138, %v2398
        %v3155 = vmul.f32 %v3139, %v2399
        %v3156 = vmul.f32 %v3140, %v2398
        %v3157 = vmul.f32 %v3141, %v2399
        %v3158 = vmul.f32 %v3142, %v2398
        %v3159 = vmul.f32 %v3143, %v2399
        %v3160 = vmul.f32 %v3144, %v2398
        %v3161 = vmul.f32 %v3145, %v2399
        %v3162 = vadd.f32 %v3050, %v3146
        %v3163 = vadd.f32 %v3051, %v3147
        %v3164 = vadd.f32 %v3052, %v3148
        %v3165 = vadd.f32 %v3053, %v3149
        %v3166 = vadd.f32 %v3054, %v3150
        %v3167 = vadd.f32 %v3055, %v3151
        %v3168 = vadd.f32 %v3056, %v3152
        %v3169 = vadd.f32 %v3057, %v3153
        %v3170 = vadd.f32 %v3058, %v3154
        %v3171 = vadd.f32 %v3059, %v3155
        %v3172 = vadd.f32 %v3060, %v3156
        %v3173 = vadd.f32 %v3061, %v3157
        %v3174 = vadd.f32 %v3062, %v3158
        %v3175 = vadd.f32 %v3063, %v3159
        %v3176 = vadd.f32 %v3064, %v3160
        %v3177 = vadd.f32 %v3065, %v3161
        %v3178 = vmul.f32 %v3130, %v2667
        %v3179 = vmul.f32 %v3131, %v2669
        %v3180 = vmul.f32 %v3132, %v2667
        %v3181 = vmul.f32 %v3133, %v2669
        %v3182 = vmul.f32 %v3134, %v2667
        %v3183 = vmul.f32 %v3135, %v2669
        %v3184 = vmul.f32 %v3136, %v2667
        %v3185 = vmul.f32 %v3137, %v2669
        %v3186 = vmul.f32 %v3138, %v2667
        %v3187 = vmul.f32 %v3139, %v2669
        %v3188 = vmul.f32 %v3140, %v2667
        %v3189 = vmul.f32 %v3141, %v2669
        %v3190 = vmul.f32 %v3142, %v2667
        %v3191 = vmul.f32 %v3143, %v2669
        %v3192 = vmul.f32 %v3144, %v2667
        %v3193 = vmul.f32 %v3145, %v2669
        %v3194 = vadd.f32 %v3082, %v3178
        %v3195 = vadd.f32 %v3083, %v3179
        %v3196 = vadd.f32 %v3084, %v3180
        %v3197 = vadd.f32 %v3085, %v3181
        %v3198 = vadd.f32 %v3086, %v3182
        %v3199 = vadd.f32 %v3087, %v3183
        %v3200 = vadd.f32 %v3088, %v3184
        %v3201 = vadd.f32 %v3089, %v3185
        %v3202 = vadd.f32 %v3090, %v3186
        %v3203 = vadd.f32 %v3091, %v3187
        %v3204 = vadd.f32 %v3092, %v3188
        %v3205 = vadd.f32 %v3093, %v3189
        %v3206 = vadd.f32 %v3094, %v3190
        %v3207 = vadd.f32 %v3095, %v3191
        %v3208 = vadd.f32 %v3096, %v3192
        %v3209 = vadd.f32 %v3097, %v3193
        %vm3210 = vcmp.eq.s32.totalorder %v2970, 2
        %vm3211 = vcmp.eq.s32.totalorder %v2971, 2
        %vm3212 = vcmp.eq.s32.totalorder %v2972, 2
        %vm3213 = vcmp.eq.s32.totalorder %v2973, 2
        %vm3214 = vcmp.eq.s32.totalorder %v2974, 2
        %vm3215 = vcmp.eq.s32.totalorder %v2975, 2
        %vm3216 = vcmp.eq.s32.totalorder %v2976, 2
        %vm3217 = vcmp.eq.s32.totalorder %v2977, 2
        %vm3218 = vcmp.eq.s32.totalorder %v2978, 2
        %vm3219 = vcmp.eq.s32.totalorder %v2979, 2
        %vm3220 = vcmp.eq.s32.totalorder %v2980, 2
        %vm3221 = vcmp.eq.s32.totalorder %v2981, 2
        %vm3222 = vcmp.eq.s32.totalorder %v2982, 2
        %vm3223 = vcmp.eq.s32.totalorder %v2983, 2
        %vm3224 = vcmp.eq.s32.totalorder %v2984, 2
        %vm3225 = vcmp.eq.s32.totalorder %v2985, 2
        %v3226 = vsel %vm3210, 1, 0
        %v3227 = vsel %vm3211, 1, 0
        %v3228 = vsel %vm3212, 1, 0
        %v3229 = vsel %vm3213, 1, 0
        %v3230 = vsel %vm3214, 1, 0
        %v3231 = vsel %vm3215, 1, 0
        %v3232 = vsel %vm3216, 1, 0
        %v3233 = vsel %vm3217, 1, 0
        %v3234 = vsel %vm3218, 1, 0
        %v3235 = vsel %vm3219, 1, 0
        %v3236 = vsel %vm3220, 1, 0
        %v3237 = vsel %vm3221, 1, 0
        %v3238 = vsel %vm3222, 1, 0
        %v3239 = vsel %vm3223, 1, 0
        %v3240 = vsel %vm3224, 1, 0
        %v3241 = vsel %vm3225, 1, 0
        %v3242 = vcvt.s32.f32 %v3226
        %v3243 = vcvt.s32.f32 %v3227
        %v3244 = vcvt.s32.f32 %v3228
        %v3245 = vcvt.s32.f32 %v3229
        %v3246 = vcvt.s32.f32 %v3230
        %v3247 = vcvt.s32.f32 %v3231
        %v3248 = vcvt.s32.f32 %v3232
        %v3249 = vcvt.s32.f32 %v3233
        %v3250 = vcvt.s32.f32 %v3234
        %v3251 = vcvt.s32.f32 %v3235
        %v3252 = vcvt.s32.f32 %v3236
        %v3253 = vcvt.s32.f32 %v3237
        %v3254 = vcvt.s32.f32 %v3238
        %v3255 = vcvt.s32.f32 %v3239
        %v3256 = vcvt.s32.f32 %v3240
        %v3257 = vcvt.s32.f32 %v3241
        %v3258 = vmul.f32 %v3242, %v2400
        %v3259 = vmul.f32 %v3243, %v2401
        %v3260 = vmul.f32 %v3244, %v2400
        %v3261 = vmul.f32 %v3245, %v2401
        %v3262 = vmul.f32 %v3246, %v2400
        %v3263 = vmul.f32 %v3247, %v2401
        %v3264 = vmul.f32 %v3248, %v2400
        %v3265 = vmul.f32 %v3249, %v2401
        %v3266 = vmul.f32 %v3250, %v2400
        %v3267 = vmul.f32 %v3251, %v2401
        %v3268 = vmul.f32 %v3252, %v2400
        %v3269 = vmul.f32 %v3253, %v2401
        %v3270 = vmul.f32 %v3254, %v2400
        %v3271 = vmul.f32 %v3255, %v2401
        %v3272 = vmul.f32 %v3256, %v2400
        %v3273 = vmul.f32 %v3257, %v2401
        %v3274 = vadd.f32 %v3162, %v3258
        %v3275 = vadd.f32 %v3163, %v3259
        %v3276 = vadd.f32 %v3164, %v3260
        %v3277 = vadd.f32 %v3165, %v3261
        %v3278 = vadd.f32 %v3166, %v3262
        %v3279 = vadd.f32 %v3167, %v3263
        %v3280 = vadd.f32 %v3168, %v3264
        %v3281 = vadd.f32 %v3169, %v3265
        %v3282 = vadd.f32 %v3170, %v3266
        %v3283 = vadd.f32 %v3171, %v3267
        %v3284 = vadd.f32 %v3172, %v3268
        %v3285 = vadd.f32 %v3173, %v3269
        %v3286 = vadd.f32 %v3174, %v3270
        %v3287 = vadd.f32 %v3175, %v3271
        %v3288 = vadd.f32 %v3176, %v3272
        %v3289 = vadd.f32 %v3177, %v3273
        %v3290 = vmul.f32 %v3242, %v2671
        %v3291 = vmul.f32 %v3243, %v2673
        %v3292 = vmul.f32 %v3244, %v2671
        %v3293 = vmul.f32 %v3245, %v2673
        %v3294 = vmul.f32 %v3246, %v2671
        %v3295 = vmul.f32 %v3247, %v2673
        %v3296 = vmul.f32 %v3248, %v2671
        %v3297 = vmul.f32 %v3249, %v2673
        %v3298 = vmul.f32 %v3250, %v2671
        %v3299 = vmul.f32 %v3251, %v2673
        %v3300 = vmul.f32 %v3252, %v2671
        %v3301 = vmul.f32 %v3253, %v2673
        %v3302 = vmul.f32 %v3254, %v2671
        %v3303 = vmul.f32 %v3255, %v2673
        %v3304 = vmul.f32 %v3256, %v2671
        %v3305 = vmul.f32 %v3257, %v2673
        %v3306 = vadd.f32 %v3194, %v3290
        %v3307 = vadd.f32 %v3195, %v3291
        %v3308 = vadd.f32 %v3196, %v3292
        %v3309 = vadd.f32 %v3197, %v3293
        %v3310 = vadd.f32 %v3198, %v3294
        %v3311 = vadd.f32 %v3199, %v3295
        %v3312 = vadd.f32 %v3200, %v3296
        %v3313 = vadd.f32 %v3201, %v3297
        %v3314 = vadd.f32 %v3202, %v3298
        %v3315 = vadd.f32 %v3203, %v3299
        %v3316 = vadd.f32 %v3204, %v3300
        %v3317 = vadd.f32 %v3205, %v3301
        %v3318 = vadd.f32 %v3206, %v3302
        %v3319 = vadd.f32 %v3207, %v3303
        %v3320 = vadd.f32 %v3208, %v3304
        %v3321 = vadd.f32 %v3209, %v3305
        %vm3322 = vcmp.eq.s32.totalorder %v2970, 3
        %vm3323 = vcmp.eq.s32.totalorder %v2971, 3
        %vm3324 = vcmp.eq.s32.totalorder %v2972, 3
        %vm3325 = vcmp.eq.s32.totalorder %v2973, 3
        %vm3326 = vcmp.eq.s32.totalorder %v2974, 3
        %vm3327 = vcmp.eq.s32.totalorder %v2975, 3
        %vm3328 = vcmp.eq.s32.totalorder %v2976, 3
        %vm3329 = vcmp.eq.s32.totalorder %v2977, 3
        %vm3330 = vcmp.eq.s32.totalorder %v2978, 3
        %vm3331 = vcmp.eq.s32.totalorder %v2979, 3
        %vm3332 = vcmp.eq.s32.totalorder %v2980, 3
        %vm3333 = vcmp.eq.s32.totalorder %v2981, 3
        %vm3334 = vcmp.eq.s32.totalorder %v2982, 3
        %vm3335 = vcmp.eq.s32.totalorder %v2983, 3
        %vm3336 = vcmp.eq.s32.totalorder %v2984, 3
        %vm3337 = vcmp.eq.s32.totalorder %v2985, 3
        %v3338 = vsel %vm3322, 1, 0
        %v3339 = vsel %vm3323, 1, 0
        %v3340 = vsel %vm3324, 1, 0
        %v3341 = vsel %vm3325, 1, 0
        %v3342 = vsel %vm3326, 1, 0
        %v3343 = vsel %vm3327, 1, 0
        %v3344 = vsel %vm3328, 1, 0
        %v3345 = vsel %vm3329, 1, 0
        %v3346 = vsel %vm3330, 1, 0
        %v3347 = vsel %vm3331, 1, 0
        %v3348 = vsel %vm3332, 1, 0
        %v3349 = vsel %vm3333, 1, 0
        %v3350 = vsel %vm3334, 1, 0
        %v3351 = vsel %vm3335, 1, 0
        %v3352 = vsel %vm3336, 1, 0
        %v3353 = vsel %vm3337, 1, 0
        %v3354 = vcvt.s32.f32 %v3338
        %v3355 = vcvt.s32.f32 %v3339
        %v3356 = vcvt.s32.f32 %v3340
        %v3357 = vcvt.s32.f32 %v3341
        %v3358 = vcvt.s32.f32 %v3342
        %v3359 = vcvt.s32.f32 %v3343
        %v3360 = vcvt.s32.f32 %v3344
        %v3361 = vcvt.s32.f32 %v3345
        %v3362 = vcvt.s32.f32 %v3346
        %v3363 = vcvt.s32.f32 %v3347
        %v3364 = vcvt.s32.f32 %v3348
        %v3365 = vcvt.s32.f32 %v3349
        %v3366 = vcvt.s32.f32 %v3350
        %v3367 = vcvt.s32.f32 %v3351
        %v3368 = vcvt.s32.f32 %v3352
        %v3369 = vcvt.s32.f32 %v3353
        %v3370 = vmul.f32 %v3354, %v2402
        %v3371 = vmul.f32 %v3355, %v2403
        %v3372 = vmul.f32 %v3356, %v2402
        %v3373 = vmul.f32 %v3357, %v2403
        %v3374 = vmul.f32 %v3358, %v2402
        %v3375 = vmul.f32 %v3359, %v2403
        %v3376 = vmul.f32 %v3360, %v2402
        %v3377 = vmul.f32 %v3361, %v2403
        %v3378 = vmul.f32 %v3362, %v2402
        %v3379 = vmul.f32 %v3363, %v2403
        %v3380 = vmul.f32 %v3364, %v2402
        %v3381 = vmul.f32 %v3365, %v2403
        %v3382 = vmul.f32 %v3366, %v2402
        %v3383 = vmul.f32 %v3367, %v2403
        %v3384 = vmul.f32 %v3368, %v2402
        %v3385 = vmul.f32 %v3369, %v2403
        %v3386 = vadd.f32 %v3274, %v3370
        %v3387 = vadd.f32 %v3275, %v3371
        %v3388 = vadd.f32 %v3276, %v3372
        %v3389 = vadd.f32 %v3277, %v3373
        %v3390 = vadd.f32 %v3278, %v3374
        %v3391 = vadd.f32 %v3279, %v3375
        %v3392 = vadd.f32 %v3280, %v3376
        %v3393 = vadd.f32 %v3281, %v3377
        %v3394 = vadd.f32 %v3282, %v3378
        %v3395 = vadd.f32 %v3283, %v3379
        %v3396 = vadd.f32 %v3284, %v3380
        %v3397 = vadd.f32 %v3285, %v3381
        %v3398 = vadd.f32 %v3286, %v3382
        %v3399 = vadd.f32 %v3287, %v3383
        %v3400 = vadd.f32 %v3288, %v3384
        %v3401 = vadd.f32 %v3289, %v3385
        %v3402 = vmul.f32 %v3354, %v2675
        %v3403 = vmul.f32 %v3355, %v2677
        %v3404 = vmul.f32 %v3356, %v2675
        %v3405 = vmul.f32 %v3357, %v2677
        %v3406 = vmul.f32 %v3358, %v2675
        %v3407 = vmul.f32 %v3359, %v2677
        %v3408 = vmul.f32 %v3360, %v2675
        %v3409 = vmul.f32 %v3361, %v2677
        %v3410 = vmul.f32 %v3362, %v2675
        %v3411 = vmul.f32 %v3363, %v2677
        %v3412 = vmul.f32 %v3364, %v2675
        %v3413 = vmul.f32 %v3365, %v2677
        %v3414 = vmul.f32 %v3366, %v2675
        %v3415 = vmul.f32 %v3367, %v2677
        %v3416 = vmul.f32 %v3368, %v2675
        %v3417 = vmul.f32 %v3369, %v2677
        %v3418 = vadd.f32 %v3306, %v3402
        %v3419 = vadd.f32 %v3307, %v3403
        %v3420 = vadd.f32 %v3308, %v3404
        %v3421 = vadd.f32 %v3309, %v3405
        %v3422 = vadd.f32 %v3310, %v3406
        %v3423 = vadd.f32 %v3311, %v3407
        %v3424 = vadd.f32 %v3312, %v3408
        %v3425 = vadd.f32 %v3313, %v3409
        %v3426 = vadd.f32 %v3314, %v3410
        %v3427 = vadd.f32 %v3315, %v3411
        %v3428 = vadd.f32 %v3316, %v3412
        %v3429 = vadd.f32 %v3317, %v3413
        %v3430 = vadd.f32 %v3318, %v3414
        %v3431 = vadd.f32 %v3319, %v3415
        %v3432 = vadd.f32 %v3320, %v3416
        %v3433 = vadd.f32 %v3321, %v3417
        %vm3434 = vcmp.eq.s32.totalorder %v2970, 4
        %vm3435 = vcmp.eq.s32.totalorder %v2971, 4
        %vm3436 = vcmp.eq.s32.totalorder %v2972, 4
        %vm3437 = vcmp.eq.s32.totalorder %v2973, 4
        %vm3438 = vcmp.eq.s32.totalorder %v2974, 4
        %vm3439 = vcmp.eq.s32.totalorder %v2975, 4
        %vm3440 = vcmp.eq.s32.totalorder %v2976, 4
        %vm3441 = vcmp.eq.s32.totalorder %v2977, 4
        %vm3442 = vcmp.eq.s32.totalorder %v2978, 4
        %vm3443 = vcmp.eq.s32.totalorder %v2979, 4
        %vm3444 = vcmp.eq.s32.totalorder %v2980, 4
        %vm3445 = vcmp.eq.s32.totalorder %v2981, 4
        %vm3446 = vcmp.eq.s32.totalorder %v2982, 4
        %vm3447 = vcmp.eq.s32.totalorder %v2983, 4
        %vm3448 = vcmp.eq.s32.totalorder %v2984, 4
        %vm3449 = vcmp.eq.s32.totalorder %v2985, 4
        %v3450 = vsel %vm3434, 1, 0
        %v3451 = vsel %vm3435, 1, 0
        %v3452 = vsel %vm3436, 1, 0
        %v3453 = vsel %vm3437, 1, 0
        %v3454 = vsel %vm3438, 1, 0
        %v3455 = vsel %vm3439, 1, 0
        %v3456 = vsel %vm3440, 1, 0
        %v3457 = vsel %vm3441, 1, 0
        %v3458 = vsel %vm3442, 1, 0
        %v3459 = vsel %vm3443, 1, 0
        %v3460 = vsel %vm3444, 1, 0
        %v3461 = vsel %vm3445, 1, 0
        %v3462 = vsel %vm3446, 1, 0
        %v3463 = vsel %vm3447, 1, 0
        %v3464 = vsel %vm3448, 1, 0
        %v3465 = vsel %vm3449, 1, 0
        %v3466 = vcvt.s32.f32 %v3450
        %v3467 = vcvt.s32.f32 %v3451
        %v3468 = vcvt.s32.f32 %v3452
        %v3469 = vcvt.s32.f32 %v3453
        %v3470 = vcvt.s32.f32 %v3454
        %v3471 = vcvt.s32.f32 %v3455
        %v3472 = vcvt.s32.f32 %v3456
        %v3473 = vcvt.s32.f32 %v3457
        %v3474 = vcvt.s32.f32 %v3458
        %v3475 = vcvt.s32.f32 %v3459
        %v3476 = vcvt.s32.f32 %v3460
        %v3477 = vcvt.s32.f32 %v3461
        %v3478 = vcvt.s32.f32 %v3462
        %v3479 = vcvt.s32.f32 %v3463
        %v3480 = vcvt.s32.f32 %v3464
        %v3481 = vcvt.s32.f32 %v3465
        %v3482 = vmul.f32 %v3466, %v2404
        %v3483 = vmul.f32 %v3467, %v2405
        %v3484 = vmul.f32 %v3468, %v2404
        %v3485 = vmul.f32 %v3469, %v2405
        %v3486 = vmul.f32 %v3470, %v2404
        %v3487 = vmul.f32 %v3471, %v2405
        %v3488 = vmul.f32 %v3472, %v2404
        %v3489 = vmul.f32 %v3473, %v2405
        %v3490 = vmul.f32 %v3474, %v2404
        %v3491 = vmul.f32 %v3475, %v2405
        %v3492 = vmul.f32 %v3476, %v2404
        %v3493 = vmul.f32 %v3477, %v2405
        %v3494 = vmul.f32 %v3478, %v2404
        %v3495 = vmul.f32 %v3479, %v2405
        %v3496 = vmul.f32 %v3480, %v2404
        %v3497 = vmul.f32 %v3481, %v2405
        %v3498 = vadd.f32 %v3386, %v3482
        %v3499 = vadd.f32 %v3387, %v3483
        %v3500 = vadd.f32 %v3388, %v3484
        %v3501 = vadd.f32 %v3389, %v3485
        %v3502 = vadd.f32 %v3390, %v3486
        %v3503 = vadd.f32 %v3391, %v3487
        %v3504 = vadd.f32 %v3392, %v3488
        %v3505 = vadd.f32 %v3393, %v3489
        %v3506 = vadd.f32 %v3394, %v3490
        %v3507 = vadd.f32 %v3395, %v3491
        %v3508 = vadd.f32 %v3396, %v3492
        %v3509 = vadd.f32 %v3397, %v3493
        %v3510 = vadd.f32 %v3398, %v3494
        %v3511 = vadd.f32 %v3399, %v3495
        %v3512 = vadd.f32 %v3400, %v3496
        %v3513 = vadd.f32 %v3401, %v3497
        %v3514 = vmul.f32 %v3466, %v2679
        %v3515 = vmul.f32 %v3467, %v2681
        %v3516 = vmul.f32 %v3468, %v2679
        %v3517 = vmul.f32 %v3469, %v2681
        %v3518 = vmul.f32 %v3470, %v2679
        %v3519 = vmul.f32 %v3471, %v2681
        %v3520 = vmul.f32 %v3472, %v2679
        %v3521 = vmul.f32 %v3473, %v2681
        %v3522 = vmul.f32 %v3474, %v2679
        %v3523 = vmul.f32 %v3475, %v2681
        %v3524 = vmul.f32 %v3476, %v2679
        %v3525 = vmul.f32 %v3477, %v2681
        %v3526 = vmul.f32 %v3478, %v2679
        %v3527 = vmul.f32 %v3479, %v2681
        %v3528 = vmul.f32 %v3480, %v2679
        %v3529 = vmul.f32 %v3481, %v2681
        %v3530 = vadd.f32 %v3418, %v3514
        %v3531 = vadd.f32 %v3419, %v3515
        %v3532 = vadd.f32 %v3420, %v3516
        %v3533 = vadd.f32 %v3421, %v3517
        %v3534 = vadd.f32 %v3422, %v3518
        %v3535 = vadd.f32 %v3423, %v3519
        %v3536 = vadd.f32 %v3424, %v3520
        %v3537 = vadd.f32 %v3425, %v3521
        %v3538 = vadd.f32 %v3426, %v3522
        %v3539 = vadd.f32 %v3427, %v3523
        %v3540 = vadd.f32 %v3428, %v3524
        %v3541 = vadd.f32 %v3429, %v3525
        %v3542 = vadd.f32 %v3430, %v3526
        %v3543 = vadd.f32 %v3431, %v3527
        %v3544 = vadd.f32 %v3432, %v3528
        %v3545 = vadd.f32 %v3433, %v3529
        %vm3546 = vcmp.eq.s32.totalorder %v2970, 5
        %vm3547 = vcmp.eq.s32.totalorder %v2971, 5
        %vm3548 = vcmp.eq.s32.totalorder %v2972, 5
        %vm3549 = vcmp.eq.s32.totalorder %v2973, 5
        %vm3550 = vcmp.eq.s32.totalorder %v2974, 5
        %vm3551 = vcmp.eq.s32.totalorder %v2975, 5
        %vm3552 = vcmp.eq.s32.totalorder %v2976, 5
        %vm3553 = vcmp.eq.s32.totalorder %v2977, 5
        %vm3554 = vcmp.eq.s32.totalorder %v2978, 5
        %vm3555 = vcmp.eq.s32.totalorder %v2979, 5
        %vm3556 = vcmp.eq.s32.totalorder %v2980, 5
        %vm3557 = vcmp.eq.s32.totalorder %v2981, 5
        %vm3558 = vcmp.eq.s32.totalorder %v2982, 5
        %vm3559 = vcmp.eq.s32.totalorder %v2983, 5
        %vm3560 = vcmp.eq.s32.totalorder %v2984, 5
        %vm3561 = vcmp.eq.s32.totalorder %v2985, 5
        %v3562 = vsel %vm3546, 1, 0
        %v3563 = vsel %vm3547, 1, 0
        %v3564 = vsel %vm3548, 1, 0
        %v3565 = vsel %vm3549, 1, 0
        %v3566 = vsel %vm3550, 1, 0
        %v3567 = vsel %vm3551, 1, 0
        %v3568 = vsel %vm3552, 1, 0
        %v3569 = vsel %vm3553, 1, 0
        %v3570 = vsel %vm3554, 1, 0
        %v3571 = vsel %vm3555, 1, 0
        %v3572 = vsel %vm3556, 1, 0
        %v3573 = vsel %vm3557, 1, 0
        %v3574 = vsel %vm3558, 1, 0
        %v3575 = vsel %vm3559, 1, 0
        %v3576 = vsel %vm3560, 1, 0
        %v3577 = vsel %vm3561, 1, 0
        %v3578 = vcvt.s32.f32 %v3562
        %v3579 = vcvt.s32.f32 %v3563
        %v3580 = vcvt.s32.f32 %v3564
        %v3581 = vcvt.s32.f32 %v3565
        %v3582 = vcvt.s32.f32 %v3566
        %v3583 = vcvt.s32.f32 %v3567
        %v3584 = vcvt.s32.f32 %v3568
        %v3585 = vcvt.s32.f32 %v3569
        %v3586 = vcvt.s32.f32 %v3570
        %v3587 = vcvt.s32.f32 %v3571
        %v3588 = vcvt.s32.f32 %v3572
        %v3589 = vcvt.s32.f32 %v3573
        %v3590 = vcvt.s32.f32 %v3574
        %v3591 = vcvt.s32.f32 %v3575
        %v3592 = vcvt.s32.f32 %v3576
        %v3593 = vcvt.s32.f32 %v3577
        %v3594 = vmul.f32 %v3578, %v2406
        %v3595 = vmul.f32 %v3579, %v2407
        %v3596 = vmul.f32 %v3580, %v2406
        %v3597 = vmul.f32 %v3581, %v2407
        %v3598 = vmul.f32 %v3582, %v2406
        %v3599 = vmul.f32 %v3583, %v2407
        %v3600 = vmul.f32 %v3584, %v2406
        %v3601 = vmul.f32 %v3585, %v2407
        %v3602 = vmul.f32 %v3586, %v2406
        %v3603 = vmul.f32 %v3587, %v2407
        %v3604 = vmul.f32 %v3588, %v2406
        %v3605 = vmul.f32 %v3589, %v2407
        %v3606 = vmul.f32 %v3590, %v2406
        %v3607 = vmul.f32 %v3591, %v2407
        %v3608 = vmul.f32 %v3592, %v2406
        %v3609 = vmul.f32 %v3593, %v2407
        %v3610 = vadd.f32 %v3498, %v3594
        %v3611 = vadd.f32 %v3499, %v3595
        %v3612 = vadd.f32 %v3500, %v3596
        %v3613 = vadd.f32 %v3501, %v3597
        %v3614 = vadd.f32 %v3502, %v3598
        %v3615 = vadd.f32 %v3503, %v3599
        %v3616 = vadd.f32 %v3504, %v3600
        %v3617 = vadd.f32 %v3505, %v3601
        %v3618 = vadd.f32 %v3506, %v3602
        %v3619 = vadd.f32 %v3507, %v3603
        %v3620 = vadd.f32 %v3508, %v3604
        %v3621 = vadd.f32 %v3509, %v3605
        %v3622 = vadd.f32 %v3510, %v3606
        %v3623 = vadd.f32 %v3511, %v3607
        %v3624 = vadd.f32 %v3512, %v3608
        %v3625 = vadd.f32 %v3513, %v3609
        %v3626 = vmul.f32 %v3578, %v2683
        %v3627 = vmul.f32 %v3579, %v2685
        %v3628 = vmul.f32 %v3580, %v2683
        %v3629 = vmul.f32 %v3581, %v2685
        %v3630 = vmul.f32 %v3582, %v2683
        %v3631 = vmul.f32 %v3583, %v2685
        %v3632 = vmul.f32 %v3584, %v2683
        %v3633 = vmul.f32 %v3585, %v2685
        %v3634 = vmul.f32 %v3586, %v2683
        %v3635 = vmul.f32 %v3587, %v2685
        %v3636 = vmul.f32 %v3588, %v2683
        %v3637 = vmul.f32 %v3589, %v2685
        %v3638 = vmul.f32 %v3590, %v2683
        %v3639 = vmul.f32 %v3591, %v2685
        %v3640 = vmul.f32 %v3592, %v2683
        %v3641 = vmul.f32 %v3593, %v2685
        %v3642 = vadd.f32 %v3530, %v3626
        %v3643 = vadd.f32 %v3531, %v3627
        %v3644 = vadd.f32 %v3532, %v3628
        %v3645 = vadd.f32 %v3533, %v3629
        %v3646 = vadd.f32 %v3534, %v3630
        %v3647 = vadd.f32 %v3535, %v3631
        %v3648 = vadd.f32 %v3536, %v3632
        %v3649 = vadd.f32 %v3537, %v3633
        %v3650 = vadd.f32 %v3538, %v3634
        %v3651 = vadd.f32 %v3539, %v3635
        %v3652 = vadd.f32 %v3540, %v3636
        %v3653 = vadd.f32 %v3541, %v3637
        %v3654 = vadd.f32 %v3542, %v3638
        %v3655 = vadd.f32 %v3543, %v3639
        %v3656 = vadd.f32 %v3544, %v3640
        %v3657 = vadd.f32 %v3545, %v3641
        %vm3658 = vcmp.eq.s32.totalorder %v2970, 6
        %vm3659 = vcmp.eq.s32.totalorder %v2971, 6
        %vm3660 = vcmp.eq.s32.totalorder %v2972, 6
        %vm3661 = vcmp.eq.s32.totalorder %v2973, 6
        %vm3662 = vcmp.eq.s32.totalorder %v2974, 6
        %vm3663 = vcmp.eq.s32.totalorder %v2975, 6
        %vm3664 = vcmp.eq.s32.totalorder %v2976, 6
        %vm3665 = vcmp.eq.s32.totalorder %v2977, 6
        %vm3666 = vcmp.eq.s32.totalorder %v2978, 6
        %vm3667 = vcmp.eq.s32.totalorder %v2979, 6
        %vm3668 = vcmp.eq.s32.totalorder %v2980, 6
        %vm3669 = vcmp.eq.s32.totalorder %v2981, 6
        %vm3670 = vcmp.eq.s32.totalorder %v2982, 6
        %vm3671 = vcmp.eq.s32.totalorder %v2983, 6
        %vm3672 = vcmp.eq.s32.totalorder %v2984, 6
        %vm3673 = vcmp.eq.s32.totalorder %v2985, 6
        %v3674 = vsel %vm3658, 1, 0
        %v3675 = vsel %vm3659, 1, 0
        %v3676 = vsel %vm3660, 1, 0
        %v3677 = vsel %vm3661, 1, 0
        %v3678 = vsel %vm3662, 1, 0
        %v3679 = vsel %vm3663, 1, 0
        %v3680 = vsel %vm3664, 1, 0
        %v3681 = vsel %vm3665, 1, 0
        %v3682 = vsel %vm3666, 1, 0
        %v3683 = vsel %vm3667, 1, 0
        %v3684 = vsel %vm3668, 1, 0
        %v3685 = vsel %vm3669, 1, 0
        %v3686 = vsel %vm3670, 1, 0
        %v3687 = vsel %vm3671, 1, 0
        %v3688 = vsel %vm3672, 1, 0
        %v3689 = vsel %vm3673, 1, 0
        %v3690 = vcvt.s32.f32 %v3674
        %v3691 = vcvt.s32.f32 %v3675
        %v3692 = vcvt.s32.f32 %v3676
        %v3693 = vcvt.s32.f32 %v3677
        %v3694 = vcvt.s32.f32 %v3678
        %v3695 = vcvt.s32.f32 %v3679
        %v3696 = vcvt.s32.f32 %v3680
        %v3697 = vcvt.s32.f32 %v3681
        %v3698 = vcvt.s32.f32 %v3682
        %v3699 = vcvt.s32.f32 %v3683
        %v3700 = vcvt.s32.f32 %v3684
        %v3701 = vcvt.s32.f32 %v3685
        %v3702 = vcvt.s32.f32 %v3686
        %v3703 = vcvt.s32.f32 %v3687
        %v3704 = vcvt.s32.f32 %v3688
        %v3705 = vcvt.s32.f32 %v3689
        %v3706 = vmul.f32 %v3690, %v2408
        %v3707 = vmul.f32 %v3691, %v2409
        %v3708 = vmul.f32 %v3692, %v2408
        %v3709 = vmul.f32 %v3693, %v2409
        %v3710 = vmul.f32 %v3694, %v2408
        %v3711 = vmul.f32 %v3695, %v2409
        %v3712 = vmul.f32 %v3696, %v2408
        %v3713 = vmul.f32 %v3697, %v2409
        %v3714 = vmul.f32 %v3698, %v2408
        %v3715 = vmul.f32 %v3699, %v2409
        %v3716 = vmul.f32 %v3700, %v2408
        %v3717 = vmul.f32 %v3701, %v2409
        %v3718 = vmul.f32 %v3702, %v2408
        %v3719 = vmul.f32 %v3703, %v2409
        %v3720 = vmul.f32 %v3704, %v2408
        %v3721 = vmul.f32 %v3705, %v2409
        %v3722 = vadd.f32 %v3610, %v3706
        %v3723 = vadd.f32 %v3611, %v3707
        %v3724 = vadd.f32 %v3612, %v3708
        %v3725 = vadd.f32 %v3613, %v3709
        %v3726 = vadd.f32 %v3614, %v3710
        %v3727 = vadd.f32 %v3615, %v3711
        %v3728 = vadd.f32 %v3616, %v3712
        %v3729 = vadd.f32 %v3617, %v3713
        %v3730 = vadd.f32 %v3618, %v3714
        %v3731 = vadd.f32 %v3619, %v3715
        %v3732 = vadd.f32 %v3620, %v3716
        %v3733 = vadd.f32 %v3621, %v3717
        %v3734 = vadd.f32 %v3622, %v3718
        %v3735 = vadd.f32 %v3623, %v3719
        %v3736 = vadd.f32 %v3624, %v3720
        %v3737 = vadd.f32 %v3625, %v3721
        %v3738 = vmul.f32 %v3690, %v2687
        %v3739 = vmul.f32 %v3691, %v2689
        %v3740 = vmul.f32 %v3692, %v2687
        %v3741 = vmul.f32 %v3693, %v2689
        %v3742 = vmul.f32 %v3694, %v2687
        %v3743 = vmul.f32 %v3695, %v2689
        %v3744 = vmul.f32 %v3696, %v2687
        %v3745 = vmul.f32 %v3697, %v2689
        %v3746 = vmul.f32 %v3698, %v2687
        %v3747 = vmul.f32 %v3699, %v2689
        %v3748 = vmul.f32 %v3700, %v2687
        %v3749 = vmul.f32 %v3701, %v2689
        %v3750 = vmul.f32 %v3702, %v2687
        %v3751 = vmul.f32 %v3703, %v2689
        %v3752 = vmul.f32 %v3704, %v2687
        %v3753 = vmul.f32 %v3705, %v2689
        %v3754 = vadd.f32 %v3642, %v3738
        %v3755 = vadd.f32 %v3643, %v3739
        %v3756 = vadd.f32 %v3644, %v3740
        %v3757 = vadd.f32 %v3645, %v3741
        %v3758 = vadd.f32 %v3646, %v3742
        %v3759 = vadd.f32 %v3647, %v3743
        %v3760 = vadd.f32 %v3648, %v3744
        %v3761 = vadd.f32 %v3649, %v3745
        %v3762 = vadd.f32 %v3650, %v3746
        %v3763 = vadd.f32 %v3651, %v3747
        %v3764 = vadd.f32 %v3652, %v3748
        %v3765 = vadd.f32 %v3653, %v3749
        %v3766 = vadd.f32 %v3654, %v3750
        %v3767 = vadd.f32 %v3655, %v3751
        %v3768 = vadd.f32 %v3656, %v3752
        %v3769 = vadd.f32 %v3657, %v3753
        %vm3770 = vcmp.eq.s32.totalorder %v2970, 7
        %vm3771 = vcmp.eq.s32.totalorder %v2971, 7
        %vm3772 = vcmp.eq.s32.totalorder %v2972, 7
        %vm3773 = vcmp.eq.s32.totalorder %v2973, 7
        %vm3774 = vcmp.eq.s32.totalorder %v2974, 7
        %vm3775 = vcmp.eq.s32.totalorder %v2975, 7
        %vm3776 = vcmp.eq.s32.totalorder %v2976, 7
        %vm3777 = vcmp.eq.s32.totalorder %v2977, 7
        %vm3778 = vcmp.eq.s32.totalorder %v2978, 7
        %vm3779 = vcmp.eq.s32.totalorder %v2979, 7
        %vm3780 = vcmp.eq.s32.totalorder %v2980, 7
        %vm3781 = vcmp.eq.s32.totalorder %v2981, 7
        %vm3782 = vcmp.eq.s32.totalorder %v2982, 7
        %vm3783 = vcmp.eq.s32.totalorder %v2983, 7
        %vm3784 = vcmp.eq.s32.totalorder %v2984, 7
        %vm3785 = vcmp.eq.s32.totalorder %v2985, 7
        %v3786 = vsel %vm3770, 1, 0
        %v3787 = vsel %vm3771, 1, 0
        %v3788 = vsel %vm3772, 1, 0
        %v3789 = vsel %vm3773, 1, 0
        %v3790 = vsel %vm3774, 1, 0
        %v3791 = vsel %vm3775, 1, 0
        %v3792 = vsel %vm3776, 1, 0
        %v3793 = vsel %vm3777, 1, 0
        %v3794 = vsel %vm3778, 1, 0
        %v3795 = vsel %vm3779, 1, 0
        %v3796 = vsel %vm3780, 1, 0
        %v3797 = vsel %vm3781, 1, 0
        %v3798 = vsel %vm3782, 1, 0
        %v3799 = vsel %vm3783, 1, 0
        %v3800 = vsel %vm3784, 1, 0
        %v3801 = vsel %vm3785, 1, 0
        %v3802 = vcvt.s32.f32 %v3786
        %v3803 = vcvt.s32.f32 %v3787
        %v3804 = vcvt.s32.f32 %v3788
        %v3805 = vcvt.s32.f32 %v3789
        %v3806 = vcvt.s32.f32 %v3790
        %v3807 = vcvt.s32.f32 %v3791
        %v3808 = vcvt.s32.f32 %v3792
        %v3809 = vcvt.s32.f32 %v3793
        %v3810 = vcvt.s32.f32 %v3794
        %v3811 = vcvt.s32.f32 %v3795
        %v3812 = vcvt.s32.f32 %v3796
        %v3813 = vcvt.s32.f32 %v3797
        %v3814 = vcvt.s32.f32 %v3798
        %v3815 = vcvt.s32.f32 %v3799
        %v3816 = vcvt.s32.f32 %v3800
        %v3817 = vcvt.s32.f32 %v3801
        %v3818 = vmul.f32 %v3802, %v2410
        %v3819 = vmul.f32 %v3803, %v2411
        %v3820 = vmul.f32 %v3804, %v2410
        %v3821 = vmul.f32 %v3805, %v2411
        %v3822 = vmul.f32 %v3806, %v2410
        %v3823 = vmul.f32 %v3807, %v2411
        %v3824 = vmul.f32 %v3808, %v2410
        %v3825 = vmul.f32 %v3809, %v2411
        %v3826 = vmul.f32 %v3810, %v2410
        %v3827 = vmul.f32 %v3811, %v2411
        %v3828 = vmul.f32 %v3812, %v2410
        %v3829 = vmul.f32 %v3813, %v2411
        %v3830 = vmul.f32 %v3814, %v2410
        %v3831 = vmul.f32 %v3815, %v2411
        %v3832 = vmul.f32 %v3816, %v2410
        %v3833 = vmul.f32 %v3817, %v2411
        %v3834 = vadd.f32 %v3722, %v3818
        %v3835 = vadd.f32 %v3723, %v3819
        %v3836 = vadd.f32 %v3724, %v3820
        %v3837 = vadd.f32 %v3725, %v3821
        %v3838 = vadd.f32 %v3726, %v3822
        %v3839 = vadd.f32 %v3727, %v3823
        %v3840 = vadd.f32 %v3728, %v3824
        %v3841 = vadd.f32 %v3729, %v3825
        %v3842 = vadd.f32 %v3730, %v3826
        %v3843 = vadd.f32 %v3731, %v3827
        %v3844 = vadd.f32 %v3732, %v3828
        %v3845 = vadd.f32 %v3733, %v3829
        %v3846 = vadd.f32 %v3734, %v3830
        %v3847 = vadd.f32 %v3735, %v3831
        %v3848 = vadd.f32 %v3736, %v3832
        %v3849 = vadd.f32 %v3737, %v3833
        %v3850 = vmul.f32 %v3802, %v2691
        %v3851 = vmul.f32 %v3803, %v2693
        %v3852 = vmul.f32 %v3804, %v2691
        %v3853 = vmul.f32 %v3805, %v2693
        %v3854 = vmul.f32 %v3806, %v2691
        %v3855 = vmul.f32 %v3807, %v2693
        %v3856 = vmul.f32 %v3808, %v2691
        %v3857 = vmul.f32 %v3809, %v2693
        %v3858 = vmul.f32 %v3810, %v2691
        %v3859 = vmul.f32 %v3811, %v2693
        %v3860 = vmul.f32 %v3812, %v2691
        %v3861 = vmul.f32 %v3813, %v2693
        %v3862 = vmul.f32 %v3814, %v2691
        %v3863 = vmul.f32 %v3815, %v2693
        %v3864 = vmul.f32 %v3816, %v2691
        %v3865 = vmul.f32 %v3817, %v2693
        %v3866 = vadd.f32 %v3754, %v3850
        %v3867 = vadd.f32 %v3755, %v3851
        %v3868 = vadd.f32 %v3756, %v3852
        %v3869 = vadd.f32 %v3757, %v3853
        %v3870 = vadd.f32 %v3758, %v3854
        %v3871 = vadd.f32 %v3759, %v3855
        %v3872 = vadd.f32 %v3760, %v3856
        %v3873 = vadd.f32 %v3761, %v3857
        %v3874 = vadd.f32 %v3762, %v3858
        %v3875 = vadd.f32 %v3763, %v3859
        %v3876 = vadd.f32 %v3764, %v3860
        %v3877 = vadd.f32 %v3765, %v3861
        %v3878 = vadd.f32 %v3766, %v3862
        %v3879 = vadd.f32 %v3767, %v3863
        %v3880 = vadd.f32 %v3768, %v3864
        %v3881 = vadd.f32 %v3769, %v3865
        %v3882 = vlog2.pop %v3866
        %v3883 = vmul.f32 %v3882, 0.6931472
        %v3884 = vlog2.pop %v3867
        %v3885 = vmul.f32 %v3884, 0.6931472
        %v3886 = vlog2.pop %v3868
        %v3887 = vmul.f32 %v3886, 0.6931472
        %v3888 = vlog2.pop %v3869
        %v3889 = vmul.f32 %v3888, 0.6931472
        %v3890 = vlog2.pop %v3870
        %v3891 = vmul.f32 %v3890, 0.6931472
        %v3892 = vlog2.pop %v3871
        %v3893 = vmul.f32 %v3892, 0.6931472
        %v3894 = vlog2.pop %v3872
        %v3895 = vmul.f32 %v3894, 0.6931472
        %v3896 = vlog2.pop %v3873
        %v3897 = vmul.f32 %v3896, 0.6931472
        %v3898 = vlog2.pop %v3874
        %v3899 = vmul.f32 %v3898, 0.6931472
        %v3900 = vlog2.pop %v3875
        %v3901 = vmul.f32 %v3900, 0.6931472
        %v3902 = vlog2.pop %v3876
        %v3903 = vmul.f32 %v3902, 0.6931472
        %v3904 = vlog2.pop %v3877
        %v3905 = vmul.f32 %v3904, 0.6931472
        %v3906 = vlog2.pop %v3878
        %v3907 = vmul.f32 %v3906, 0.6931472
        %v3908 = vlog2.pop %v3879
        %v3909 = vmul.f32 %v3908, 0.6931472
        %v3910 = vlog2.pop %v3880
        %v3911 = vmul.f32 %v3910, 0.6931472
        %v3912 = vlog2.pop %v3881
        %v3913 = vmul.f32 %v3912, 0.6931472
        %v3914 = vmul.f32 %v3866, 0.5
        %v3915 = vmul.f32 %v3867, 0.5
        %v3916 = vmul.f32 %v3868, 0.5
        %v3917 = vmul.f32 %v3869, 0.5
        %v3918 = vmul.f32 %v3870, 0.5
        %v3919 = vmul.f32 %v3871, 0.5
        %v3920 = vmul.f32 %v3872, 0.5
        %v3921 = vmul.f32 %v3873, 0.5
        %v3922 = vmul.f32 %v3874, 0.5
        %v3923 = vmul.f32 %v3875, 0.5
        %v3924 = vmul.f32 %v3876, 0.5
        %v3925 = vmul.f32 %v3877, 0.5
        %v3926 = vmul.f32 %v3878, 0.5
        %v3927 = vmul.f32 %v3879, 0.5
        %v3928 = vmul.f32 %v3880, 0.5
        %v3929 = vmul.f32 %v3881, 0.5
        %v3930 = vadd.f32 %v3914, 0.0625
        %v3931 = vadd.f32 %v3915, 0.0625
        %v3932 = vadd.f32 %v3916, 0.0625
        %v3933 = vadd.f32 %v3917, 0.0625
        %v3934 = vadd.f32 %v3918, 0.0625
        %v3935 = vadd.f32 %v3919, 0.0625
        %v3936 = vadd.f32 %v3920, 0.0625
        %v3937 = vadd.f32 %v3921, 0.0625
        %v3938 = vadd.f32 %v3922, 0.0625
        %v3939 = vadd.f32 %v3923, 0.0625
        %v3940 = vadd.f32 %v3924, 0.0625
        %v3941 = vadd.f32 %v3925, 0.0625
        %v3942 = vadd.f32 %v3926, 0.0625
        %v3943 = vadd.f32 %v3927, 0.0625
        %v3944 = vadd.f32 %v3928, 0.0625
        %v3945 = vadd.f32 %v3929, 0.0625
        %v3946 = vlog2.pop %v3930
        %v3947 = vmul.f32 %v3946, 0.6931472
        %v3948 = vlog2.pop %v3931
        %v3949 = vmul.f32 %v3948, 0.6931472
        %v3950 = vlog2.pop %v3932
        %v3951 = vmul.f32 %v3950, 0.6931472
        %v3952 = vlog2.pop %v3933
        %v3953 = vmul.f32 %v3952, 0.6931472
        %v3954 = vlog2.pop %v3934
        %v3955 = vmul.f32 %v3954, 0.6931472
        %v3956 = vlog2.pop %v3935
        %v3957 = vmul.f32 %v3956, 0.6931472
        %v3958 = vlog2.pop %v3936
        %v3959 = vmul.f32 %v3958, 0.6931472
        %v3960 = vlog2.pop %v3937
        %v3961 = vmul.f32 %v3960, 0.6931472
        %v3962 = vlog2.pop %v3938
        %v3963 = vmul.f32 %v3962, 0.6931472
        %v3964 = vlog2.pop %v3939
        %v3965 = vmul.f32 %v3964, 0.6931472
        %v3966 = vlog2.pop %v3940
        %v3967 = vmul.f32 %v3966, 0.6931472
        %v3968 = vlog2.pop %v3941
        %v3969 = vmul.f32 %v3968, 0.6931472
        %v3970 = vlog2.pop %v3942
        %v3971 = vmul.f32 %v3970, 0.6931472
        %v3972 = vlog2.pop %v3943
        %v3973 = vmul.f32 %v3972, 0.6931472
        %v3974 = vlog2.pop %v3944
        %v3975 = vmul.f32 %v3974, 0.6931472
        %v3976 = vlog2.pop %v3945
        %v3977 = vmul.f32 %v3976, 0.6931472
        %v3978 = vsub.f32 %v3883, %v3947
        %v3979 = vsub.f32 %v3885, %v3949
        %v3980 = vsub.f32 %v3887, %v3951
        %v3981 = vsub.f32 %v3889, %v3953
        %v3982 = vsub.f32 %v3891, %v3955
        %v3983 = vsub.f32 %v3893, %v3957
        %v3984 = vsub.f32 %v3895, %v3959
        %v3985 = vsub.f32 %v3897, %v3961
        %v3986 = vsub.f32 %v3899, %v3963
        %v3987 = vsub.f32 %v3901, %v3965
        %v3988 = vsub.f32 %v3903, %v3967
        %v3989 = vsub.f32 %v3905, %v3969
        %v3990 = vsub.f32 %v3907, %v3971
        %v3991 = vsub.f32 %v3909, %v3973
        %v3992 = vsub.f32 %v3911, %v3975
        %v3993 = vsub.f32 %v3913, %v3977
        %v3994 = vsel %vm2531, %v3978, -inf
        %v3995 = vsel %vm2531, %v3980, -inf
        %v3996 = vsel %vm2531, %v3982, -inf
        %v3997 = vmax.f32 %v3994, %v3996
        %v3998 = vsel %vm2531, %v3984, -inf
        %v3999 = vmax.f32 %v3995, %v3998
        %v4000 = vsel %vm2531, %v3986, -inf
        %v4001 = vmax.f32 %v3997, %v4000
        %v4002 = vsel %vm2531, %v3988, -inf
        %v4003 = vmax.f32 %v3999, %v4002
        %v4004 = vsel %vm2531, %v3990, -inf
        %v4005 = vmax.f32 %v4001, %v4004
        %v4006 = vsel %vm2531, %v3992, -inf
        %v4007 = vmax.f32 %v4003, %v4006
        %v4008 = vmax.f32 %v4005, %v4007
        %v4009 = vsel %vm2531, %v3979, -inf
        %v4010 = vsel %vm2531, %v3981, -inf
        %v4011 = vsel %vm2531, %v3983, -inf
        %v4012 = vmax.f32 %v4009, %v4011
        %v4013 = vsel %vm2531, %v3985, -inf
        %v4014 = vmax.f32 %v4010, %v4013
        %v4015 = vsel %vm2531, %v3987, -inf
        %v4016 = vmax.f32 %v4012, %v4015
        %v4017 = vsel %vm2531, %v3989, -inf
        %v4018 = vmax.f32 %v4014, %v4017
        %v4019 = vsel %vm2531, %v3991, -inf
        %v4020 = vmax.f32 %v4016, %v4019
        %v4021 = vsel %vm2531, %v3993, -inf
        %v4022 = vmax.f32 %v4018, %v4021
        %v4023 = vmax.f32 %v4020, %v4022
        %v4024 = vsub.f32 %v3978, %v4008
        %v4025 = vsub.f32 %v3979, %v4023
        %v4026 = vsub.f32 %v3980, %v4008
        %v4027 = vsub.f32 %v3981, %v4023
        %v4028 = vsub.f32 %v3982, %v4008
        %v4029 = vsub.f32 %v3983, %v4023
        %v4030 = vsub.f32 %v3984, %v4008
        %v4031 = vsub.f32 %v3985, %v4023
        %v4032 = vsub.f32 %v3986, %v4008
        %v4033 = vsub.f32 %v3987, %v4023
        %v4034 = vsub.f32 %v3988, %v4008
        %v4035 = vsub.f32 %v3989, %v4023
        %v4036 = vsub.f32 %v3990, %v4008
        %v4037 = vsub.f32 %v3991, %v4023
        %v4038 = vsub.f32 %v3992, %v4008
        %v4039 = vsub.f32 %v3993, %v4023
        %v4040 = vmul.f32 %v4024, 1.442695
        %v4041 = vpow.pop %v4040
        %v4042 = vmul.f32 %v4025, 1.442695
        %v4043 = vpow.pop %v4042
        %v4044 = vmul.f32 %v4026, 1.442695
        %v4045 = vpow.pop %v4044
        %v4046 = vmul.f32 %v4027, 1.442695
        %v4047 = vpow.pop %v4046
        %v4048 = vmul.f32 %v4028, 1.442695
        %v4049 = vpow.pop %v4048
        %v4050 = vmul.f32 %v4029, 1.442695
        %v4051 = vpow.pop %v4050
        %v4052 = vmul.f32 %v4030, 1.442695
        %v4053 = vpow.pop %v4052
        %v4054 = vmul.f32 %v4031, 1.442695
        %v4055 = vpow.pop %v4054
        %v4056 = vmul.f32 %v4032, 1.442695
        %v4057 = vpow.pop %v4056
        %v4058 = vmul.f32 %v4033, 1.442695
        %v4059 = vpow.pop %v4058
        %v4060 = vmul.f32 %v4034, 1.442695
        %v4061 = vpow.pop %v4060
        %v4062 = vmul.f32 %v4035, 1.442695
        %v4063 = vpow.pop %v4062
        %v4064 = vmul.f32 %v4036, 1.442695
        %v4065 = vpow.pop %v4064
        %v4066 = vmul.f32 %v4037, 1.442695
        %v4067 = vpow.pop %v4066
        %v4068 = vmul.f32 %v4038, 1.442695
        %v4069 = vpow.pop %v4068
        %v4070 = vmul.f32 %v4039, 1.442695
        %v4071 = vpow.pop %v4070
        %v4072 = vsel %vm2531, %v4041, 0.0
        %v4073 = vsel %vm2531, %v4045, 0.0
        %v4074 = vadd.f32 %v4072, %v4073
        %v4075 = vsel %vm2531, %v4049, 0.0
        %v4076 = vadd.f32 %v4074, %v4075
        %v4077 = vsel %vm2531, %v4053, 0.0
        %v4078 = vadd.f32 %v4076, %v4077
        %v4079 = vsel %vm2531, %v4057, 0.0
        %v4080 = vadd.f32 %v4078, %v4079
        %v4081 = vsel %vm2531, %v4061, 0.0
        %v4082 = vadd.f32 %v4080, %v4081
        %v4083 = vsel %vm2531, %v4065, 0.0
        %v4084 = vadd.f32 %v4082, %v4083
        %v4085 = vsel %vm2531, %v4069, 0.0
        %v4086 = vadd.f32 %v4084, %v4085
        %v4087 = vsel %vm2531, %v4043, 0.0
        %v4088 = vsel %vm2531, %v4047, 0.0
        %v4089 = vadd.f32 %v4087, %v4088
        %v4090 = vsel %vm2531, %v4051, 0.0
        %v4091 = vadd.f32 %v4089, %v4090
        %v4092 = vsel %vm2531, %v4055, 0.0
        %v4093 = vadd.f32 %v4091, %v4092
        %v4094 = vsel %vm2531, %v4059, 0.0
        %v4095 = vadd.f32 %v4093, %v4094
        %v4096 = vsel %vm2531, %v4063, 0.0
        %v4097 = vadd.f32 %v4095, %v4096
        %v4098 = vsel %vm2531, %v4067, 0.0
        %v4099 = vadd.f32 %v4097, %v4098
        %v4100 = vsel %vm2531, %v4071, 0.0
        %v4101 = vadd.f32 %v4099, %v4100
        %v4102 = vlog2.pop %v4086
        %v4103 = vmul.f32 %v4102, 0.6931472
        %v4104 = vlog2.pop %v4101
        %v4105 = vmul.f32 %v4104, 0.6931472
        %v4106 = vadd.f32 %v4008, %v4103
        %v4107 = vadd.f32 %v4023, %v4105
        %v4108 = vsub.f32 %v3978, %v4106
        %v4109 = vsub.f32 %v3979, %v4107
        %v4110 = vsub.f32 %v3980, %v4106
        %v4111 = vsub.f32 %v3981, %v4107
        %v4112 = vsub.f32 %v3982, %v4106
        %v4113 = vsub.f32 %v3983, %v4107
        %v4114 = vsub.f32 %v3984, %v4106
        %v4115 = vsub.f32 %v3985, %v4107
        %v4116 = vsub.f32 %v3986, %v4106
        %v4117 = vsub.f32 %v3987, %v4107
        %v4118 = vsub.f32 %v3988, %v4106
        %v4119 = vsub.f32 %v3989, %v4107
        %v4120 = vsub.f32 %v3990, %v4106
        %v4121 = vsub.f32 %v3991, %v4107
        %v4122 = vsub.f32 %v3992, %v4106
        %v4123 = vsub.f32 %v3993, %v4107
        %4124 = vst.msk [vmem:[%s1035] sm:$0xff] %vm1195, %v3834
        %4125 = vst.msk [vmem:[%s1035 + $0x8] sm:$0xff] %vm1195, %v3835
        %4126 = vst.msk [vmem:[%s1035 + $0x10] sm:$0xff] %vm1195, %v3836
        %4127 = vst.msk [vmem:[%s1035 + $0x18] sm:$0xff] %vm1195, %v3837
        %4128 = vst.msk [vmem:[%s1035 + $0x20] sm:$0xff] %vm1195, %v3838
        %4129 = vst.msk [vmem:[%s1035 + $0x28] sm:$0xff] %vm1195, %v3839
        %4130 = vst.msk [vmem:[%s1035 + $0x30] sm:$0xff] %vm1195, %v3840
        %4131 = vst.msk [vmem:[%s1035 + $0x38] sm:$0xff] %vm1195, %v3841
        %4132 = vst.msk [vmem:[%s1035 + $0x40] sm:$0xff] %vm1195, %v3842
        %4133 = vst.msk [vmem:[%s1035 + $0x48] sm:$0xff] %vm1195, %v3843
        %4134 = vst.msk [vmem:[%s1035 + $0x50] sm:$0xff] %vm1195, %v3844
        %4135 = vst.msk [vmem:[%s1035 + $0x58] sm:$0xff] %vm1195, %v3845
        %4136 = vst.msk [vmem:[%s1035 + $0x60] sm:$0xff] %vm1195, %v3846
        %4137 = vst.msk [vmem:[%s1035 + $0x68] sm:$0xff] %vm1195, %v3847
        %4138 = vst.msk [vmem:[%s1035 + $0x70] sm:$0xff] %vm1195, %v3848
        %4139 = vst.msk [vmem:[%s1035 + $0x78] sm:$0xff] %vm1195, %v3849
        %4140 = vst.msk [vmem:[%s1041] sm:$0xff] %vm2531, %v4108
        %4141 = vst.msk [vmem:[%s1041 + $0x8] sm:$0xff] %vm2531, %v4109
        %4142 = vst.msk [vmem:[%s1041 + $0x10] sm:$0xff] %vm2531, %v4110
        %4143 = vst.msk [vmem:[%s1041 + $0x18] sm:$0xff] %vm2531, %v4111
        %4144 = vst.msk [vmem:[%s1041 + $0x20] sm:$0xff] %vm2531, %v4112
        %4145 = vst.msk [vmem:[%s1041 + $0x28] sm:$0xff] %vm2531, %v4113
        %4146 = vst.msk [vmem:[%s1041 + $0x30] sm:$0xff] %vm2531, %v4114
        %4147 = vst.msk [vmem:[%s1041 + $0x38] sm:$0xff] %vm2531, %v4115
        %4148 = vst.msk [vmem:[%s1041 + $0x40] sm:$0xff] %vm2531, %v4116
        %4149 = vst.msk [vmem:[%s1041 + $0x48] sm:$0xff] %vm2531, %v4117
        %4150 = vst.msk [vmem:[%s1041 + $0x50] sm:$0xff] %vm2531, %v4118
        %4151 = vst.msk [vmem:[%s1041 + $0x58] sm:$0xff] %vm2531, %v4119
        %4152 = vst.msk [vmem:[%s1041 + $0x60] sm:$0xff] %vm2531, %v4120
        %4153 = vst.msk [vmem:[%s1041 + $0x68] sm:$0xff] %vm2531, %v4121
        %4154 = vst.msk [vmem:[%s1041 + $0x70] sm:$0xff] %vm2531, %v4122
        %4155 = vst.msk [vmem:[%s1041 + $0x78] sm:$0xff] %vm2531, %v4123
        %v4156 = vmul.f32 %v4108, 1.442695
        %v4157 = vpow.pop %v4156
        %v4158 = vmul.f32 %v4109, 1.442695
        %v4159 = vpow.pop %v4158
        %v4160 = vmul.f32 %v4110, 1.442695
        %v4161 = vpow.pop %v4160
        %v4162 = vmul.f32 %v4111, 1.442695
        %v4163 = vpow.pop %v4162
        %v4164 = vmul.f32 %v4112, 1.442695
        %v4165 = vpow.pop %v4164
        %v4166 = vmul.f32 %v4113, 1.442695
        %v4167 = vpow.pop %v4166
        %v4168 = vmul.f32 %v4114, 1.442695
        %v4169 = vpow.pop %v4168
        %v4170 = vmul.f32 %v4115, 1.442695
        %v4171 = vpow.pop %v4170
        %v4172 = vmul.f32 %v4116, 1.442695
        %v4173 = vpow.pop %v4172
        %v4174 = vmul.f32 %v4117, 1.442695
        %v4175 = vpow.pop %v4174
        %v4176 = vmul.f32 %v4118, 1.442695
        %v4177 = vpow.pop %v4176
        %v4178 = vmul.f32 %v4119, 1.442695
        %v4179 = vpow.pop %v4178
        %v4180 = vmul.f32 %v4120, 1.442695
        %v4181 = vpow.pop %v4180
        %v4182 = vmul.f32 %v4121, 1.442695
        %v4183 = vpow.pop %v4182
        %v4184 = vmul.f32 %v4122, 1.442695
        %v4185 = vpow.pop %v4184
        %v4186 = vmul.f32 %v4123, 1.442695
        %v4187 = vpow.pop %v4186
        %4189 = vset.pattern.permute.xlu0 0
        %4190 = vperm.xlu0 %4189, %v4157
        %v4191 = vpop.permute.xlu0 %4190
        %4194 = vset.pattern.permute.xlu0 0
        %4195 = vperm.xlu0 %4194, %v4159
        %v4196 = vpop.permute.xlu0 %4195
        %4199 = vset.pattern.permute.xlu0 0
        %4200 = vperm.xlu0 %4199, %v4161
        %v4201 = vpop.permute.xlu0 %4200
        %4204 = vset.pattern.permute.xlu0 0
        %4205 = vperm.xlu0 %4204, %v4163
        %v4206 = vpop.permute.xlu0 %4205
        %4209 = vset.pattern.permute.xlu0 0
        %4210 = vperm.xlu0 %4209, %v4165
        %v4211 = vpop.permute.xlu0 %4210
        %4214 = vset.pattern.permute.xlu0 0
        %4215 = vperm.xlu0 %4214, %v4167
        %v4216 = vpop.permute.xlu0 %4215
        %4219 = vset.pattern.permute.xlu0 0
        %4220 = vperm.xlu0 %4219, %v4169
        %v4221 = vpop.permute.xlu0 %4220
        %4224 = vset.pattern.permute.xlu0 0
        %4225 = vperm.xlu0 %4224, %v4171
        %v4226 = vpop.permute.xlu0 %4225
        %4229 = vset.pattern.permute.xlu0 0
        %4230 = vperm.xlu0 %4229, %v4173
        %v4231 = vpop.permute.xlu0 %4230
        %4234 = vset.pattern.permute.xlu0 0
        %4235 = vperm.xlu0 %4234, %v4175
        %v4236 = vpop.permute.xlu0 %4235
        %4239 = vset.pattern.permute.xlu0 0
        %4240 = vperm.xlu0 %4239, %v4177
        %v4241 = vpop.permute.xlu0 %4240
        %4244 = vset.pattern.permute.xlu0 0
        %4245 = vperm.xlu0 %4244, %v4179
        %v4246 = vpop.permute.xlu0 %4245
        %4249 = vset.pattern.permute.xlu0 0
        %4250 = vperm.xlu0 %4249, %v4181
        %v4251 = vpop.permute.xlu0 %4250
        %4254 = vset.pattern.permute.xlu0 0
        %4255 = vperm.xlu0 %4254, %v4183
        %v4256 = vpop.permute.xlu0 %4255
        %4259 = vset.pattern.permute.xlu0 0
        %4260 = vperm.xlu0 %4259, %v4185
        %v4261 = vpop.permute.xlu0 %4260
        %4264 = vset.pattern.permute.xlu0 0
        %4265 = vperm.xlu0 %4264, %v4187
        %v4266 = vpop.permute.xlu0 %4265
        %v4268 = vmul.f32 %v4191, %v3834
        %v4269 = vmul.f32 %v4196, %v3835
        %v4270 = vmul.f32 %v4201, %v3836
        %v4271 = vmul.f32 %v4206, %v3837
        %v4272 = vmul.f32 %v4211, %v3838
        %v4273 = vmul.f32 %v4216, %v3839
        %v4274 = vmul.f32 %v4221, %v3840
        %v4275 = vmul.f32 %v4226, %v3841
        %v4276 = vmul.f32 %v4231, %v3842
        %v4277 = vmul.f32 %v4236, %v3843
        %v4278 = vmul.f32 %v4241, %v3844
        %v4279 = vmul.f32 %v4246, %v3845
        %v4280 = vmul.f32 %v4251, %v3846
        %v4281 = vmul.f32 %v4256, %v3847
        %v4282 = vmul.f32 %v4261, %v3848
        %v4283 = vmul.f32 %v4266, %v3849
        %v4284 = vsel %vm1195, %v4268, 0.0
        %v4285 = vsel %vm1195, %v4270, 0.0
        %v4286 = vadd.f32 %v4284, %v4285
        %v4287 = vsel %vm1195, %v4272, 0.0
        %v4288 = vadd.f32 %v4286, %v4287
        %v4289 = vsel %vm1195, %v4274, 0.0
        %v4290 = vadd.f32 %v4288, %v4289
        %v4291 = vsel %vm1195, %v4276, 0.0
        %v4292 = vadd.f32 %v4290, %v4291
        %v4293 = vsel %vm1195, %v4278, 0.0
        %v4294 = vadd.f32 %v4292, %v4293
        %v4295 = vsel %vm1195, %v4280, 0.0
        %v4296 = vadd.f32 %v4294, %v4295
        %v4297 = vsel %vm1195, %v4282, 0.0
        %v4298 = vadd.f32 %v4296, %v4297
        %v4299 = vsel %vm1195, %v4269, 0.0
        %v4300 = vsel %vm1195, %v4271, 0.0
        %v4301 = vadd.f32 %v4299, %v4300
        %v4302 = vsel %vm1195, %v4273, 0.0
        %v4303 = vadd.f32 %v4301, %v4302
        %v4304 = vsel %vm1195, %v4275, 0.0
        %v4305 = vadd.f32 %v4303, %v4304
        %v4306 = vsel %vm1195, %v4277, 0.0
        %v4307 = vadd.f32 %v4305, %v4306
        %v4308 = vsel %vm1195, %v4279, 0.0
        %v4309 = vadd.f32 %v4307, %v4308
        %v4310 = vsel %vm1195, %v4281, 0.0
        %v4311 = vadd.f32 %v4309, %v4310
        %v4312 = vsel %vm1195, %v4283, 0.0
        %v4313 = vadd.f32 %v4311, %v4312
        %v4314 = vpack.c.bf16 %v4313, %v4298
        %v4315 = vld [vmem:[%s14] sm:$0xf]
        %v4316 = vld [vmem:[%s14 + $0x4] sm:$0xf]
        %v4317 = vld [vmem:[%s14 + $0x8] sm:$0xf]
        %v4318 = vld [vmem:[%s14 + $0xc] sm:$0xf]
        %v4319 = vld [vmem:[%s14 + $0x10] sm:$0xf]
        %v4320 = vld [vmem:[%s14 + $0x14] sm:$0xf]
        %v4321 = vld [vmem:[%s14 + $0x18] sm:$0xf]
        %v4322 = vld [vmem:[%s14 + $0x1c] sm:$0xf]
        %v4323 = vld [vmem:[%s15] sm:$0x1]
        %v4325 = vlaneseq
        %v4326 = vshrl.u32 %v4325, 7
        %v4327 = vsub.s32 0, %v4326
        %v4328 = vrot.slane %v4323, %v4327
        %v4338 = vunpack.c.l.b16 %v4315
        %v4339 = vunpack.c.l.b16 %v4316
        %v4340 = vunpack.c.l.b16 %v4317
        %v4341 = vunpack.c.l.b16 %v4318
        %v4342 = vunpack.c.l.b16 %v4319
        %v4343 = vunpack.c.l.b16 %v4320
        %v4344 = vunpack.c.l.b16 %v4321
        %v4345 = vunpack.c.l.b16 %v4322
        %v4346 = vpack.c.b16 %v4339, %v4338
        %v4347 = vpack.c.b16 %v4341, %v4340
        %v4348 = vpack.c.b16 %v4343, %v4342
        %v4349 = vpack.c.b16 %v4345, %v4344
        %v4355 = vsel %vm1195, %v4314, 0
        %4357 = vmatprep.subr.bf16.mxu0 0
        %4358 = vmatpush1.bf16.msra.mxu0 %v4346
        %4359 = vmatprep.subr.bf16.mxu0 0
        %4360 = vmatpush1.bf16.msra.mxu0 %v4347
        %4361 = vmatprep.subr.bf16.mxu0 0
        %4362 = vmatpush1.bf16.msra.mxu0 %v4348
        %4363 = vmatprep.subr.bf16.mxu0 0
        %4364 = vmatpush1.bf16.msra.mxu0 %v4349
        %4365 = vmatprep.subr.bf16.mxu0 0
        %4366 = vmatpush1.bf16.msra.mxu0 0
        %4367 = vmatprep.subr.bf16.mxu0 0
        %4368 = vmatpush1.bf16.msra.mxu0 0
        %4369 = vmatprep.subr.bf16.mxu0 0
        %4370 = vmatpush1.bf16.msra.mxu0 0
        %4371 = vmatprep.subr.bf16.mxu0 0
        %4372 = vmatpush1.bf16.msra.mxu0 0
        %4373 = vmatprep.subr.bf16.mxu0 0
        %4374 = vmatpush1.bf16.msra.mxu0 0
        %4375 = vmatprep.subr.bf16.mxu0 0
        %4376 = vmatpush1.bf16.msra.mxu0 0
        %4377 = vmatprep.subr.bf16.mxu0 0
        %4378 = vmatpush1.bf16.msra.mxu0 0
        %4379 = vmatprep.subr.bf16.mxu0 0
        %4380 = vmatpush1.bf16.msra.mxu0 0
        %4381 = vmatprep.subr.bf16.mxu0 0
        %4382 = vmatpush1.bf16.msra.mxu0 0
        %4383 = vmatprep.subr.bf16.mxu0 0
        %4384 = vmatpush1.bf16.msra.mxu0 0
        %4385 = vmatprep.subr.bf16.mxu0 0
        %4386 = vmatpush1.bf16.msra.mxu0 0
        %4387 = vmatprep.subr.bf16.mxu0 0
        %4388 = vmatpush1.bf16.msra.mxu0 0
        %4389 = vmatprep.mubr.bf16.mxu0 0
        %4390 = vmatmul.mubr.bf16.gmra.mrb[0].mxu0 %v4355
        %v4391 = vpop.f32.mrb[0].mxu0
        %v4392 = vadd.f32 %v4328, %v4391
        %v4393 = vpop.f32.mrb[0].mxu0
        %v4394 = vpop.f32.mrb[0].mxu0
        %v4395 = vadd.f32 %v4328, %v4394
        %v4396 = vpop.f32.mrb[0].mxu0
        %4397 = vdwg.mxu0
        %4398 = vst.msk [vmem:[%s1056] sm:$0xff] %vm2840, %v4392
        %4399 = vst.msk [vmem:[%s1056 + $0x8] sm:$0xff] %vm2840, %v4395
        %s4400 = smul.u32 2, %s32
        %p4401 = scmp.lt.s32.totalorder %s4400, 3
        %s4402 = scalar_select %p4401, %s4400, 3
        %s4403 = smul.addr %s4402, 8
        %s4404 = scalar_lea.vmem %s16, %s4403
        %s4405 = sand.u32 %s427, 1
        %s4406 = sand.u32 %s427, 1
        %s4407 = smul.addr %s4406, 128
        %s4408 = scalar_lea.vmem [#allocation7], %s4407
        %s4409 = sand.u32 %s453, 1
        %s4410 = sand.u32 %s453, 1
        %s4411 = smul.addr %s4410, 128
        %s4412 = scalar_lea.vmem [#allocation8], %s4411
        // Predicated region
        $region237: #{pfrnn_agent_forward.1} parent=219 // pred_check
          %p4413 = pneg %p411
        $region238: #{pfrnn_agent_forward.1} parent=219 // pred_check_branch
          %4415 = sbr.rel (%p4413) target = $region240
        $region239: #{pfrnn_agent_forward.1} parent=219 // pred_region
          %s4416 = smul.u32 2, %s32
        $region240: #{pfrnn_agent_forward.1} parent=219 // pred_fallthru
          _
        // Predicated region
        $region241: #{pfrnn_agent_forward.1} parent=219 // pred_check
          %p4417 = pneg %p437
        $region242: #{pfrnn_agent_forward.1} parent=219 // pred_check_branch
          %4419 = sbr.rel (%p4417) target = $region244
        $region243: #{pfrnn_agent_forward.1} parent=219 // pred_region
          %s4420 = smul.u32 2, %s32
          %s4421 = smul.addr %s4420, 8
          %s4422 = scalar_lea.vmem %s17, %s4421
          // Predicated region
          $region245: #{pfrnn_agent_forward.1} parent=243 // pred_check
            _
          $region246: #{pfrnn_agent_forward.1} parent=243 // pred_check_branch
            %4424 = sbr.rel (0) target = $region248
          $region247: #{pfrnn_agent_forward.1} parent=243 // pred_region
            // Predicated region
            $region249: #{pfrnn_agent_forward.1} parent=247 // pred_check
              _
            $region250: #{pfrnn_agent_forward.1} parent=247 // pred_check_branch
              %4426 = sbr.rel (0) target = $region252
            $region251: #{pfrnn_agent_forward.1} parent=247 // pred_region
              // Predicated region
              $region264: #{pfrnn_agent_forward.1} parent=251 // pred_check
                _
              $region265: #{pfrnn_agent_forward.1} parent=251 // pred_check_branch
                %4471 = sbr.rel (0) target = $region267
              $region266: #{pfrnn_agent_forward.1} parent=251 // pred_region
                loop: start=0, step=1, limit=1
                $region268: #{pfrnn_agent_forward.1} parent=266 // loop_pre_header
                  _
                $region269: #{pfrnn_agent_forward.1} parent=266 // loop_header
                  %s4473 = sphi 0, %s4477
                  %p4474 = scmp.ge.s32.totalorder %s4473, 1
                  %s4478 = sphi %s4408, %s4408
                  %s4479 = sphi %s4422, %s4422
                $region270: #{pfrnn_agent_forward.1} parent=266 // loop_header_branch
                  %4476 = sbr.rel (%p4474) target = $region274
                $region271: #{pfrnn_agent_forward.1} parent=266 // loop_body
                  %v4480 = vld [vmem:[%s4478] sm:$0xff]
                  %4481 = vst [vmem:[%s4479] sm:$0xff] %v4480
                  %v4482 = vld [vmem:[%s4478 + $0x8] sm:$0xff]
                  %4483 = vst [vmem:[%s4479 + $0x8] sm:$0xff] %v4482
                  %v4484 = vld [vmem:[%s4478 + $0x10] sm:$0xff]
                  %4485 = vst [vmem:[%s4479 + $0x20] sm:$0xff] %v4484
                  %v4486 = vld [vmem:[%s4478 + $0x18] sm:$0xff]
                  %4487 = vst [vmem:[%s4479 + $0x28] sm:$0xff] %v4486
                  %v4488 = vld [vmem:[%s4478 + $0x20] sm:$0xff]
                  %4489 = vst [vmem:[%s4479 + $0x40] sm:$0xff] %v4488
                  %v4490 = vld [vmem:[%s4478 + $0x28] sm:$0xff]
                  %4491 = vst [vmem:[%s4479 + $0x48] sm:$0xff] %v4490
                  %v4492 = vld [vmem:[%s4478 + $0x30] sm:$0xff]
                  %4493 = vst [vmem:[%s4479 + $0x60] sm:$0xff] %v4492
                  %v4494 = vld [vmem:[%s4478 + $0x38] sm:$0xff]
                  %4495 = vst [vmem:[%s4479 + $0x68] sm:$0xff] %v4494
                  %v4496 = vld [vmem:[%s4478 + $0x40] sm:$0xff]
                  %4497 = vst [vmem:[%s4479 + $0x80] sm:$0xff] %v4496
                  %v4498 = vld [vmem:[%s4478 + $0x48] sm:$0xff]
                  %4499 = vst [vmem:[%s4479 + $0x88] sm:$0xff] %v4498
                  %v4500 = vld [vmem:[%s4478 + $0x50] sm:$0xff]
                  %4501 = vst [vmem:[%s4479 + $0xa0] sm:$0xff] %v4500
                  %v4502 = vld [vmem:[%s4478 + $0x58] sm:$0xff]
                  %4503 = vst [vmem:[%s4479 + $0xa8] sm:$0xff] %v4502
                  %v4504 = vld [vmem:[%s4478 + $0x60] sm:$0xff]
                  %4505 = vst [vmem:[%s4479 + $0xc0] sm:$0xff] %v4504
                  %v4506 = vld [vmem:[%s4478 + $0x68] sm:$0xff]
                  %4507 = vst [vmem:[%s4479 + $0xc8] sm:$0xff] %v4506
                  %v4508 = vld [vmem:[%s4478 + $0x70] sm:$0xff]
                  %4509 = vst [vmem:[%s4479 + $0xe0] sm:$0xff] %v4508
                  %v4510 = vld [vmem:[%s4478 + $0x78] sm:$0xff]
                  %4511 = vst [vmem:[%s4479 + $0xe8] sm:$0xff] %v4510
                $region272: #{pfrnn_agent_forward.1} parent=266 // loop_footer
                  %s4477 = sadd.s32 1, %s4473
                $region273: #{pfrnn_agent_forward.1} parent=266 // loop_footer_branch
                  %4472 = sbr.rel target = $region269
                $region274: #{pfrnn_agent_forward.1} parent=266 // loop_exit
                  _
              $region267: #{pfrnn_agent_forward.1} parent=251 // pred_fallthru
                _
              // Predicated region
              $region275: #{pfrnn_agent_forward.1} parent=251 // pred_check
                _
              $region276: #{pfrnn_agent_forward.1} parent=251 // pred_check_branch
                %4513 = sbr.rel target = $region278
              $region277: #{pfrnn_agent_forward.1} parent=251 // pred_region
                _
              $region278: #{pfrnn_agent_forward.1} parent=251 // pred_fallthru
                _
            $region252: #{pfrnn_agent_forward.1} parent=247 // pred_fallthru
              _
            // Predicated region
            $region253: #{pfrnn_agent_forward.1} parent=247 // pred_check
              _
            $region254: #{pfrnn_agent_forward.1} parent=247 // pred_check_branch
              %4428 = sbr.rel target = $region256
            $region255: #{pfrnn_agent_forward.1} parent=247 // pred_region
              loop: start=0, step=1, limit=1
              $region257: #{pfrnn_agent_forward.1} parent=255 // loop_pre_header
                _
              $region258: #{pfrnn_agent_forward.1} parent=255 // loop_header
                %s4431 = sphi 0, %s4435
                %p4432 = scmp.ge.s32.totalorder %s4431, 1
                %s4436 = sphi %s4408, %s4408
                %s4437 = sphi %s4422, %s4422
              $region259: #{pfrnn_agent_forward.1} parent=255 // loop_header_branch
                %4434 = sbr.rel (%p4432) target = $region263
              $region260: #{pfrnn_agent_forward.1} parent=255 // loop_body
                %v4438 = vld [vmem:[%s4436] sm:$0xff]
                %4439 = vst [vmem:[%s4437] sm:$0xff] %v4438
                %v4440 = vld [vmem:[%s4436 + $0x8] sm:$0xff]
                %4441 = vst [vmem:[%s4437 + $0x8] sm:$0xff] %v4440
                %v4442 = vld [vmem:[%s4436 + $0x10] sm:$0xff]
                %4443 = vst [vmem:[%s4437 + $0x20] sm:$0xff] %v4442
                %v4444 = vld [vmem:[%s4436 + $0x18] sm:$0xff]
                %4445 = vst [vmem:[%s4437 + $0x28] sm:$0xff] %v4444
                %v4446 = vld [vmem:[%s4436 + $0x20] sm:$0xff]
                %4447 = vst [vmem:[%s4437 + $0x40] sm:$0xff] %v4446
                %v4448 = vld [vmem:[%s4436 + $0x28] sm:$0xff]
                %4449 = vst [vmem:[%s4437 + $0x48] sm:$0xff] %v4448
                %v4450 = vld [vmem:[%s4436 + $0x30] sm:$0xff]
                %4451 = vst [vmem:[%s4437 + $0x60] sm:$0xff] %v4450
                %v4452 = vld [vmem:[%s4436 + $0x38] sm:$0xff]
                %4453 = vst [vmem:[%s4437 + $0x68] sm:$0xff] %v4452
                %v4454 = vld [vmem:[%s4436 + $0x40] sm:$0xff]
                %4455 = vst [vmem:[%s4437 + $0x80] sm:$0xff] %v4454
                %v4456 = vld [vmem:[%s4436 + $0x48] sm:$0xff]
                %4457 = vst [vmem:[%s4437 + $0x88] sm:$0xff] %v4456
                %v4458 = vld [vmem:[%s4436 + $0x50] sm:$0xff]
                %4459 = vst [vmem:[%s4437 + $0xa0] sm:$0xff] %v4458
                %v4460 = vld [vmem:[%s4436 + $0x58] sm:$0xff]
                %4461 = vst [vmem:[%s4437 + $0xa8] sm:$0xff] %v4460
                %v4462 = vld [vmem:[%s4436 + $0x60] sm:$0xff]
                %4463 = vst [vmem:[%s4437 + $0xc0] sm:$0xff] %v4462
                %v4464 = vld [vmem:[%s4436 + $0x68] sm:$0xff]
                %4465 = vst [vmem:[%s4437 + $0xc8] sm:$0xff] %v4464
                %v4466 = vld [vmem:[%s4436 + $0x70] sm:$0xff]
                %4467 = vst [vmem:[%s4437 + $0xe0] sm:$0xff] %v4466
                %v4468 = vld [vmem:[%s4436 + $0x78] sm:$0xff]
                %4469 = vst [vmem:[%s4437 + $0xe8] sm:$0xff] %v4468
              $region261: #{pfrnn_agent_forward.1} parent=255 // loop_footer
                %s4435 = sadd.s32 1, %s4431
              $region262: #{pfrnn_agent_forward.1} parent=255 // loop_footer_branch
                %4430 = sbr.rel target = $region258
              $region263: #{pfrnn_agent_forward.1} parent=255 // loop_exit
                _
            $region256: #{pfrnn_agent_forward.1} parent=247 // pred_fallthru
              _
          $region248: #{pfrnn_agent_forward.1} parent=243 // pred_fallthru
            _
          %4514 = vnop
        $region244: #{pfrnn_agent_forward.1} parent=219 // pred_fallthru
          _
        // Predicated region
        $region279: #{pfrnn_agent_forward.1} parent=219 // pred_check
          %p4515 = pneg %p463
        $region280: #{pfrnn_agent_forward.1} parent=219 // pred_check_branch
          %4517 = sbr.rel (%p4515) target = $region282
        $region281: #{pfrnn_agent_forward.1} parent=219 // pred_region
          %s4518 = smul.u32 2, %s32
          %s4519 = smul.addr %s4518, 8
          %s4520 = scalar_lea.vmem %s18, %s4519
          // Predicated region
          $region283: #{pfrnn_agent_forward.1} parent=281 // pred_check
            _
          $region284: #{pfrnn_agent_forward.1} parent=281 // pred_check_branch
            %4522 = sbr.rel (0) target = $region286
          $region285: #{pfrnn_agent_forward.1} parent=281 // pred_region
            // Predicated region
            $region287: #{pfrnn_agent_forward.1} parent=285 // pred_check
              _
            $region288: #{pfrnn_agent_forward.1} parent=285 // pred_check_branch
              %4524 = sbr.rel (0) target = $region290
            $region289: #{pfrnn_agent_forward.1} parent=285 // pred_region
              // Predicated region
              $region302: #{pfrnn_agent_forward.1} parent=289 // pred_check
                _
              $region303: #{pfrnn_agent_forward.1} parent=289 // pred_check_branch
                %4569 = sbr.rel (0) target = $region305
              $region304: #{pfrnn_agent_forward.1} parent=289 // pred_region
                loop: start=0, step=1, limit=1
                $region306: #{pfrnn_agent_forward.1} parent=304 // loop_pre_header
                  _
                $region307: #{pfrnn_agent_forward.1} parent=304 // loop_header
                  %s4571 = sphi 0, %s4575
                  %p4572 = scmp.ge.s32.totalorder %s4571, 1
                  %s4576 = sphi %s4412, %s4412
                  %s4577 = sphi %s4520, %s4520
                $region308: #{pfrnn_agent_forward.1} parent=304 // loop_header_branch
                  %4574 = sbr.rel (%p4572) target = $region312
                $region309: #{pfrnn_agent_forward.1} parent=304 // loop_body
                  %v4578 = vld [vmem:[%s4576] sm:$0xff]
                  %4579 = vst [vmem:[%s4577] sm:$0xff] %v4578
                  %v4580 = vld [vmem:[%s4576 + $0x8] sm:$0xff]
                  %4581 = vst [vmem:[%s4577 + $0x8] sm:$0xff] %v4580
                  %v4582 = vld [vmem:[%s4576 + $0x10] sm:$0xff]
                  %4583 = vst [vmem:[%s4577 + $0x20] sm:$0xff] %v4582
                  %v4584 = vld [vmem:[%s4576 + $0x18] sm:$0xff]
                  %4585 = vst [vmem:[%s4577 + $0x28] sm:$0xff] %v4584
                  %v4586 = vld [vmem:[%s4576 + $0x20] sm:$0xff]
                  %4587 = vst [vmem:[%s4577 + $0x40] sm:$0xff] %v4586
                  %v4588 = vld [vmem:[%s4576 + $0x28] sm:$0xff]
                  %4589 = vst [vmem:[%s4577 + $0x48] sm:$0xff] %v4588
                  %v4590 = vld [vmem:[%s4576 + $0x30] sm:$0xff]
                  %4591 = vst [vmem:[%s4577 + $0x60] sm:$0xff] %v4590
                  %v4592 = vld [vmem:[%s4576 + $0x38] sm:$0xff]
                  %4593 = vst [vmem:[%s4577 + $0x68] sm:$0xff] %v4592
                  %v4594 = vld [vmem:[%s4576 + $0x40] sm:$0xff]
                  %4595 = vst [vmem:[%s4577 + $0x80] sm:$0xff] %v4594
                  %v4596 = vld [vmem:[%s4576 + $0x48] sm:$0xff]
                  %4597 = vst [vmem:[%s4577 + $0x88] sm:$0xff] %v4596
                  %v4598 = vld [vmem:[%s4576 + $0x50] sm:$0xff]
                  %4599 = vst [vmem:[%s4577 + $0xa0] sm:$0xff] %v4598
                  %v4600 = vld [vmem:[%s4576 + $0x58] sm:$0xff]
                  %4601 = vst [vmem:[%s4577 + $0xa8] sm:$0xff] %v4600
                  %v4602 = vld [vmem:[%s4576 + $0x60] sm:$0xff]
                  %4603 = vst [vmem:[%s4577 + $0xc0] sm:$0xff] %v4602
                  %v4604 = vld [vmem:[%s4576 + $0x68] sm:$0xff]
                  %4605 = vst [vmem:[%s4577 + $0xc8] sm:$0xff] %v4604
                  %v4606 = vld [vmem:[%s4576 + $0x70] sm:$0xff]
                  %4607 = vst [vmem:[%s4577 + $0xe0] sm:$0xff] %v4606
                  %v4608 = vld [vmem:[%s4576 + $0x78] sm:$0xff]
                  %4609 = vst [vmem:[%s4577 + $0xe8] sm:$0xff] %v4608
                $region310: #{pfrnn_agent_forward.1} parent=304 // loop_footer
                  %s4575 = sadd.s32 1, %s4571
                $region311: #{pfrnn_agent_forward.1} parent=304 // loop_footer_branch
                  %4570 = sbr.rel target = $region307
                $region312: #{pfrnn_agent_forward.1} parent=304 // loop_exit
                  _
              $region305: #{pfrnn_agent_forward.1} parent=289 // pred_fallthru
                _
              // Predicated region
              $region313: #{pfrnn_agent_forward.1} parent=289 // pred_check
                _
              $region314: #{pfrnn_agent_forward.1} parent=289 // pred_check_branch
                %4611 = sbr.rel target = $region316
              $region315: #{pfrnn_agent_forward.1} parent=289 // pred_region
                _
              $region316: #{pfrnn_agent_forward.1} parent=289 // pred_fallthru
                _
            $region290: #{pfrnn_agent_forward.1} parent=285 // pred_fallthru
              _
            // Predicated region
            $region291: #{pfrnn_agent_forward.1} parent=285 // pred_check
              _
            $region292: #{pfrnn_agent_forward.1} parent=285 // pred_check_branch
              %4526 = sbr.rel target = $region294
            $region293: #{pfrnn_agent_forward.1} parent=285 // pred_region
              loop: start=0, step=1, limit=1
              $region295: #{pfrnn_agent_forward.1} parent=293 // loop_pre_header
                _
              $region296: #{pfrnn_agent_forward.1} parent=293 // loop_header
                %s4529 = sphi 0, %s4533
                %p4530 = scmp.ge.s32.totalorder %s4529, 1
                %s4534 = sphi %s4412, %s4412
                %s4535 = sphi %s4520, %s4520
              $region297: #{pfrnn_agent_forward.1} parent=293 // loop_header_branch
                %4532 = sbr.rel (%p4530) target = $region301
              $region298: #{pfrnn_agent_forward.1} parent=293 // loop_body
                %v4536 = vld [vmem:[%s4534] sm:$0xff]
                %4537 = vst [vmem:[%s4535] sm:$0xff] %v4536
                %v4538 = vld [vmem:[%s4534 + $0x8] sm:$0xff]
                %4539 = vst [vmem:[%s4535 + $0x8] sm:$0xff] %v4538
                %v4540 = vld [vmem:[%s4534 + $0x10] sm:$0xff]
                %4541 = vst [vmem:[%s4535 + $0x20] sm:$0xff] %v4540
                %v4542 = vld [vmem:[%s4534 + $0x18] sm:$0xff]
                %4543 = vst [vmem:[%s4535 + $0x28] sm:$0xff] %v4542
                %v4544 = vld [vmem:[%s4534 + $0x20] sm:$0xff]
                %4545 = vst [vmem:[%s4535 + $0x40] sm:$0xff] %v4544
                %v4546 = vld [vmem:[%s4534 + $0x28] sm:$0xff]
                %4547 = vst [vmem:[%s4535 + $0x48] sm:$0xff] %v4546
                %v4548 = vld [vmem:[%s4534 + $0x30] sm:$0xff]
                %4549 = vst [vmem:[%s4535 + $0x60] sm:$0xff] %v4548
                %v4550 = vld [vmem:[%s4534 + $0x38] sm:$0xff]
                %4551 = vst [vmem:[%s4535 + $0x68] sm:$0xff] %v4550
                %v4552 = vld [vmem:[%s4534 + $0x40] sm:$0xff]
                %4553 = vst [vmem:[%s4535 + $0x80] sm:$0xff] %v4552
                %v4554 = vld [vmem:[%s4534 + $0x48] sm:$0xff]
                %4555 = vst [vmem:[%s4535 + $0x88] sm:$0xff] %v4554
                %v4556 = vld [vmem:[%s4534 + $0x50] sm:$0xff]
                %4557 = vst [vmem:[%s4535 + $0xa0] sm:$0xff] %v4556
                %v4558 = vld [vmem:[%s4534 + $0x58] sm:$0xff]
                %4559 = vst [vmem:[%s4535 + $0xa8] sm:$0xff] %v4558
                %v4560 = vld [vmem:[%s4534 + $0x60] sm:$0xff]
                %4561 = vst [vmem:[%s4535 + $0xc0] sm:$0xff] %v4560
                %v4562 = vld [vmem:[%s4534 + $0x68] sm:$0xff]
                %4563 = vst [vmem:[%s4535 + $0xc8] sm:$0xff] %v4562
                %v4564 = vld [vmem:[%s4534 + $0x70] sm:$0xff]
                %4565 = vst [vmem:[%s4535 + $0xe0] sm:$0xff] %v4564
                %v4566 = vld [vmem:[%s4534 + $0x78] sm:$0xff]
                %4567 = vst [vmem:[%s4535 + $0xe8] sm:$0xff] %v4566
              $region299: #{pfrnn_agent_forward.1} parent=293 // loop_footer
                %s4533 = sadd.s32 1, %s4529
              $region300: #{pfrnn_agent_forward.1} parent=293 // loop_footer_branch
                %4528 = sbr.rel target = $region296
              $region301: #{pfrnn_agent_forward.1} parent=293 // loop_exit
                _
            $region294: #{pfrnn_agent_forward.1} parent=285 // pred_fallthru
              _
          $region286: #{pfrnn_agent_forward.1} parent=281 // pred_fallthru
            _
          %4612 = vnop
        $region282: #{pfrnn_agent_forward.1} parent=219 // pred_fallthru
          _
      $region220: #{pfrnn_agent_forward.1} parent=5 // pred_fallthru
        _
      %p4613 = scmp.le.s32.totalorder 2, %s27
      // Predicated region
      $region317: #{pfrnn_agent_forward.1} parent=5 // pred_check
        %p4614 = pneg %p4613
      $region318: #{pfrnn_agent_forward.1} parent=5 // pred_check_branch
        %4616 = sbr.rel (%p4614) target = $region320
      $region319: #{pfrnn_agent_forward.1} parent=5 // pred_region
        %s4617 = ssub.s32 %s27, 2
        // Predicated region
        $region321: #{pfrnn_agent_forward.1} parent=319 // pred_check
          %p4618 = pneg %p417
        $region322: #{pfrnn_agent_forward.1} parent=319 // pred_check_branch
          %4620 = sbr.rel (%p4618) target = $region324
        $region323: #{pfrnn_agent_forward.1} parent=319 // pred_region
          %s4621 = smul.u32 2, %s33
          %p4622 = scmp.lt.s32.totalorder %s4621, 3
          %s4623 = scalar_select %p4622, %s4621, 3
          %s4624 = smul.addr %s4623, 8
          %s4625 = scalar_lea.vmem %s16, %s4624
        $region324: #{pfrnn_agent_forward.1} parent=319 // pred_fallthru
          _
        // Predicated region
        $region325: #{pfrnn_agent_forward.1} parent=319 // pred_check
          %p4626 = pneg %p443
        $region326: #{pfrnn_agent_forward.1} parent=319 // pred_check_branch
          %4628 = sbr.rel (%p4626) target = $region328
        $region327: #{pfrnn_agent_forward.1} parent=319 // pred_region
          %s4629 = sand.u32 %s428, 1
          %s4630 = sand.u32 %s428, 1
          %s4631 = smul.addr %s4630, 128
          %s4632 = scalar_lea.vmem [#allocation7], %s4631
        $region328: #{pfrnn_agent_forward.1} parent=319 // pred_fallthru
          _
        // Predicated region
        $region329: #{pfrnn_agent_forward.1} parent=319 // pred_check
          %p4633 = pneg %p469
        $region330: #{pfrnn_agent_forward.1} parent=319 // pred_check_branch
          %4635 = sbr.rel (%p4633) target = $region332
        $region331: #{pfrnn_agent_forward.1} parent=319 // pred_region
          %s4636 = sand.u32 %s454, 1
          %s4637 = sand.u32 %s454, 1
          %s4638 = smul.addr %s4637, 128
          %s4639 = scalar_lea.vmem [#allocation8], %s4638
        $region332: #{pfrnn_agent_forward.1} parent=319 // pred_fallthru
          _
      $region320: #{pfrnn_agent_forward.1} parent=5 // pred_fallthru
        _
    $region6: #{pfrnn_agent_forward.1} parent=1 // loop_footer
      %s31 = sadd.s32 1, %s27
    $region7: #{pfrnn_agent_forward.1} parent=1 // loop_footer_branch
      %26 = sbr.rel target = $region3
    $region8: #{pfrnn_agent_forward.1} parent=1 // loop_exit
      _

</llo_original>
